<compile_context>
chip_gen: v7x
topology: tpu7x:2x2x1
jax: 0.10.0
libtpu: 0.0.40
codegen_flags: <defaults>
</compile_context>

<pallas_src>
import jax
import jax.numpy as jnp
from jax import lax
from jax.experimental import pallas as pl
from jax.experimental.pallas import tpu as pltpu

LANE = 128


def _round_up(x, m):
    return (x + m - 1) // m * m


def _vmem_capacity_bytes():
    """Per-core VMEM capacity; conservative fallback (v7x) if query fails."""
    try:
        info = pltpu.get_tpu_info()
        cap = int(getattr(info, "vmem_capacity_bytes", 0))
        if cap > 0:
            return cap
    except Exception:
        pass
    return 64 * 1024 * 1024


def _tile_working_set_bytes(tile_h, wk, cp, pp):
    """Rough per-row-tile VMEM working set (excludes weights/biases)."""
    the = tile_h + 2
    return (2 * (tile_h + 4) * (wk + 2) * cp * 4      # double-buffered input tile (f32)
            + 2 * tile_h * wk * pp * 4                # double-buffered output tile (f32)
            + 2 * the * (wk + 2) * pp * 4             # y / ypad intermediates
            + 2 * the * wk * 3 * max(cp, pp) * 2      # im2col slab + taps (bf16)
            + 2 * the * wk * pp * 4)                  # f32 accumulators


def _pick_tile_h(H, wk, cp, pp, vmem_cap):
    """Largest divisor of H whose working set fits a VMEM-derived budget,
    preferring >=2 row tiles (so the input prefetch overlaps compute)."""
    budget = max(int(0.30 * vmem_cap), 4 << 20)
    divs = [d for d in range(1, H + 1) if H % d == 0]
    fitting = [d for d in divs if _tile_working_set_bytes(d, wk, cp, pp) <= budget]
    if not fitting:
        fitting = [divs[0]]
    multi = [d for d in fitting if H // d >= 2 and d >= 8]
    return max(multi) if multi else max(fitting)


def basic_block_pallas(x_nchw, w1, w2,
                       bn1_gamma, bn1_beta, bn1_mean, bn1_var,
                       bn2_gamma, bn2_beta, bn2_mean, bn2_var,
                       eps=1e-5, tile_h=None):
    """x_nchw: (N, C, H, W) float32.  w*: (Cout, Cin, 3, 3) PyTorch layout."""
    N, C, H, W = x_nchw.shape
    P = w1.shape[0]
    assert C == P, "no-projection BasicBlock requires inplanes == planes"
    assert w1.shape == (P, C, 3, 3) and w2.shape == (P, P, 3, 3)

    Cp = _round_up(C, LANE)
    Pp = _round_up(P, LANE)
    Wk = _round_up(W, 8)           # sublane-aligned in-kernel column count

    vmem_cap = _vmem_capacity_bytes()
    if tile_h is None:
        tile_h = _pick_tile_h(H, Wk, Cp, Pp, vmem_cap)
    assert H % tile_h == 0
    n_tiles = H // tile_h
    TH = tile_h
    THe = TH + 2                   # extended conv1-output rows (1-row halo for conv2)

    # ---- wrapper glue: layout, channel/col pad, weight/BN folding ----
    x_nhwc = jnp.transpose(x_nchw, (0, 2, 3, 1)).astype(jnp.float32)
    # rows: +2/+2 halo, cols: 1 left halo + pad right up to Wk+1, channels -> Cp.
    xpad = jnp.pad(x_nhwc, ((0, 0), (2, 2), (1, Wk - W + 1), (0, Cp - C)))
    # xpad: (N, H+4, Wk+2, Cp), real data in rows [2, H+2), cols [1, W+1).

    def fold_bn(g, b, m, v):
        s = (g / jnp.sqrt(v + eps)).astype(jnp.float32)          # (P,)
        bias = (b - m * s).astype(jnp.float32)                   # (P,)
        return s, jnp.pad(bias, (0, Pp - P)).reshape(1, Pp)

    s1, b1 = fold_bn(bn1_gamma, bn1_beta, bn1_mean, bn1_var)
    s2, b2 = fold_bn(bn2_gamma, bn2_beta, bn2_mean, bn2_var)

    def prep_w(w, cin, cin_p, scale):
        # (O,I,kh,kw) -> (kh,kw,I,O); fold BN scale into output channels (f32);
        # zero-pad channels to lane multiples; cast to bf16 for the MXU.
        wt = jnp.transpose(w, (2, 3, 1, 0)).astype(jnp.float32)  # (3,3,cin,P)
        wt = wt * scale.reshape(1, 1, 1, P)
        wt = jnp.pad(wt, ((0, 0), (0, 0), (0, cin_p - cin), (0, Pp - P)))
        return wt.reshape(3, 3 * cin_p, Pp).astype(jnp.bfloat16)

    w1_f = prep_w(w1, C, Cp, s1)   # (3, 3*Cp, Pp) bf16, row order = (dw, cin)
    w2_f = prep_w(w2, P, Pp, s2)   # (3, 3*Pp, Pp) bf16

    # ---- kernel (one (batch, row-tile) per grid step) ----
    def kernel(x_hbm, w1_ref, w2_ref, b1_ref, b2_ref, out_ref, xbuf, sem):
        n = pl.program_id(0)
        t = pl.program_id(1)
        nt = pl.num_programs(1)
        slot = t % 2

        def tile_dma(tt, sl):
            return pltpu.make_async_copy(
                x_hbm.at[n, pl.ds(tt * TH, TH + 4)], xbuf.at[sl], sem.at[sl])

        # Prime at the first row-tile of each image; otherwise this tile's copy
        # was already started by the previous grid step (t is sequential).
        @pl.when(t == 0)
        def _():
            tile_dma(t, slot).start()

        tile_dma(t, slot).wait()

        # Prefetch the next row-tile of the same image while we compute.
        @pl.when(t + 1 < nt)
        def _():
            tile_dma(t + 1, 1 - slot).start()

        x_t = xbuf[slot]                              # (TH+4, Wk+2, Cp) f32
        x_bf = x_t.astype(jnp.bfloat16)

        # ---- conv1 (+ folded bn1 scale): 3 accumulating dots over dh ----
        acc = jnp.zeros((THe * Wk, Pp), jnp.float32)
        for dh in range(3):
            rows = x_bf[dh:dh + THe]                  # (THe, Wk+2, Cp)
            im = jnp.concatenate(
                [rows[:, dw:dw + Wk, :] for dw in range(3)], axis=-1)
            acc = acc + jnp.dot(im.reshape(THe * Wk, 3 * Cp), w1_ref[dh],
                                preferred_element_type=jnp.float32)
        y = jnp.maximum(acc + b1_ref[...], 0.0).reshape(THe, Wk, Pp)

        # Extended rows / padded cols that fall outside the image must be
        # exactly zero: they act as conv2's zero padding.
        row = lax.broadcasted_iota(jnp.int32, (THe, 1, 1), 0)
        col = lax.broadcasted_iota(jnp.int32, (1, Wk, 1), 1)
        keep = jnp.logical_and(
            jnp.logical_and(jnp.logical_or(t > 0, row > 0),
                            jnp.logical_or(t < nt - 1, row < THe - 1)),
            col < W)
        y = jnp.where(keep, y, 0.0).astype(jnp.bfloat16)

        # ---- conv2 (+ folded bn2 scale) ----
        zcol = jnp.zeros((THe, 1, Pp), jnp.bfloat16)
        ypad = jnp.concatenate([zcol, y, zcol], axis=1)          # (THe, Wk+2, Pp)
        acc2 = jnp.zeros((TH * Wk, Pp), jnp.float32)
        for dh in range(3):
            rows = ypad[dh:dh + TH]
            im = jnp.concatenate(
                [rows[:, dw:dw + Wk, :] for dw in range(3)], axis=-1)
            acc2 = acc2 + jnp.dot(im.reshape(TH * Wk, 3 * Pp), w2_ref[dh],
                                  preferred_element_type=jnp.float32)
        z = acc2 + b2_ref[...]

        # ---- residual add (f32, from the raw input tile) + relu ----
        residual = x_t[2:2 + TH, 1:1 + Wk, :].reshape(TH * Wk, Cp)  # Cp == Pp
        out_ref[0, 0] = jnp.maximum(z + residual, 0.0).reshape(TH, Wk, Pp)

    # ---- generation-aware VMEM limit ----
    weight_bytes = (w1_f.size + w2_f.size) * 2 + 2 * Pp * 4
    est = _tile_working_set_bytes(TH, Wk, Cp, Pp) + weight_bytes
    vmem_limit = int(min(max(int(1.5 * est), 32 << 20), int(0.85 * vmem_cap)))

    out_t = pl.pallas_call(
        kernel,
        out_shape=jax.ShapeDtypeStruct((N, n_tiles, TH, Wk, Pp), jnp.float32),
        grid_spec=pltpu.PrefetchScalarGridSpec(
            num_scalar_prefetch=0,
            grid=(N, n_tiles),
            in_specs=[
                pl.BlockSpec(memory_space=pl.ANY),                    # x: stays in HBM
                pl.BlockSpec(memory_space=pltpu.MemorySpace.VMEM),    # w1: resident
                pl.BlockSpec(memory_space=pltpu.MemorySpace.VMEM),    # w2: resident
                pl.BlockSpec(memory_space=pltpu.MemorySpace.VMEM),    # b1
                pl.BlockSpec(memory_space=pltpu.MemorySpace.VMEM),    # b2
            ],
            out_specs=pl.BlockSpec((1, 1, TH, Wk, Pp),
                                   lambda n, t: (n, t, 0, 0, 0)),
            scratch_shapes=[
                pltpu.VMEM((2, TH + 4, Wk + 2, Cp), jnp.float32),     # input double-buffer
                pltpu.SemaphoreType.DMA((2,)),
            ]),
        compiler_params=pltpu.CompilerParams(
            # Row-tile axis carries the manual double-buffer state -> must stay
            # sequential ("arbitrary"); batch axis is parallel (megacore).
            dimension_semantics=("parallel", "arbitrary"),
            vmem_limit_bytes=vmem_limit),
    )(xpad, w1_f, w2_f, b1, b2)

    out = out_t.reshape(N, H, Wk, Pp)[:, :, :W, :P]   # drop col/lane padding
    return jnp.transpose(out, (0, 3, 1, 2))           # back to NCHW


def basic_block_reference(x, w1, w2,
                          g1, be1, m1, v1, g2, be2, m2, v2, eps=1e-5):
    """Plain-JAX NCHW reference (eval-mode BN), f32 throughout."""
    def conv(x, w):
        return lax.conv_general_dilated(
            x, w, window_strides=(1, 1), padding=((1, 1), (1, 1)),
            dimension_numbers=("NCHW", "OIHW", "NCHW"))

    def bn(x, g, b, m, v):
        g = g.reshape(1, -1, 1, 1); b = b.reshape(1, -1, 1, 1)
        m = m.reshape(1, -1, 1, 1); v = v.reshape(1, -1, 1, 1)
        return g * (x - m) / jnp.sqrt(v + eps) + b

    out = jnp.maximum(bn(conv(x, w1), g1, be1, m1, v1), 0.0)
    out = bn(conv(out, w2), g2, be2, m2, v2)
    return jnp.maximum(out + x, 0.0)


if __name__ == "__main__":
    # Small deterministic setup: N=2, inplanes=planes=4, spatial=16, stride=1.
    key = jax.random.PRNGKey(0)
    ks = jax.random.split(key, 8)
    N, C, H, W = 2, 4, 16, 16
    P = C  # planes == inplanes (no projection)

    x = jax.random.normal(ks[0], (N, C, H, W), jnp.float32)
    w1 = jax.random.normal(ks[1], (P, C, 3, 3), jnp.float32) * 0.2
    w2 = jax.random.normal(ks[2], (P, P, 3, 3), jnp.float32) * 0.2
    # Eval-mode BatchNorm parameters (deterministic, non-trivial).
    bn1_gamma = 1.0 + 0.1 * jax.random.normal(ks[3], (P,), jnp.float32)
    bn1_beta = 0.1 * jax.random.normal(ks[4], (P,), jnp.float32)
    bn1_mean = 0.05 * jnp.arange(P, dtype=jnp.float32)
    bn1_var = 1.0 + 0.1 * jnp.arange(P, dtype=jnp.float32)
    bn2_gamma = 1.0 + 0.1 * jax.random.normal(ks[5], (P,), jnp.float32)
    bn2_beta = 0.1 * jax.random.normal(ks[6], (P,), jnp.float32)
    bn2_mean = 0.03 * jnp.arange(P, dtype=jnp.float32)
    bn2_var = 1.0 + 0.05 * jnp.arange(P, dtype=jnp.float32)

    out = basic_block_pallas(x, w1, w2,
                             bn1_gamma, bn1_beta, bn1_mean, bn1_var,
                             bn2_gamma, bn2_beta, bn2_mean, bn2_var)
    out = jax.block_until_ready(out)

    ref = basic_block_reference(x, w1, w2,
                                bn1_gamma, bn1_beta, bn1_mean, bn1_var,
                                bn2_gamma, bn2_beta, bn2_mean, bn2_var)
    ref = jax.block_until_ready(ref)

    assert out.shape == (N, C, H, W)
    err = float(jnp.max(jnp.abs(out - ref)))
    # bf16 MXU operands vs f32 reference -> loosened tolerance.
    assert err < 3e-2, f"mismatch vs JAX reference: max abs err = {err}"
    print("KERNEL_OK")
</pallas_src>

<mosaic_0001>
module attributes {stable_mosaic.version = 11 : i64} {
  func.func @kernel(%arg0: i32, %arg1: i32, %arg2: memref<2x20x18x128xf32, #tpu.memory_space<any>>, %arg3: memref<3x384x128xbf16, #tpu.memory_space<vmem>>, %arg4: memref<3x384x128xbf16, #tpu.memory_space<vmem>>, %arg5: memref<1x128xf32, #tpu.memory_space<vmem>>, %arg6: memref<1x128xf32, #tpu.memory_space<vmem>>, %arg7: memref<1x1x8x16x128xf32, #tpu.memory_space<vmem>>, %arg8: memref<2x12x18x128xf32, #tpu.memory_space<vmem>>, %arg9: memref<2x!tpu.dma_semaphore, #tpu.memory_space<semaphore_mem>>) attributes {dimension_semantics = [#tpu.dimension_semantics<parallel>, #tpu.dimension_semantics<arbitrary>], iteration_bounds = array<i64: 2, 2>, scalar_prefetch = 0 : i64, scratch_operands = 2 : i64, tpu.core_type = #tpu.core_type<tc>, window_params = [{}, {pipeline_mode = #tpu.pipeline_mode<synchronous>, transform_indices = @transform_1, window_bounds = array<i64: 3, 384, 128>}, {pipeline_mode = #tpu.pipeline_mode<synchronous>, transform_indices = @transform_2, window_bounds = array<i64: 3, 384, 128>}, {pipeline_mode = #tpu.pipeline_mode<synchronous>, transform_indices = @transform_3, window_bounds = array<i64: 1, 128>}, {pipeline_mode = #tpu.pipeline_mode<synchronous>, transform_indices = @transform_4, window_bounds = array<i64: 1, 128>}, {transform_indices = @transform_5, window_bounds = array<i64: 1, 1, 8, 16, 128>}]} {
    %c2_i32 = arith.constant 2 : i32
    %c0_i32 = arith.constant 0 : i32
    %0 = arith.cmpi eq, %c2_i32, %c0_i32 : i32
    %c1_i32 = arith.constant 1 : i32
    %1 = arith.select %0, %c1_i32, %c2_i32 : i32
    %2 = arith.remsi %arg1, %1 : i32
    %c0_i32_0 = arith.constant 0 : i32
    %3 = arith.cmpi ne, %2, %c0_i32_0 : i32
    %c0_i32_1 = arith.constant 0 : i32
    %4 = arith.cmpi slt, %2, %c0_i32_1 : i32
    %c0_i32_2 = arith.constant 0 : i32
    %5 = arith.cmpi slt, %1, %c0_i32_2 : i32
    %6 = arith.xori %4, %5 : i1
    %7 = arith.andi %6, %3 : i1
    %8 = arith.addi %2, %1 : i32
    %9 = arith.select %7, %8, %2 : i32
    %c0_i32_3 = arith.constant 0 : i32
    %10 = arith.cmpi eq, %arg1, %c0_i32_3 : i32
    %11 = arith.extui %10 : i1 to i32
    %c0_i32_4 = arith.constant 0 : i32
    %12 = arith.cmpi ne, %11, %c0_i32_4 : i32
    scf.if %12 {
      %c8_i32_54 = arith.constant 8 : i32
      %133 = arith.muli %arg1, %c8_i32_54 : i32
      %c0_i32_55 = arith.constant 0 : i32
      %c0_i32_56 = arith.constant 0 : i32
      %134 = tpu.memref_slice %arg2[%arg0, %133, %c0_i32_55, %c0_i32_56] : memref<2x20x18x128xf32, #tpu.memory_space<any>> -> memref<1x12x18x128xf32, #tpu.memory_space<any>>
      %135 = tpu.memref_squeeze %134 : memref<1x12x18x128xf32, #tpu.memory_space<any>> -> memref<12x18x128xf32, #tpu.memory_space<any>>
      %c0_i32_57 = arith.constant 0 : i32
      %c0_i32_58 = arith.constant 0 : i32
      %c0_i32_59 = arith.constant 0 : i32
      %136 = tpu.memref_slice %arg8[%9, %c0_i32_57, %c0_i32_58, %c0_i32_59] : memref<2x12x18x128xf32, #tpu.memory_space<vmem>> -> memref<1x12x18x128xf32, #tpu.memory_space<vmem>>
      %137 = tpu.memref_squeeze %136 : memref<1x12x18x128xf32, #tpu.memory_space<vmem>> -> memref<12x18x128xf32, #tpu.memory_space<vmem>>
      %138 = tpu.memref_slice %arg9[%9] : memref<2x!tpu.dma_semaphore, #tpu.memory_space<semaphore_mem>> -> memref<1x!tpu.dma_semaphore, #tpu.memory_space<semaphore_mem>>
      %139 = tpu.memref_squeeze %138 : memref<1x!tpu.dma_semaphore, #tpu.memory_space<semaphore_mem>> -> memref<!tpu.dma_semaphore, #tpu.memory_space<semaphore_mem>>
      tpu.enqueue_dma source(%135 : memref<12x18x128xf32, #tpu.memory_space<any>>) target(%137 : memref<12x18x128xf32, #tpu.memory_space<vmem>>) target_semaphore(%139 : memref<!tpu.dma_semaphore, #tpu.memory_space<semaphore_mem>>)
    } else {
    }
    %c8_i32 = arith.constant 8 : i32
    %13 = arith.muli %arg1, %c8_i32 : i32
    %c0_i32_5 = arith.constant 0 : i32
    %c0_i32_6 = arith.constant 0 : i32
    %14 = tpu.memref_slice %arg2[%arg0, %13, %c0_i32_5, %c0_i32_6] : memref<2x20x18x128xf32, #tpu.memory_space<any>> -> memref<1x12x18x128xf32, #tpu.memory_space<any>>
    %15 = tpu.memref_squeeze %14 : memref<1x12x18x128xf32, #tpu.memory_space<any>> -> memref<12x18x128xf32, #tpu.memory_space<any>>
    %c0_i32_7 = arith.constant 0 : i32
    %c0_i32_8 = arith.constant 0 : i32
    %c0_i32_9 = arith.constant 0 : i32
    %16 = tpu.memref_slice %arg8[%9, %c0_i32_7, %c0_i32_8, %c0_i32_9] : memref<2x12x18x128xf32, #tpu.memory_space<vmem>> -> memref<1x12x18x128xf32, #tpu.memory_space<vmem>>
    %17 = tpu.memref_squeeze %16 : memref<1x12x18x128xf32, #tpu.memory_space<vmem>> -> memref<12x18x128xf32, #tpu.memory_space<vmem>>
    %18 = tpu.memref_slice %arg9[%9] : memref<2x!tpu.dma_semaphore, #tpu.memory_space<semaphore_mem>> -> memref<1x!tpu.dma_semaphore, #tpu.memory_space<semaphore_mem>>
    %19 = tpu.memref_squeeze %18 : memref<1x!tpu.dma_semaphore, #tpu.memory_space<semaphore_mem>> -> memref<!tpu.dma_semaphore, #tpu.memory_space<semaphore_mem>>
    tpu.wait_dma2 semaphore(%19 : memref<!tpu.dma_semaphore, #tpu.memory_space<semaphore_mem>>) src(%15 : memref<12x18x128xf32, #tpu.memory_space<any>>) dst(%17 : memref<12x18x128xf32, #tpu.memory_space<vmem>>)
    %c1_i32_10 = arith.constant 1 : i32
    %20 = arith.addi %arg1, %c1_i32_10 : i32
    %c2_i32_11 = arith.constant 2 : i32
    %21 = arith.cmpi slt, %20, %c2_i32_11 : i32
    %22 = arith.extui %21 : i1 to i32
    %c0_i32_12 = arith.constant 0 : i32
    %23 = arith.cmpi ne, %22, %c0_i32_12 : i32
    scf.if %23 {
      %c1_i32_54 = arith.constant 1 : i32
      %133 = arith.addi %arg1, %c1_i32_54 : i32
      %c1_i32_55 = arith.constant 1 : i32
      %134 = arith.subi %c1_i32_55, %9 : i32
      %c8_i32_56 = arith.constant 8 : i32
      %135 = arith.muli %133, %c8_i32_56 : i32
      %c0_i32_57 = arith.constant 0 : i32
      %c0_i32_58 = arith.constant 0 : i32
      %136 = tpu.memref_slice %arg2[%arg0, %135, %c0_i32_57, %c0_i32_58] : memref<2x20x18x128xf32, #tpu.memory_space<any>> -> memref<1x12x18x128xf32, #tpu.memory_space<any>>
      %137 = tpu.memref_squeeze %136 : memref<1x12x18x128xf32, #tpu.memory_space<any>> -> memref<12x18x128xf32, #tpu.memory_space<any>>
      %c0_i32_59 = arith.constant 0 : i32
      %c0_i32_60 = arith.constant 0 : i32
      %c0_i32_61 = arith.constant 0 : i32
      %138 = tpu.memref_slice %arg8[%134, %c0_i32_59, %c0_i32_60, %c0_i32_61] : memref<2x12x18x128xf32, #tpu.memory_space<vmem>> -> memref<1x12x18x128xf32, #tpu.memory_space<vmem>>
      %139 = tpu.memref_squeeze %138 : memref<1x12x18x128xf32, #tpu.memory_space<vmem>> -> memref<12x18x128xf32, #tpu.memory_space<vmem>>
      %140 = tpu.memref_slice %arg9[%134] : memref<2x!tpu.dma_semaphore, #tpu.memory_space<semaphore_mem>> -> memref<1x!tpu.dma_semaphore, #tpu.memory_space<semaphore_mem>>
      %141 = tpu.memref_squeeze %140 : memref<1x!tpu.dma_semaphore, #tpu.memory_space<semaphore_mem>> -> memref<!tpu.dma_semaphore, #tpu.memory_space<semaphore_mem>>
      tpu.enqueue_dma source(%137 : memref<12x18x128xf32, #tpu.memory_space<any>>) target(%139 : memref<12x18x128xf32, #tpu.memory_space<vmem>>) target_semaphore(%141 : memref<!tpu.dma_semaphore, #tpu.memory_space<semaphore_mem>>)
    } else {
    }
    %24 = arith.index_cast %9 : i32 to index
    %c0 = arith.constant 0 : index
    %c0_13 = arith.constant 0 : index
    %c0_14 = arith.constant 0 : index
    %25 = vector.load %arg8[%24, %c0, %c0_13, %c0_14] : memref<2x12x18x128xf32, #tpu.memory_space<vmem>>, vector<1x12x18x128xf32>
    %26 = vector.shape_cast %25 : vector<1x12x18x128xf32> to vector<12x18x128xf32>
    %27 = arith.truncf %26 : vector<12x18x128xf32> to vector<12x18x128xbf16>
    %cst = arith.constant 0.000000e+00 : f32
    %28 = vector.broadcast %cst : f32 to vector<160x128xf32>
    %29 = vector.extract_strided_slice %27 {offsets = [0, 0, 0], sizes = [10, 18, 128], strides = [1, 1, 1]} : vector<12x18x128xbf16> to vector<10x18x128xbf16>
    %30 = vector.extract_strided_slice %29 {offsets = [0, 0, 0], sizes = [10, 16, 128], strides = [1, 1, 1]} : vector<10x18x128xbf16> to vector<10x16x128xbf16>
    %31 = vector.extract_strided_slice %29 {offsets = [0, 1, 0], sizes = [10, 16, 128], strides = [1, 1, 1]} : vector<10x18x128xbf16> to vector<10x16x128xbf16>
    %32 = vector.extract_strided_slice %29 {offsets = [0, 2, 0], sizes = [10, 16, 128], strides = [1, 1, 1]} : vector<10x18x128xbf16> to vector<10x16x128xbf16>
    %33 = tpu.concatenate %30, %31, %32 in 2 : vector<10x16x128xbf16>, vector<10x16x128xbf16>, vector<10x16x128xbf16> -> vector<10x16x384xbf16>
    %34 = vector.shape_cast %33 : vector<10x16x384xbf16> to vector<160x384xbf16>
    %c0_15 = arith.constant 0 : index
    %c0_16 = arith.constant 0 : index
    %c0_17 = arith.constant 0 : index
    %35 = vector.load %arg3[%c0_15, %c0_16, %c0_17] : memref<3x384x128xbf16, #tpu.memory_space<vmem>>, vector<1x384x128xbf16>
    %36 = vector.shape_cast %35 : vector<1x384x128xbf16> to vector<384x128xbf16>
    %cst_18 = arith.constant dense<0.000000e+00> : vector<160x128xf32>
    %37 = tpu.matmul %34, %36, %cst_18 {dimension_numbers = #tpu.dot_dimension_numbers<[1], [0], [0], [1], [0, 0, 1, 1], [], []>} : vector<160x384xbf16>, vector<384x128xbf16>, vector<160x128xf32> -> vector<160x128xf32>
    %38 = arith.addf %28, %37 : vector<160x128xf32>
    %39 = vector.extract_strided_slice %27 {offsets = [1, 0, 0], sizes = [10, 18, 128], strides = [1, 1, 1]} : vector<12x18x128xbf16> to vector<10x18x128xbf16>
    %40 = vector.extract_strided_slice %39 {offsets = [0, 0, 0], sizes = [10, 16, 128], strides = [1, 1, 1]} : vector<10x18x128xbf16> to vector<10x16x128xbf16>
    %41 = vector.extract_strided_slice %39 {offsets = [0, 1, 0], sizes = [10, 16, 128], strides = [1, 1, 1]} : vector<10x18x128xbf16> to vector<10x16x128xbf16>
    %42 = vector.extract_strided_slice %39 {offsets = [0, 2, 0], sizes = [10, 16, 128], strides = [1, 1, 1]} : vector<10x18x128xbf16> to vector<10x16x128xbf16>
    %43 = tpu.concatenate %40, %41, %42 in 2 : vector<10x16x128xbf16>, vector<10x16x128xbf16>, vector<10x16x128xbf16> -> vector<10x16x384xbf16>
    %44 = vector.shape_cast %43 : vector<10x16x384xbf16> to vector<160x384xbf16>
    %c1 = arith.constant 1 : index
    %c0_19 = arith.constant 0 : index
    %c0_20 = arith.constant 0 : index
    %45 = vector.load %arg3[%c1, %c0_19, %c0_20] : memref<3x384x128xbf16, #tpu.memory_space<vmem>>, vector<1x384x128xbf16>
    %46 = vector.shape_cast %45 : vector<1x384x128xbf16> to vector<384x128xbf16>
    %cst_21 = arith.constant dense<0.000000e+00> : vector<160x128xf32>
    %47 = tpu.matmul %44, %46, %cst_21 {dimension_numbers = #tpu.dot_dimension_numbers<[1], [0], [0], [1], [0, 0, 1, 1], [], []>} : vector<160x384xbf16>, vector<384x128xbf16>, vector<160x128xf32> -> vector<160x128xf32>
    %48 = arith.addf %38, %47 : vector<160x128xf32>
    %49 = vector.extract_strided_slice %27 {offsets = [2, 0, 0], sizes = [10, 18, 128], strides = [1, 1, 1]} : vector<12x18x128xbf16> to vector<10x18x128xbf16>
    %50 = vector.extract_strided_slice %49 {offsets = [0, 0, 0], sizes = [10, 16, 128], strides = [1, 1, 1]} : vector<10x18x128xbf16> to vector<10x16x128xbf16>
    %51 = vector.extract_strided_slice %49 {offsets = [0, 1, 0], sizes = [10, 16, 128], strides = [1, 1, 1]} : vector<10x18x128xbf16> to vector<10x16x128xbf16>
    %52 = vector.extract_strided_slice %49 {offsets = [0, 2, 0], sizes = [10, 16, 128], strides = [1, 1, 1]} : vector<10x18x128xbf16> to vector<10x16x128xbf16>
    %53 = tpu.concatenate %50, %51, %52 in 2 : vector<10x16x128xbf16>, vector<10x16x128xbf16>, vector<10x16x128xbf16> -> vector<10x16x384xbf16>
    %54 = vector.shape_cast %53 : vector<10x16x384xbf16> to vector<160x384xbf16>
    %c2 = arith.constant 2 : index
    %c0_22 = arith.constant 0 : index
    %c0_23 = arith.constant 0 : index
    %55 = vector.load %arg3[%c2, %c0_22, %c0_23] : memref<3x384x128xbf16, #tpu.memory_space<vmem>>, vector<1x384x128xbf16>
    %56 = vector.shape_cast %55 : vector<1x384x128xbf16> to vector<384x128xbf16>
    %cst_24 = arith.constant dense<0.000000e+00> : vector<160x128xf32>
    %57 = tpu.matmul %54, %56, %cst_24 {dimension_numbers = #tpu.dot_dimension_numbers<[1], [0], [0], [1], [0, 0, 1, 1], [], []>} : vector<160x384xbf16>, vector<384x128xbf16>, vector<160x128xf32> -> vector<160x128xf32>
    %58 = arith.addf %48, %57 : vector<160x128xf32>
    %c0_25 = arith.constant 0 : index
    %c0_26 = arith.constant 0 : index
    %59 = vector.load %arg5[%c0_25, %c0_26] : memref<1x128xf32, #tpu.memory_space<vmem>>, vector<1x128xf32>
    %60 = vector.broadcast %59 : vector<1x128xf32> to vector<160x128xf32>
    %61 = arith.addf %58, %60 : vector<160x128xf32>
    %cst_27 = arith.constant 0.000000e+00 : f32
    %62 = vector.broadcast %cst_27 : f32 to vector<160x128xf32>
    %63 = arith.maximumf %61, %62 : vector<160x128xf32>
    %64 = vector.shape_cast %63 : vector<160x128xf32> to vector<10x16x128xf32>
    %65 = tpu.iota {dimensions = array<i32: 0>} : vector<10x1x1xi32>
    %66 = tpu.iota {dimensions = array<i32: 1>} : vector<1x16x1xi32>
    %c0_i32_28 = arith.constant 0 : i32
    %67 = arith.cmpi sgt, %arg1, %c0_i32_28 : i32
    %c0_i32_29 = arith.constant 0 : i32
    %68 = vector.broadcast %c0_i32_29 : i32 to vector<10x1x1xi32>
    %69 = arith.cmpi sgt, %65, %68 : vector<10x1x1xi32>
    %70 = vector.broadcast %67 : i1 to vector<10x1x1xi1>
    %71 = arith.ori %70, %69 : vector<10x1x1xi1>
    %c1_i32_30 = arith.constant 1 : i32
    %72 = arith.cmpi slt, %arg1, %c1_i32_30 : i32
    %c9_i32 = arith.constant 9 : i32
    %73 = vector.broadcast %c9_i32 : i32 to vector<10x1x1xi32>
    %74 = arith.cmpi slt, %65, %73 : vector<10x1x1xi32>
    %75 = vector.broadcast %72 : i1 to vector<10x1x1xi1>
    %76 = arith.ori %75, %74 : vector<10x1x1xi1>
    %77 = arith.andi %71, %76 : vector<10x1x1xi1>
    %c16_i32 = arith.constant 16 : i32
    %78 = vector.broadcast %c16_i32 : i32 to vector<1x16x1xi32>
    %79 = arith.cmpi slt, %66, %78 : vector<1x16x1xi32>
    %80 = vector.broadcast %77 : vector<10x1x1xi1> to vector<10x16x1xi1>
    %81 = vector.broadcast %79 : vector<1x16x1xi1> to vector<10x16x1xi1>
    %82 = arith.andi %80, %81 : vector<10x16x1xi1>
    %cst_31 = arith.constant 0.000000e+00 : f32
    %83 = vector.shape_cast %82 : vector<10x16x1xi1> to vector<10x16x1xi1>
    %84 = vector.broadcast %83 : vector<10x16x1xi1> to vector<10x16x128xi1>
    %85 = vector.broadcast %cst_31 : f32 to vector<10x16x128xf32>
    %86 = arith.select %84, %64, %85 : vector<10x16x128xi1>, vector<10x16x128xf32>
    %87 = arith.truncf %86 : vector<10x16x128xf32> to vector<10x16x128xbf16>
    %cst_32 = arith.constant 0.000000e+00 : bf16
    %88 = vector.broadcast %cst_32 : bf16 to vector<10x1x128xbf16>
    %89 = tpu.concatenate %88, %87, %88 in 1 : vector<10x1x128xbf16>, vector<10x16x128xbf16>, vector<10x1x128xbf16> -> vector<10x18x128xbf16>
    %cst_33 = arith.constant 0.000000e+00 : f32
    %90 = vector.broadcast %cst_33 : f32 to vector<128x128xf32>
    %91 = vector.extract_strided_slice %89 {offsets = [0, 0, 0], sizes = [8, 18, 128], strides = [1, 1, 1]} : vector<10x18x128xbf16> to vector<8x18x128xbf16>
    %92 = vector.extract_strided_slice %91 {offsets = [0, 0, 0], sizes = [8, 16, 128], strides = [1, 1, 1]} : vector<8x18x128xbf16> to vector<8x16x128xbf16>
    %93 = vector.extract_strided_slice %91 {offsets = [0, 1, 0], sizes = [8, 16, 128], strides = [1, 1, 1]} : vector<8x18x128xbf16> to vector<8x16x128xbf16>
    %94 = vector.extract_strided_slice %91 {offsets = [0, 2, 0], sizes = [8, 16, 128], strides = [1, 1, 1]} : vector<8x18x128xbf16> to vector<8x16x128xbf16>
    %95 = tpu.concatenate %92, %93, %94 in 2 : vector<8x16x128xbf16>, vector<8x16x128xbf16>, vector<8x16x128xbf16> -> vector<8x16x384xbf16>
    %96 = vector.shape_cast %95 : vector<8x16x384xbf16> to vector<128x384xbf16>
    %c0_34 = arith.constant 0 : index
    %c0_35 = arith.constant 0 : index
    %c0_36 = arith.constant 0 : index
    %97 = vector.load %arg4[%c0_34, %c0_35, %c0_36] : memref<3x384x128xbf16, #tpu.memory_space<vmem>>, vector<1x384x128xbf16>
    %98 = vector.shape_cast %97 : vector<1x384x128xbf16> to vector<384x128xbf16>
    %cst_37 = arith.constant dense<0.000000e+00> : vector<128x128xf32>
    %99 = tpu.matmul %96, %98, %cst_37 {dimension_numbers = #tpu.dot_dimension_numbers<[1], [0], [0], [1], [0, 0, 1, 1], [], []>} : vector<128x384xbf16>, vector<384x128xbf16>, vector<128x128xf32> -> vector<128x128xf32>
    %100 = arith.addf %90, %99 : vector<128x128xf32>
    %101 = vector.extract_strided_slice %89 {offsets = [1, 0, 0], sizes = [8, 18, 128], strides = [1, 1, 1]} : vector<10x18x128xbf16> to vector<8x18x128xbf16>
    %102 = vector.extract_strided_slice %101 {offsets = [0, 0, 0], sizes = [8, 16, 128], strides = [1, 1, 1]} : vector<8x18x128xbf16> to vector<8x16x128xbf16>
    %103 = vector.extract_strided_slice %101 {offsets = [0, 1, 0], sizes = [8, 16, 128], strides = [1, 1, 1]} : vector<8x18x128xbf16> to vector<8x16x128xbf16>
    %104 = vector.extract_strided_slice %101 {offsets = [0, 2, 0], sizes = [8, 16, 128], strides = [1, 1, 1]} : vector<8x18x128xbf16> to vector<8x16x128xbf16>
    %105 = tpu.concatenate %102, %103, %104 in 2 : vector<8x16x128xbf16>, vector<8x16x128xbf16>, vector<8x16x128xbf16> -> vector<8x16x384xbf16>
    %106 = vector.shape_cast %105 : vector<8x16x384xbf16> to vector<128x384xbf16>
    %c1_38 = arith.constant 1 : index
    %c0_39 = arith.constant 0 : index
    %c0_40 = arith.constant 0 : index
    %107 = vector.load %arg4[%c1_38, %c0_39, %c0_40] : memref<3x384x128xbf16, #tpu.memory_space<vmem>>, vector<1x384x128xbf16>
    %108 = vector.shape_cast %107 : vector<1x384x128xbf16> to vector<384x128xbf16>
    %cst_41 = arith.constant dense<0.000000e+00> : vector<128x128xf32>
    %109 = tpu.matmul %106, %108, %cst_41 {dimension_numbers = #tpu.dot_dimension_numbers<[1], [0], [0], [1], [0, 0, 1, 1], [], []>} : vector<128x384xbf16>, vector<384x128xbf16>, vector<128x128xf32> -> vector<128x128xf32>
    %110 = arith.addf %100, %109 : vector<128x128xf32>
    %111 = vector.extract_strided_slice %89 {offsets = [2, 0, 0], sizes = [8, 18, 128], strides = [1, 1, 1]} : vector<10x18x128xbf16> to vector<8x18x128xbf16>
    %112 = vector.extract_strided_slice %111 {offsets = [0, 0, 0], sizes = [8, 16, 128], strides = [1, 1, 1]} : vector<8x18x128xbf16> to vector<8x16x128xbf16>
    %113 = vector.extract_strided_slice %111 {offsets = [0, 1, 0], sizes = [8, 16, 128], strides = [1, 1, 1]} : vector<8x18x128xbf16> to vector<8x16x128xbf16>
    %114 = vector.extract_strided_slice %111 {offsets = [0, 2, 0], sizes = [8, 16, 128], strides = [1, 1, 1]} : vector<8x18x128xbf16> to vector<8x16x128xbf16>
    %115 = tpu.concatenate %112, %113, %114 in 2 : vector<8x16x128xbf16>, vector<8x16x128xbf16>, vector<8x16x128xbf16> -> vector<8x16x384xbf16>
    %116 = vector.shape_cast %115 : vector<8x16x384xbf16> to vector<128x384xbf16>
    %c2_42 = arith.constant 2 : index
    %c0_43 = arith.constant 0 : index
    %c0_44 = arith.constant 0 : index
    %117 = vector.load %arg4[%c2_42, %c0_43, %c0_44] : memref<3x384x128xbf16, #tpu.memory_space<vmem>>, vector<1x384x128xbf16>
    %118 = vector.shape_cast %117 : vector<1x384x128xbf16> to vector<384x128xbf16>
    %cst_45 = arith.constant dense<0.000000e+00> : vector<128x128xf32>
    %119 = tpu.matmul %116, %118, %cst_45 {dimension_numbers = #tpu.dot_dimension_numbers<[1], [0], [0], [1], [0, 0, 1, 1], [], []>} : vector<128x384xbf16>, vector<384x128xbf16>, vector<128x128xf32> -> vector<128x128xf32>
    %120 = arith.addf %110, %119 : vector<128x128xf32>
    %c0_46 = arith.constant 0 : index
    %c0_47 = arith.constant 0 : index
    %121 = vector.load %arg6[%c0_46, %c0_47] : memref<1x128xf32, #tpu.memory_space<vmem>>, vector<1x128xf32>
    %122 = vector.broadcast %121 : vector<1x128xf32> to vector<128x128xf32>
    %123 = arith.addf %120, %122 : vector<128x128xf32>
    %124 = vector.extract_strided_slice %26 {offsets = [2, 1, 0], sizes = [8, 16, 128], strides = [1, 1, 1]} : vector<12x18x128xf32> to vector<8x16x128xf32>
    %125 = vector.shape_cast %124 : vector<8x16x128xf32> to vector<128x128xf32>
    %126 = arith.addf %123, %125 : vector<128x128xf32>
    %cst_48 = arith.constant 0.000000e+00 : f32
    %127 = vector.broadcast %cst_48 : f32 to vector<128x128xf32>
    %128 = arith.maximumf %126, %127 : vector<128x128xf32>
    %129 = vector.shape_cast %128 : vector<128x128xf32> to vector<8x16x128xf32>
    %c0_49 = arith.constant 0 : index
    %c0_50 = arith.constant 0 : index
    %c0_51 = arith.constant 0 : index
    %c0_52 = arith.constant 0 : index
    %c0_53 = arith.constant 0 : index
    %130 = vector.load %arg7[%c0_49, %c0_50, %c0_51, %c0_52, %c0_53] : memref<1x1x8x16x128xf32, #tpu.memory_space<vmem>>, vector<1x1x8x16x128xf32>
    %131 = vector.shape_cast %130 : vector<1x1x8x16x128xf32> to vector<8x16x128xf32>
    %132 = vector.shape_cast %129 : vector<8x16x128xf32> to vector<1x1x8x16x128xf32>
    tpu.vector_store %arg7[%c0_49, %c0_50, %c0_51, %c0_52, %c0_53], %132 {strides = array<i32>} : memref<1x1x8x16x128xf32, #tpu.memory_space<vmem>>, vector<1x1x8x16x128xf32>,
    return
  }
  func.func @transform_1(%arg0: i32, %arg1: i32) -> (i32, i32, i32) {
    %c0_i32 = arith.constant 0 : i32
    %c0_i32_0 = arith.constant 0 : i32
    %c0_i32_1 = arith.constant 0 : i32
    %c0_i32_2 = arith.constant 0 : i32
    return %c0_i32, %c0_i32_0, %c0_i32_1 : i32, i32, i32
  }
  func.func @transform_2(%arg0: i32, %arg1: i32) -> (i32, i32, i32) {
    %c0_i32 = arith.constant 0 : i32
    %c0_i32_0 = arith.constant 0 : i32
    %c0_i32_1 = arith.constant 0 : i32
    %c0_i32_2 = arith.constant 0 : i32
    return %c0_i32, %c0_i32_0, %c0_i32_1 : i32, i32, i32
  }
  func.func @transform_3(%arg0: i32, %arg1: i32) -> (i32, i32) {
    %c0_i32 = arith.constant 0 : i32
    %c0_i32_0 = arith.constant 0 : i32
    %c0_i32_1 = arith.constant 0 : i32
    return %c0_i32, %c0_i32_0 : i32, i32
  }
  func.func @transform_4(%arg0: i32, %arg1: i32) -> (i32, i32) {
    %c0_i32 = arith.constant 0 : i32
    %c0_i32_0 = arith.constant 0 : i32
    %c0_i32_1 = arith.constant 0 : i32
    return %c0_i32, %c0_i32_0 : i32, i32
  }
  func.func @transform_5(%arg0: i32, %arg1: i32) -> (i32, i32, i32, i32, i32) {
    %c0_i32 = arith.constant 0 : i32
    %c0_i32_0 = arith.constant 0 : i32
    %c0_i32_1 = arith.constant 0 : i32
    %c0_i32_2 = arith.constant 0 : i32
    return %arg0, %arg1, %c0_i32, %c0_i32_0, %c0_i32_1 : i32, i32, i32, i32, i32
  }
}

</mosaic_0001>

<llo_original>
// kernel: tpu_custom_call.1
$region0: #{tpu_custom_call.1}
  #allocation0 [shape = 'u32[]', space=smem, size = 0x4, offset = 0x4, fixed_abs, tag = 'smem constant byte address 0x4 - core index']
  #allocation1 [shape = 'u32[144,128]{1,0:T(1,128)}', space=vmem, size = 0x12000, scoped, tag = 'internal scratch']
  #allocation2 [shape = 'f32[2,12,18,128]{3,2,1,0:T(8,128)}', space=vmem, size = 0x48000, scoped, tag = 'scratch operand']
  #allocation3 [shape = 's32[2]{0}', space=sflag, size = 0x8, scoped, tag = 'scratch operand']
  #allocation6 [shape = 's32[]', space=sflag, size = 0x4, offset = 0, fixed_abs, tag = 'sflag constant byte address 0x0 - dummy sync flag']
  #allocation7 [shape = 's32[]', space=sflag, size = 0x4, offset = 0, fixed_abs, tag = 'sflag constant byte address 0x0 - dummy sync flag']
  %s0 = inlined_call_operand.vmem [shape: f32[2,20,18,128], index: 0, kind: input, shape index: {}]
  %s1 = inlined_call_operand.vmem [shape: bf16[3,384,128], index: 1, kind: input, shape index: {}]
  %s2 = inlined_call_operand.vmem [shape: bf16[3,384,128], index: 2, kind: input, shape index: {}]
  %s3 = inlined_call_operand.vmem [shape: f32[1,128], index: 3, kind: input, shape index: {}]
  %s4 = inlined_call_operand.vmem [shape: f32[1,128], index: 4, kind: input, shape index: {}]
  %s5 = inlined_call_operand.hbm [shape: f32[2,2,8,16,128], index: 5, kind: output, shape index: {}]
  %s6 = sld [smem:[#allocation0]]
  $region131: #{tpu_custom_call.1} parent=0
    _
  %s8 = ssub.s32 1, %s6
  %s9 = scalar_select 0, %s8, %s6
  $region1: #{tpu_custom_call.1} parent=0
    #allocation4 [shape = 'u8[131072]{0}', space=vmem, size = 0x20000, scoped, tag = 'output window, operand 0']
    #allocation5 [shape = 's32[2]{0}', space=sflag, size = 0x8, scoped, tag = 'scoped memory for tpu_custom_call.1']
    %10 = vsyncpa [#allocation5], 0
    %s11 = scalar_lea.sflag [#allocation5], 1
    %12 = vsyncpa %s11, 0
    loop: start=0, step=1, limit=6
    $region2: #{tpu_custom_call.1} parent=1 // loop_pre_header
      _
    $region3: #{tpu_custom_call.1} parent=1 // loop_header
      %s14 = sphi 0, %s18
      %p15 = scmp.ge.s32.totalorder %s14, 6
      %s21 = sphi 0, %s33
      %s22 = sphi 0, %s29
      %s23 = sphi 0, %s21
      %s24 = sphi 0, %s22
      %s25 = sphi 0, %s23
      %s26 = sphi 0, %s24
      %s34 = sphi 0, %s34
      %s36 = sphi 0, %s34
      %s37 = sphi 0, %s36
      %s51 = sphi 0, %s37
      %s55 = sphi 0, %s55
      %s57 = sphi 0, %s55
      %s58 = sphi 0, %s57
      %s72 = sphi 0, %s58
      %s76 = sphi 0, %s76
      %s78 = sphi 0, %s76
      %s79 = sphi 0, %s78
      %s93 = sphi 0, %s79
      %s97 = sphi 0, %s97
      %s99 = sphi 0, %s97
      %s100 = sphi 0, %s99
      %s114 = sphi 0, %s100
      %s122 = sphi 0, %s124
      %s125 = sphi 0, %s122
      %s126 = sphi 0, %s125
      %s142 = sphi 0, %s126
    $region4: #{tpu_custom_call.1} parent=1 // loop_header_branch
      %17 = sbr.rel (%p15) target = $region8
    $region5: #{tpu_custom_call.1} parent=1 // loop_body
      %s19 = ssub.s32 %s14, 1
      %s20 = ssub.s32 %s14, 2
      %s27 = sadd.s32 1, %s22
      %p28 = scmp.ge.s32.totalorder %s27, 2
      %s29 = scalar_select %p28, 0, %s27
      %s30 = sadd.s32 1, %s21
      %s31 = scalar_select %p28, %s30, %s21
      %p32 = scmp.ge.s32.totalorder %s31, 2
      %s33 = scalar_select %p32, 0, %s31
      %s35 = sadd.s32 %s34, 1
      %p38 = scmp.eq.s32.totalorder %s14, 3
      %p39 = scmp.ne.s32.totalorder %s34, %s36
      %p40 = scmp.eq.s32.totalorder %s14, 0
      %p41 = por %p39, %p40
      %p42 = scmp.ne.s32.totalorder %s34, %s36
      %p43 = scmp.eq.s32.totalorder %s19, 3
      %p44 = por %p42, %p43
      %p45 = scmp.ne.s32.totalorder %s36, %s37
      %p46 = scmp.eq.s32.totalorder %s19, 0
      %p47 = por %p45, %p46
      %p48 = scmp.ne.s32.totalorder %s36, %s37
      %p49 = scmp.eq.s32.totalorder %s20, 3
      %p50 = por %p48, %p49
      %p52 = scmp.ne.s32.totalorder %s37, %s51
      %p53 = scmp.eq.s32.totalorder %s20, 0
      %p54 = por %p52, %p53
      %s56 = sadd.s32 %s55, 1
      %p59 = scmp.eq.s32.totalorder %s14, 3
      %p60 = scmp.ne.s32.totalorder %s55, %s57
      %p61 = scmp.eq.s32.totalorder %s14, 0
      %p62 = por %p60, %p61
      %p63 = scmp.ne.s32.totalorder %s55, %s57
      %p64 = scmp.eq.s32.totalorder %s19, 3
      %p65 = por %p63, %p64
      %p66 = scmp.ne.s32.totalorder %s57, %s58
      %p67 = scmp.eq.s32.totalorder %s19, 0
      %p68 = por %p66, %p67
      %p69 = scmp.ne.s32.totalorder %s57, %s58
      %p70 = scmp.eq.s32.totalorder %s20, 3
      %p71 = por %p69, %p70
      %p73 = scmp.ne.s32.totalorder %s58, %s72
      %p74 = scmp.eq.s32.totalorder %s20, 0
      %p75 = por %p73, %p74
      %s77 = sadd.s32 %s76, 1
      %p80 = scmp.eq.s32.totalorder %s14, 3
      %p81 = scmp.ne.s32.totalorder %s76, %s78
      %p82 = scmp.eq.s32.totalorder %s14, 0
      %p83 = por %p81, %p82
      %p84 = scmp.ne.s32.totalorder %s76, %s78
      %p85 = scmp.eq.s32.totalorder %s19, 3
      %p86 = por %p84, %p85
      %p87 = scmp.ne.s32.totalorder %s78, %s79
      %p88 = scmp.eq.s32.totalorder %s19, 0
      %p89 = por %p87, %p88
      %p90 = scmp.ne.s32.totalorder %s78, %s79
      %p91 = scmp.eq.s32.totalorder %s20, 3
      %p92 = por %p90, %p91
      %p94 = scmp.ne.s32.totalorder %s79, %s93
      %p95 = scmp.eq.s32.totalorder %s20, 0
      %p96 = por %p94, %p95
      %s98 = sadd.s32 %s97, 1
      %p101 = scmp.eq.s32.totalorder %s14, 3
      %p102 = scmp.ne.s32.totalorder %s97, %s99
      %p103 = scmp.eq.s32.totalorder %s14, 0
      %p104 = por %p102, %p103
      %p105 = scmp.ne.s32.totalorder %s97, %s99
      %p106 = scmp.eq.s32.totalorder %s19, 3
      %p107 = por %p105, %p106
      %p108 = scmp.ne.s32.totalorder %s99, %s100
      %p109 = scmp.eq.s32.totalorder %s19, 0
      %p110 = por %p108, %p109
      %p111 = scmp.ne.s32.totalorder %s99, %s100
      %p112 = scmp.eq.s32.totalorder %s20, 3
      %p113 = por %p111, %p112
      %p115 = scmp.ne.s32.totalorder %s100, %s114
      %p116 = scmp.eq.s32.totalorder %s20, 0
      %p117 = por %p115, %p116
      %s118 = ssub.s32 %s21, %s33
      %s119 = ssub.s32 %s22, %s29
      %s120 = sor.u32 %s118, %s119
      %p121 = scmp.eq.s32.totalorder %s120, 0
      %s123 = sadd.s32 %s122, 1
      %s124 = scalar_select %p121, %s122, %s123
      %p127 = pneg %p121
      %p128 = scmp.eq.s32.totalorder %s14, 3
      %p129 = por %p127, %p128
      %p130 = scmp.ne.s32.totalorder %s122, %s125
      %p131 = scmp.eq.s32.totalorder %s14, 0
      %p132 = por %p130, %p131
      %p133 = scmp.ne.s32.totalorder %s122, %s125
      %p134 = scmp.eq.s32.totalorder %s19, 3
      %p135 = por %p133, %p134
      %p136 = scmp.ne.s32.totalorder %s125, %s126
      %p137 = scmp.eq.s32.totalorder %s19, 0
      %p138 = por %p136, %p137
      %p139 = scmp.ne.s32.totalorder %s125, %s126
      %p140 = scmp.eq.s32.totalorder %s20, 3
      %p141 = por %p139, %p140
      %p143 = scmp.ne.s32.totalorder %s126, %s142
      %p144 = scmp.eq.s32.totalorder %s20, 0
      %p145 = por %p143, %p144
      %p146 = scmp.le.s32.totalorder 1, %s14
      %p147 = scmp.lt.s32.totalorder %s14, 5
      %p148 = pnand %p146, %p147
      %p149 = pneg %p148
      // Predicated region
      $region9: #{tpu_custom_call.1} parent=5 // pred_check
        _
      $region10: #{tpu_custom_call.1} parent=5 // pred_check_branch
        %151 = sbr.rel (%p148) target = $region12
      $region11: #{tpu_custom_call.1} parent=5 // pred_region
        %s152 = ssub.s32 %s14, 1
        // Predicated region
        $region13: #{tpu_custom_call.1} parent=11 // pred_check
          %p153 = pneg %p47
        $region14: #{tpu_custom_call.1} parent=11 // pred_check_branch
          %155 = sbr.rel (%p153) target = $region16
        $region15: #{tpu_custom_call.1} parent=11 // pred_region
          _
        $region16: #{tpu_custom_call.1} parent=11 // pred_fallthru
          _
        // Predicated region
        $region17: #{tpu_custom_call.1} parent=11 // pred_check
          %p156 = pneg %p68
        $region18: #{tpu_custom_call.1} parent=11 // pred_check_branch
          %158 = sbr.rel (%p156) target = $region20
        $region19: #{tpu_custom_call.1} parent=11 // pred_region
          _
        $region20: #{tpu_custom_call.1} parent=11 // pred_fallthru
          _
        // Predicated region
        $region21: #{tpu_custom_call.1} parent=11 // pred_check
          %p159 = pneg %p89
        $region22: #{tpu_custom_call.1} parent=11 // pred_check_branch
          %161 = sbr.rel (%p159) target = $region24
        $region23: #{tpu_custom_call.1} parent=11 // pred_region
          _
        $region24: #{tpu_custom_call.1} parent=11 // pred_fallthru
          _
        // Predicated region
        $region25: #{tpu_custom_call.1} parent=11 // pred_check
          %p162 = pneg %p110
        $region26: #{tpu_custom_call.1} parent=11 // pred_check_branch
          %164 = sbr.rel (%p162) target = $region28
        $region27: #{tpu_custom_call.1} parent=11 // pred_region
          _
        $region28: #{tpu_custom_call.1} parent=11 // pred_fallthru
          _
      $region12: #{tpu_custom_call.1} parent=5 // pred_fallthru
        _
      %p165 = scmp.lt.s32.totalorder %s14, 4
      // Predicated region
      $region29: #{tpu_custom_call.1} parent=5 // pred_check
        %p166 = pneg %p165
      $region30: #{tpu_custom_call.1} parent=5 // pred_check_branch
        %168 = sbr.rel (%p166) target = $region32
      $region31: #{tpu_custom_call.1} parent=5 // pred_region
        _
      $region32: #{tpu_custom_call.1} parent=5 // pred_fallthru
        _
      %p169 = scmp.le.s32.totalorder 1, %s14
      %p170 = scmp.lt.s32.totalorder %s14, 5
      %p171 = pnand %p169, %p170
      %p172 = pneg %p171
      // Predicated region
      $region33: #{tpu_custom_call.1} parent=5 // pred_check
        _
      $region34: #{tpu_custom_call.1} parent=5 // pred_check_branch
        %174 = sbr.rel (%p171) target = $region36
      $region35: #{tpu_custom_call.1} parent=5 // pred_region
        %s175 = ssub.s32 %s14, 1
        %p176 = pneg %p47
        %p177 = pneg %p44
        %p178 = pneg %p68
        %p179 = pneg %p65
        %p180 = pneg %p89
        %p181 = pneg %p86
        %p182 = pneg %p110
        %p183 = pneg %p107
        %p184 = pneg %p138
        %p185 = pneg %p135
        %s186 = sand.u32 %s125, 1
        %s187 = scalar_lea.sflag [#allocation5], %s186
        %s188 = sand.u32 %s125, 1
        %s189 = smul.addr %s188, 128
        %s190 = scalar_lea.vmem [#allocation4], %s189
        %p192 = scmp.lt.s32.totalorder %s24, 0
        %s193 = ssub.s32 0, %s24
        %s194 = scalar_select %p192, %s193, %s24
        %s195 = sand.u32 %s194, 1
        %s196 = ssub.s32 0, %s195
        %s197 = scalar_select %p192, %s196, %s195
        %p198 = scmp.ne.s32.totalorder %s197, 0
        %p199 = scmp.lt.s32.totalorder %s197, 0
        %p200 = pnand %p199, %p198
        %p201 = pneg %p200
        %s202 = sadd.s32 %s197, 2
        %s203 = scalar_select %p201, %s202, %s197
        %p204 = scmp.eq.s32.totalorder %s24, 0
        // Predicated region
        $region37: #{tpu_custom_call.1} parent=35 // pred_check
          %p205 = pneg %p204
        $region38: #{tpu_custom_call.1} parent=35 // pred_check_branch
          %207 = sbr.rel (%p205) target = $region40
        $region39: #{tpu_custom_call.1} parent=35 // pred_region
          %s208 = smul.u32 %s24, 8
          %s209 = smul.u32 %s208, 24
          %s210 = smul.u32 %s23, 480
          %s211 = sadd.s32 %s209, %s210
          %s212 = scalar_lea.vmem %s0, %s211
          %s213 = smul.u32 %s203, 288
          %s214 = scalar_lea.vmem [#allocation2], %s213
          %s215 = scalar_lea.sflag [#allocation3], %s203
          %p217 = scmp.lt.u32.totalorder 18, 8
          %p218 = pneg %p217
          // Predicated region
          $region41: #{tpu_custom_call.1} parent=39 // pred_check
            _
          $region42: #{tpu_custom_call.1} parent=39 // pred_check_branch
            %220 = sbr.rel (%p217) target = $region44
          $region43: #{tpu_custom_call.1} parent=39 // pred_region
            %s257 = sand.u32 18, 7
            %p258 = scmp.eq.s32.totalorder %s257, 0
            %p259 = pneg %p258
            // Predicated region
            $region56: #{tpu_custom_call.1} parent=43 // pred_check
              _
            $region57: #{tpu_custom_call.1} parent=43 // pred_check_branch
              %261 = sbr.rel (%p258) target = $region59
            $region58: #{tpu_custom_call.1} parent=43 // pred_region
              %s262 = sand.u32 18, 7
              %s263 = ssub.s32 18, %s262
              %s264 = scalar_lea.vmem %s212, %s263
              %s265 = ssub.s32 18, %s262
              %s266 = scalar_lea.vmem %s214, %s265 [#allocation2]
              loop: start=0, step=1, limit=1
              $region60: #{tpu_custom_call.1} parent=58 // loop_pre_header
                _
              $region61: #{tpu_custom_call.1} parent=58 // loop_header
                %s268 = sphi 0, %s272
                %p269 = scmp.ge.s32.totalorder %s268, 1
                %s273 = sphi %s212, %s212
                %s274 = sphi %s214, %s214
              $region62: #{tpu_custom_call.1} parent=58 // loop_header_branch
                %271 = sbr.rel (%p269) target = $region66
              $region63: #{tpu_custom_call.1} parent=58 // loop_body
                %v275 = vld [vmem:[%s273] sm:$0xff]
                %276 = vst [vmem:[%s274] sm:$0xff] %v275
                %v277 = vld [vmem:[%s273 + $0x8] sm:$0xff]
                %278 = vst [vmem:[%s274 + $0x8] sm:$0xff] %v277
                %v279 = vld [vmem:[%s273 + $0x18] sm:$0xff]
                %280 = vst [vmem:[%s274 + $0x18] sm:$0xff] %v279
                %v281 = vld [vmem:[%s273 + $0x20] sm:$0xff]
                %282 = vst [vmem:[%s274 + $0x20] sm:$0xff] %v281
                %v283 = vld [vmem:[%s273 + $0x30] sm:$0xff]
                %284 = vst [vmem:[%s274 + $0x30] sm:$0xff] %v283
                %v285 = vld [vmem:[%s273 + $0x38] sm:$0xff]
                %286 = vst [vmem:[%s274 + $0x38] sm:$0xff] %v285
                %v287 = vld [vmem:[%s273 + $0x48] sm:$0xff]
                %288 = vst [vmem:[%s274 + $0x48] sm:$0xff] %v287
                %v289 = vld [vmem:[%s273 + $0x50] sm:$0xff]
                %290 = vst [vmem:[%s274 + $0x50] sm:$0xff] %v289
                %v291 = vld [vmem:[%s273 + $0x60] sm:$0xff]
                %292 = vst [vmem:[%s274 + $0x60] sm:$0xff] %v291
                %v293 = vld [vmem:[%s273 + $0x68] sm:$0xff]
                %294 = vst [vmem:[%s274 + $0x68] sm:$0xff] %v293
                %v295 = vld [vmem:[%s273 + $0x78] sm:$0xff]
                %296 = vst [vmem:[%s274 + $0x78] sm:$0xff] %v295
                %v297 = vld [vmem:[%s273 + $0x80] sm:$0xff]
                %298 = vst [vmem:[%s274 + $0x80] sm:$0xff] %v297
                %v299 = vld [vmem:[%s273 + $0x90] sm:$0xff]
                %300 = vst [vmem:[%s274 + $0x90] sm:$0xff] %v299
                %v301 = vld [vmem:[%s273 + $0x98] sm:$0xff]
                %302 = vst [vmem:[%s274 + $0x98] sm:$0xff] %v301
                %v303 = vld [vmem:[%s273 + $0xa8] sm:$0xff]
                %304 = vst [vmem:[%s274 + $0xa8] sm:$0xff] %v303
                %v305 = vld [vmem:[%s273 + $0xb0] sm:$0xff]
                %306 = vst [vmem:[%s274 + $0xb0] sm:$0xff] %v305
                %v307 = vld [vmem:[%s273 + $0xc0] sm:$0xff]
                %308 = vst [vmem:[%s274 + $0xc0] sm:$0xff] %v307
                %v309 = vld [vmem:[%s273 + $0xc8] sm:$0xff]
                %310 = vst [vmem:[%s274 + $0xc8] sm:$0xff] %v309
                %v311 = vld [vmem:[%s273 + $0xd8] sm:$0xff]
                %312 = vst [vmem:[%s274 + $0xd8] sm:$0xff] %v311
                %v313 = vld [vmem:[%s273 + $0xe0] sm:$0xff]
                %314 = vst [vmem:[%s274 + $0xe0] sm:$0xff] %v313
                %v315 = vld [vmem:[%s273 + $0xf0] sm:$0xff]
                %316 = vst [vmem:[%s274 + $0xf0] sm:$0xff] %v315
                %v317 = vld [vmem:[%s273 + $0xf8] sm:$0xff]
                %318 = vst [vmem:[%s274 + $0xf8] sm:$0xff] %v317
                %v319 = vld [vmem:[%s273 + $0x108] sm:$0xff]
                %320 = vst [vmem:[%s274 + $0x108] sm:$0xff] %v319
                %v321 = vld [vmem:[%s273 + $0x110] sm:$0xff]
                %322 = vst [vmem:[%s274 + $0x110] sm:$0xff] %v321
              $region64: #{tpu_custom_call.1} parent=58 // loop_footer
                %s272 = sadd.s32 1, %s268
              $region65: #{tpu_custom_call.1} parent=58 // loop_footer_branch
                %267 = sbr.rel target = $region61
              $region66: #{tpu_custom_call.1} parent=58 // loop_exit
                _
              %s323 = sshllo.u32 0, %s262
              loop: start=0, step=1, limit=1
              $region67: #{tpu_custom_call.1} parent=58 // loop_pre_header
                _
              $region68: #{tpu_custom_call.1} parent=58 // loop_header
                %s325 = sphi 0, %s329
                %p326 = scmp.ge.s32.totalorder %s325, 1
                %s330 = sphi %s264, %s264
                %s331 = sphi %s266, %s266
              $region69: #{tpu_custom_call.1} parent=58 // loop_header_branch
                %328 = sbr.rel (%p326) target = $region73
              $region70: #{tpu_custom_call.1} parent=58 // loop_body
                %v332 = vld [vmem:[%s330] sm:%s323]
                %333 = vst [vmem:[%s331] sm:%s323] %v332
                %v334 = vld [vmem:[%s330 + $0x18] sm:%s323]
                %335 = vst [vmem:[%s331 + $0x18] sm:%s323] %v334
                %v336 = vld [vmem:[%s330 + $0x30] sm:%s323]
                %337 = vst [vmem:[%s331 + $0x30] sm:%s323] %v336
                %v338 = vld [vmem:[%s330 + $0x48] sm:%s323]
                %339 = vst [vmem:[%s331 + $0x48] sm:%s323] %v338
                %v340 = vld [vmem:[%s330 + $0x60] sm:%s323]
                %341 = vst [vmem:[%s331 + $0x60] sm:%s323] %v340
                %v342 = vld [vmem:[%s330 + $0x78] sm:%s323]
                %343 = vst [vmem:[%s331 + $0x78] sm:%s323] %v342
                %v344 = vld [vmem:[%s330 + $0x90] sm:%s323]
                %345 = vst [vmem:[%s331 + $0x90] sm:%s323] %v344
                %v346 = vld [vmem:[%s330 + $0xa8] sm:%s323]
                %347 = vst [vmem:[%s331 + $0xa8] sm:%s323] %v346
                %v348 = vld [vmem:[%s330 + $0xc0] sm:%s323]
                %349 = vst [vmem:[%s331 + $0xc0] sm:%s323] %v348
                %v350 = vld [vmem:[%s330 + $0xd8] sm:%s323]
                %351 = vst [vmem:[%s331 + $0xd8] sm:%s323] %v350
                %v352 = vld [vmem:[%s330 + $0xf0] sm:%s323]
                %353 = vst [vmem:[%s331 + $0xf0] sm:%s323] %v352
                %v354 = vld [vmem:[%s330 + $0x108] sm:%s323]
                %355 = vst [vmem:[%s331 + $0x108] sm:%s323] %v354
              $region71: #{tpu_custom_call.1} parent=58 // loop_footer
                %s329 = sadd.s32 1, %s325
              $region72: #{tpu_custom_call.1} parent=58 // loop_footer_branch
                %324 = sbr.rel target = $region68
              $region73: #{tpu_custom_call.1} parent=58 // loop_exit
                _
            $region59: #{tpu_custom_call.1} parent=43 // pred_fallthru
              _
          $region44: #{tpu_custom_call.1} parent=39 // pred_fallthru
            _
          // Predicated region
          $region45: #{tpu_custom_call.1} parent=39 // pred_check
            %p221 = pneg %p217
          $region46: #{tpu_custom_call.1} parent=39 // pred_check_branch
            %223 = sbr.rel (%p221) target = $region48
          $region47: #{tpu_custom_call.1} parent=39 // pred_region
            %s224 = sshllo.u32 0, 18
            loop: start=0, step=1, limit=1
            $region49: #{tpu_custom_call.1} parent=47 // loop_pre_header
              _
            $region50: #{tpu_custom_call.1} parent=47 // loop_header
              %s226 = sphi 0, %s230
              %p227 = scmp.ge.s32.totalorder %s226, 1
              %s231 = sphi %s212, %s212
              %s232 = sphi %s214, %s214
            $region51: #{tpu_custom_call.1} parent=47 // loop_header_branch
              %229 = sbr.rel (%p227) target = $region55
            $region52: #{tpu_custom_call.1} parent=47 // loop_body
              %v233 = vld [vmem:[%s231] sm:%s224]
              %234 = vst [vmem:[%s232] sm:%s224] %v233
              %v235 = vld [vmem:[%s231 + $0x18] sm:%s224]
              %236 = vst [vmem:[%s232 + $0x18] sm:%s224] %v235
              %v237 = vld [vmem:[%s231 + $0x30] sm:%s224]
              %238 = vst [vmem:[%s232 + $0x30] sm:%s224] %v237
              %v239 = vld [vmem:[%s231 + $0x48] sm:%s224]
              %240 = vst [vmem:[%s232 + $0x48] sm:%s224] %v239
              %v241 = vld [vmem:[%s231 + $0x60] sm:%s224]
              %242 = vst [vmem:[%s232 + $0x60] sm:%s224] %v241
              %v243 = vld [vmem:[%s231 + $0x78] sm:%s224]
              %244 = vst [vmem:[%s232 + $0x78] sm:%s224] %v243
              %v245 = vld [vmem:[%s231 + $0x90] sm:%s224]
              %246 = vst [vmem:[%s232 + $0x90] sm:%s224] %v245
              %v247 = vld [vmem:[%s231 + $0xa8] sm:%s224]
              %248 = vst [vmem:[%s232 + $0xa8] sm:%s224] %v247
              %v249 = vld [vmem:[%s231 + $0xc0] sm:%s224]
              %250 = vst [vmem:[%s232 + $0xc0] sm:%s224] %v249
              %v251 = vld [vmem:[%s231 + $0xd8] sm:%s224]
              %252 = vst [vmem:[%s232 + $0xd8] sm:%s224] %v251
              %v253 = vld [vmem:[%s231 + $0xf0] sm:%s224]
              %254 = vst [vmem:[%s232 + $0xf0] sm:%s224] %v253
              %v255 = vld [vmem:[%s231 + $0x108] sm:%s224]
              %256 = vst [vmem:[%s232 + $0x108] sm:%s224] %v255
            $region53: #{tpu_custom_call.1} parent=47 // loop_footer
              %s230 = sadd.s32 1, %s226
            $region54: #{tpu_custom_call.1} parent=47 // loop_footer_branch
              %225 = sbr.rel target = $region50
            $region55: #{tpu_custom_call.1} parent=47 // loop_exit
              _
          $region48: #{tpu_custom_call.1} parent=39 // pred_fallthru
            _
          // Predicated region
          $region74: #{tpu_custom_call.1} parent=39 // pred_check
            _
          $region75: #{tpu_custom_call.1} parent=39 // pred_check_branch
            %358 = sbr.rel (0) target = $region77
          $region76: #{tpu_custom_call.1} parent=39 // pred_region
            %359 = vsyncadd %s215, 3456
          $region77: #{tpu_custom_call.1} parent=39 // pred_fallthru
            _
        $region40: #{tpu_custom_call.1} parent=35 // pred_fallthru
          _
        %s360 = smul.u32 %s203, 288
        %s361 = scalar_lea.vmem [#allocation2], %s360
        %s362 = scalar_lea.sflag [#allocation3], %s203
        %s363 = smul.u32 12, 18
        %s364 = smul.u32 %s363, 1
        %s365 = sshll.u32 %s364, 4
        %366 = dma.done %s362, %s365
        %s367 = sadd.s32 %s24, 1
        %p368 = scmp.lt.s32.totalorder %s367, 2
        // Predicated region
        $region78: #{tpu_custom_call.1} parent=35 // pred_check
          %p369 = pneg %p368
        $region79: #{tpu_custom_call.1} parent=35 // pred_check_branch
          %371 = sbr.rel (%p369) target = $region81
        $region80: #{tpu_custom_call.1} parent=35 // pred_region
          %s372 = ssub.s32 1, %s203
          %s373 = smul.u32 %s367, 8
          %s374 = smul.u32 %s373, 24
          %s375 = smul.u32 %s23, 480
          %s376 = sadd.s32 %s374, %s375
          %s377 = scalar_lea.vmem %s0, %s376
          %s378 = smul.u32 %s372, 288
          %s379 = scalar_lea.vmem [#allocation2], %s378
          %s380 = scalar_lea.sflag [#allocation3], %s372
          %p382 = scmp.lt.u32.totalorder 18, 8
          %p383 = pneg %p382
          // Predicated region
          $region82: #{tpu_custom_call.1} parent=80 // pred_check
            _
          $region83: #{tpu_custom_call.1} parent=80 // pred_check_branch
            %385 = sbr.rel (%p382) target = $region85
          $region84: #{tpu_custom_call.1} parent=80 // pred_region
            %s422 = sand.u32 18, 7
            %p423 = scmp.eq.s32.totalorder %s422, 0
            %p424 = pneg %p423
            // Predicated region
            $region97: #{tpu_custom_call.1} parent=84 // pred_check
              _
            $region98: #{tpu_custom_call.1} parent=84 // pred_check_branch
              %426 = sbr.rel (%p423) target = $region100
            $region99: #{tpu_custom_call.1} parent=84 // pred_region
              %s427 = sand.u32 18, 7
              %s428 = ssub.s32 18, %s427
              %s429 = scalar_lea.vmem %s377, %s428
              %s430 = ssub.s32 18, %s427
              %s431 = scalar_lea.vmem %s379, %s430 [#allocation2]
              loop: start=0, step=1, limit=1
              $region101: #{tpu_custom_call.1} parent=99 // loop_pre_header
                _
              $region102: #{tpu_custom_call.1} parent=99 // loop_header
                %s433 = sphi 0, %s437
                %p434 = scmp.ge.s32.totalorder %s433, 1
                %s438 = sphi %s377, %s377
                %s439 = sphi %s379, %s379
              $region103: #{tpu_custom_call.1} parent=99 // loop_header_branch
                %436 = sbr.rel (%p434) target = $region107
              $region104: #{tpu_custom_call.1} parent=99 // loop_body
                %v440 = vld [vmem:[%s438] sm:$0xff]
                %441 = vst [vmem:[%s439] sm:$0xff] %v440
                %v442 = vld [vmem:[%s438 + $0x8] sm:$0xff]
                %443 = vst [vmem:[%s439 + $0x8] sm:$0xff] %v442
                %v444 = vld [vmem:[%s438 + $0x18] sm:$0xff]
                %445 = vst [vmem:[%s439 + $0x18] sm:$0xff] %v444
                %v446 = vld [vmem:[%s438 + $0x20] sm:$0xff]
                %447 = vst [vmem:[%s439 + $0x20] sm:$0xff] %v446
                %v448 = vld [vmem:[%s438 + $0x30] sm:$0xff]
                %449 = vst [vmem:[%s439 + $0x30] sm:$0xff] %v448
                %v450 = vld [vmem:[%s438 + $0x38] sm:$0xff]
                %451 = vst [vmem:[%s439 + $0x38] sm:$0xff] %v450
                %v452 = vld [vmem:[%s438 + $0x48] sm:$0xff]
                %453 = vst [vmem:[%s439 + $0x48] sm:$0xff] %v452
                %v454 = vld [vmem:[%s438 + $0x50] sm:$0xff]
                %455 = vst [vmem:[%s439 + $0x50] sm:$0xff] %v454
                %v456 = vld [vmem:[%s438 + $0x60] sm:$0xff]
                %457 = vst [vmem:[%s439 + $0x60] sm:$0xff] %v456
                %v458 = vld [vmem:[%s438 + $0x68] sm:$0xff]
                %459 = vst [vmem:[%s439 + $0x68] sm:$0xff] %v458
                %v460 = vld [vmem:[%s438 + $0x78] sm:$0xff]
                %461 = vst [vmem:[%s439 + $0x78] sm:$0xff] %v460
                %v462 = vld [vmem:[%s438 + $0x80] sm:$0xff]
                %463 = vst [vmem:[%s439 + $0x80] sm:$0xff] %v462
                %v464 = vld [vmem:[%s438 + $0x90] sm:$0xff]
                %465 = vst [vmem:[%s439 + $0x90] sm:$0xff] %v464
                %v466 = vld [vmem:[%s438 + $0x98] sm:$0xff]
                %467 = vst [vmem:[%s439 + $0x98] sm:$0xff] %v466
                %v468 = vld [vmem:[%s438 + $0xa8] sm:$0xff]
                %469 = vst [vmem:[%s439 + $0xa8] sm:$0xff] %v468
                %v470 = vld [vmem:[%s438 + $0xb0] sm:$0xff]
                %471 = vst [vmem:[%s439 + $0xb0] sm:$0xff] %v470
                %v472 = vld [vmem:[%s438 + $0xc0] sm:$0xff]
                %473 = vst [vmem:[%s439 + $0xc0] sm:$0xff] %v472
                %v474 = vld [vmem:[%s438 + $0xc8] sm:$0xff]
                %475 = vst [vmem:[%s439 + $0xc8] sm:$0xff] %v474
                %v476 = vld [vmem:[%s438 + $0xd8] sm:$0xff]
                %477 = vst [vmem:[%s439 + $0xd8] sm:$0xff] %v476
                %v478 = vld [vmem:[%s438 + $0xe0] sm:$0xff]
                %479 = vst [vmem:[%s439 + $0xe0] sm:$0xff] %v478
                %v480 = vld [vmem:[%s438 + $0xf0] sm:$0xff]
                %481 = vst [vmem:[%s439 + $0xf0] sm:$0xff] %v480
                %v482 = vld [vmem:[%s438 + $0xf8] sm:$0xff]
                %483 = vst [vmem:[%s439 + $0xf8] sm:$0xff] %v482
                %v484 = vld [vmem:[%s438 + $0x108] sm:$0xff]
                %485 = vst [vmem:[%s439 + $0x108] sm:$0xff] %v484
                %v486 = vld [vmem:[%s438 + $0x110] sm:$0xff]
                %487 = vst [vmem:[%s439 + $0x110] sm:$0xff] %v486
              $region105: #{tpu_custom_call.1} parent=99 // loop_footer
                %s437 = sadd.s32 1, %s433
              $region106: #{tpu_custom_call.1} parent=99 // loop_footer_branch
                %432 = sbr.rel target = $region102
              $region107: #{tpu_custom_call.1} parent=99 // loop_exit
                _
              %s488 = sshllo.u32 0, %s427
              loop: start=0, step=1, limit=1
              $region108: #{tpu_custom_call.1} parent=99 // loop_pre_header
                _
              $region109: #{tpu_custom_call.1} parent=99 // loop_header
                %s490 = sphi 0, %s494
                %p491 = scmp.ge.s32.totalorder %s490, 1
                %s495 = sphi %s429, %s429
                %s496 = sphi %s431, %s431
              $region110: #{tpu_custom_call.1} parent=99 // loop_header_branch
                %493 = sbr.rel (%p491) target = $region114
              $region111: #{tpu_custom_call.1} parent=99 // loop_body
                %v497 = vld [vmem:[%s495] sm:%s488]
                %498 = vst [vmem:[%s496] sm:%s488] %v497
                %v499 = vld [vmem:[%s495 + $0x18] sm:%s488]
                %500 = vst [vmem:[%s496 + $0x18] sm:%s488] %v499
                %v501 = vld [vmem:[%s495 + $0x30] sm:%s488]
                %502 = vst [vmem:[%s496 + $0x30] sm:%s488] %v501
                %v503 = vld [vmem:[%s495 + $0x48] sm:%s488]
                %504 = vst [vmem:[%s496 + $0x48] sm:%s488] %v503
                %v505 = vld [vmem:[%s495 + $0x60] sm:%s488]
                %506 = vst [vmem:[%s496 + $0x60] sm:%s488] %v505
                %v507 = vld [vmem:[%s495 + $0x78] sm:%s488]
                %508 = vst [vmem:[%s496 + $0x78] sm:%s488] %v507
                %v509 = vld [vmem:[%s495 + $0x90] sm:%s488]
                %510 = vst [vmem:[%s496 + $0x90] sm:%s488] %v509
                %v511 = vld [vmem:[%s495 + $0xa8] sm:%s488]
                %512 = vst [vmem:[%s496 + $0xa8] sm:%s488] %v511
                %v513 = vld [vmem:[%s495 + $0xc0] sm:%s488]
                %514 = vst [vmem:[%s496 + $0xc0] sm:%s488] %v513
                %v515 = vld [vmem:[%s495 + $0xd8] sm:%s488]
                %516 = vst [vmem:[%s496 + $0xd8] sm:%s488] %v515
                %v517 = vld [vmem:[%s495 + $0xf0] sm:%s488]
                %518 = vst [vmem:[%s496 + $0xf0] sm:%s488] %v517
                %v519 = vld [vmem:[%s495 + $0x108] sm:%s488]
                %520 = vst [vmem:[%s496 + $0x108] sm:%s488] %v519
              $region112: #{tpu_custom_call.1} parent=99 // loop_footer
                %s494 = sadd.s32 1, %s490
              $region113: #{tpu_custom_call.1} parent=99 // loop_footer_branch
                %489 = sbr.rel target = $region109
              $region114: #{tpu_custom_call.1} parent=99 // loop_exit
                _
            $region100: #{tpu_custom_call.1} parent=84 // pred_fallthru
              _
          $region85: #{tpu_custom_call.1} parent=80 // pred_fallthru
            _
          // Predicated region
          $region86: #{tpu_custom_call.1} parent=80 // pred_check
            %p386 = pneg %p382
          $region87: #{tpu_custom_call.1} parent=80 // pred_check_branch
            %388 = sbr.rel (%p386) target = $region89
          $region88: #{tpu_custom_call.1} parent=80 // pred_region
            %s389 = sshllo.u32 0, 18
            loop: start=0, step=1, limit=1
            $region90: #{tpu_custom_call.1} parent=88 // loop_pre_header
              _
            $region91: #{tpu_custom_call.1} parent=88 // loop_header
              %s391 = sphi 0, %s395
              %p392 = scmp.ge.s32.totalorder %s391, 1
              %s396 = sphi %s377, %s377
              %s397 = sphi %s379, %s379
            $region92: #{tpu_custom_call.1} parent=88 // loop_header_branch
              %394 = sbr.rel (%p392) target = $region96
            $region93: #{tpu_custom_call.1} parent=88 // loop_body
              %v398 = vld [vmem:[%s396] sm:%s389]
              %399 = vst [vmem:[%s397] sm:%s389] %v398
              %v400 = vld [vmem:[%s396 + $0x18] sm:%s389]
              %401 = vst [vmem:[%s397 + $0x18] sm:%s389] %v400
              %v402 = vld [vmem:[%s396 + $0x30] sm:%s389]
              %403 = vst [vmem:[%s397 + $0x30] sm:%s389] %v402
              %v404 = vld [vmem:[%s396 + $0x48] sm:%s389]
              %405 = vst [vmem:[%s397 + $0x48] sm:%s389] %v404
              %v406 = vld [vmem:[%s396 + $0x60] sm:%s389]
              %407 = vst [vmem:[%s397 + $0x60] sm:%s389] %v406
              %v408 = vld [vmem:[%s396 + $0x78] sm:%s389]
              %409 = vst [vmem:[%s397 + $0x78] sm:%s389] %v408
              %v410 = vld [vmem:[%s396 + $0x90] sm:%s389]
              %411 = vst [vmem:[%s397 + $0x90] sm:%s389] %v410
              %v412 = vld [vmem:[%s396 + $0xa8] sm:%s389]
              %413 = vst [vmem:[%s397 + $0xa8] sm:%s389] %v412
              %v414 = vld [vmem:[%s396 + $0xc0] sm:%s389]
              %415 = vst [vmem:[%s397 + $0xc0] sm:%s389] %v414
              %v416 = vld [vmem:[%s396 + $0xd8] sm:%s389]
              %417 = vst [vmem:[%s397 + $0xd8] sm:%s389] %v416
              %v418 = vld [vmem:[%s396 + $0xf0] sm:%s389]
              %419 = vst [vmem:[%s397 + $0xf0] sm:%s389] %v418
              %v420 = vld [vmem:[%s396 + $0x108] sm:%s389]
              %421 = vst [vmem:[%s397 + $0x108] sm:%s389] %v420
            $region94: #{tpu_custom_call.1} parent=88 // loop_footer
              %s395 = sadd.s32 1, %s391
            $region95: #{tpu_custom_call.1} parent=88 // loop_footer_branch
              %390 = sbr.rel target = $region91
            $region96: #{tpu_custom_call.1} parent=88 // loop_exit
              _
          $region89: #{tpu_custom_call.1} parent=80 // pred_fallthru
            _
          // Predicated region
          $region115: #{tpu_custom_call.1} parent=80 // pred_check
            _
          $region116: #{tpu_custom_call.1} parent=80 // pred_check_branch
            %523 = sbr.rel (0) target = $region118
          $region117: #{tpu_custom_call.1} parent=80 // pred_region
            %524 = vsyncadd %s380, 3456
          $region118: #{tpu_custom_call.1} parent=80 // pred_fallthru
            _
        $region81: #{tpu_custom_call.1} parent=35 // pred_fallthru
          _
        %v525 = vld [vmem:[%s361] sm:$0xff]
        %v526 = vld [vmem:[%s361 + $0x8] sm:$0xff]
        %v527 = vld [vmem:[%s361 + $0x10] sm:$0x3]
        %v528 = vld [vmem:[%s361 + $0x18] sm:$0xff]
        %v529 = vld [vmem:[%s361 + $0x20] sm:$0xff]
        %v530 = vld [vmem:[%s361 + $0x28] sm:$0x3]
        %v531 = vld [vmem:[%s361 + $0x30] sm:$0xff]
        %v532 = vld [vmem:[%s361 + $0x38] sm:$0xff]
        %v533 = vld [vmem:[%s361 + $0x40] sm:$0x3]
        %v534 = vld [vmem:[%s361 + $0x48] sm:$0xff]
        %v535 = vld [vmem:[%s361 + $0x50] sm:$0xff]
        %v536 = vld [vmem:[%s361 + $0x58] sm:$0x3]
        %v537 = vld [vmem:[%s361 + $0x60] sm:$0xff]
        %v538 = vld [vmem:[%s361 + $0x68] sm:$0xff]
        %v539 = vld [vmem:[%s361 + $0x70] sm:$0x3]
        %v540 = vld [vmem:[%s361 + $0x78] sm:$0xff]
        %v541 = vld [vmem:[%s361 + $0x80] sm:$0xff]
        %v542 = vld [vmem:[%s361 + $0x88] sm:$0x3]
        %v543 = vld [vmem:[%s361 + $0x90] sm:$0xff]
        %v544 = vld [vmem:[%s361 + $0x98] sm:$0xff]
        %v545 = vld [vmem:[%s361 + $0xa0] sm:$0x3]
        %v546 = vld [vmem:[%s361 + $0xa8] sm:$0xff]
        %v547 = vld [vmem:[%s361 + $0xb0] sm:$0xff]
        %v548 = vld [vmem:[%s361 + $0xb8] sm:$0x3]
        %v549 = vld [vmem:[%s361 + $0xc0] sm:$0xff]
        %v550 = vld [vmem:[%s361 + $0xc8] sm:$0xff]
        %v551 = vld [vmem:[%s361 + $0xd0] sm:$0x3]
        %v552 = vld [vmem:[%s361 + $0xd8] sm:$0xff]
        %v553 = vld [vmem:[%s361 + $0xe0] sm:$0xff]
        %v554 = vld [vmem:[%s361 + $0xe8] sm:$0x3]
        %v555 = vld [vmem:[%s361 + $0xf0] sm:$0xff]
        %v556 = vld [vmem:[%s361 + $0xf8] sm:$0xff]
        %v557 = vld [vmem:[%s361 + $0x100] sm:$0x3]
        %v558 = vld [vmem:[%s361 + $0x108] sm:$0xff]
        %v559 = vld [vmem:[%s361 + $0x110] sm:$0xff]
        %v560 = vld [vmem:[%s361 + $0x118] sm:$0x3]
        %v561 = vpack.c.bf16 %v526, %v525
        %v562 = vpack.c.bf16 %v527, %v527
        %v563 = vpack.c.bf16 %v529, %v528
        %v564 = vpack.c.bf16 %v530, %v530
        %v565 = vpack.c.bf16 %v532, %v531
        %v566 = vpack.c.bf16 %v533, %v533
        %v567 = vpack.c.bf16 %v535, %v534
        %v568 = vpack.c.bf16 %v536, %v536
        %v569 = vpack.c.bf16 %v538, %v537
        %v570 = vpack.c.bf16 %v539, %v539
        %v571 = vpack.c.bf16 %v541, %v540
        %v572 = vpack.c.bf16 %v542, %v542
        %v573 = vpack.c.bf16 %v544, %v543
        %v574 = vpack.c.bf16 %v545, %v545
        %v575 = vpack.c.bf16 %v547, %v546
        %v576 = vpack.c.bf16 %v548, %v548
        %v577 = vpack.c.bf16 %v550, %v549
        %v578 = vpack.c.bf16 %v551, %v551
        %v579 = vpack.c.bf16 %v553, %v552
        %v580 = vpack.c.bf16 %v554, %v554
        %v581 = vpack.c.bf16 %v556, %v555
        %v582 = vpack.c.bf16 %v557, %v557
        %v583 = vpack.c.bf16 %v559, %v558
        %v584 = vpack.c.bf16 %v560, %v560
        %vm585 = vsmask.f32 7424
        %v587 = vshrl.u32 %v561, 16
        %v589 = vshll.u32 %v561, 16
        %v591 = vrot.slane %v589, 1
        %v592 = vor.u32 %v587, %v591
        %v594 = vshll.u32 %v562, 16
        %v596 = vrot.slane %v594, 1
        %v597 = vsel %vm585, %v592, %v596
        %v599 = vshrl.u32 %v563, 16
        %v601 = vshll.u32 %v563, 16
        %v603 = vrot.slane %v601, 1
        %v604 = vor.u32 %v599, %v603
        %v606 = vshll.u32 %v564, 16
        %v608 = vrot.slane %v606, 1
        %v609 = vsel %vm585, %v604, %v608
        %v611 = vshrl.u32 %v565, 16
        %v613 = vshll.u32 %v565, 16
        %v615 = vrot.slane %v613, 1
        %v616 = vor.u32 %v611, %v615
        %v618 = vshll.u32 %v566, 16
        %v620 = vrot.slane %v618, 1
        %v621 = vsel %vm585, %v616, %v620
        %v623 = vshrl.u32 %v567, 16
        %v625 = vshll.u32 %v567, 16
        %v627 = vrot.slane %v625, 1
        %v628 = vor.u32 %v623, %v627
        %v630 = vshll.u32 %v568, 16
        %v632 = vrot.slane %v630, 1
        %v633 = vsel %vm585, %v628, %v632
        %v635 = vshrl.u32 %v569, 16
        %v637 = vshll.u32 %v569, 16
        %v639 = vrot.slane %v637, 1
        %v640 = vor.u32 %v635, %v639
        %v642 = vshll.u32 %v570, 16
        %v644 = vrot.slane %v642, 1
        %v645 = vsel %vm585, %v640, %v644
        %v647 = vshrl.u32 %v571, 16
        %v649 = vshll.u32 %v571, 16
        %v651 = vrot.slane %v649, 1
        %v652 = vor.u32 %v647, %v651
        %v654 = vshll.u32 %v572, 16
        %v656 = vrot.slane %v654, 1
        %v657 = vsel %vm585, %v652, %v656
        %v659 = vshrl.u32 %v573, 16
        %v661 = vshll.u32 %v573, 16
        %v663 = vrot.slane %v661, 1
        %v664 = vor.u32 %v659, %v663
        %v666 = vshll.u32 %v574, 16
        %v668 = vrot.slane %v666, 1
        %v669 = vsel %vm585, %v664, %v668
        %v671 = vshrl.u32 %v575, 16
        %v673 = vshll.u32 %v575, 16
        %v675 = vrot.slane %v673, 1
        %v676 = vor.u32 %v671, %v675
        %v678 = vshll.u32 %v576, 16
        %v680 = vrot.slane %v678, 1
        %v681 = vsel %vm585, %v676, %v680
        %v683 = vshrl.u32 %v577, 16
        %v685 = vshll.u32 %v577, 16
        %v687 = vrot.slane %v685, 1
        %v688 = vor.u32 %v683, %v687
        %v690 = vshll.u32 %v578, 16
        %v692 = vrot.slane %v690, 1
        %v693 = vsel %vm585, %v688, %v692
        %v695 = vshrl.u32 %v579, 16
        %v697 = vshll.u32 %v579, 16
        %v699 = vrot.slane %v697, 1
        %v700 = vor.u32 %v695, %v699
        %v702 = vshll.u32 %v580, 16
        %v704 = vrot.slane %v702, 1
        %v705 = vsel %vm585, %v700, %v704
        %vm736 = vcmask 1046528
        %v737 = vrot.slane %v561, 1
        %v738 = vrot.slane %v562, 1
        %v739 = vsel %vm736, %v737, %v738
        %v740 = vrot.slane %v563, 1
        %v741 = vrot.slane %v564, 1
        %v742 = vsel %vm736, %v740, %v741
        %v743 = vrot.slane %v565, 1
        %v744 = vrot.slane %v566, 1
        %v745 = vsel %vm736, %v743, %v744
        %v746 = vrot.slane %v567, 1
        %v747 = vrot.slane %v568, 1
        %v748 = vsel %vm736, %v746, %v747
        %v749 = vrot.slane %v569, 1
        %v750 = vrot.slane %v570, 1
        %v751 = vsel %vm736, %v749, %v750
        %v752 = vrot.slane %v571, 1
        %v753 = vrot.slane %v572, 1
        %v754 = vsel %vm736, %v752, %v753
        %v755 = vrot.slane %v573, 1
        %v756 = vrot.slane %v574, 1
        %v757 = vsel %vm736, %v755, %v756
        %v758 = vrot.slane %v575, 1
        %v759 = vrot.slane %v576, 1
        %v760 = vsel %vm736, %v758, %v759
        %v761 = vrot.slane %v577, 1
        %v762 = vrot.slane %v578, 1
        %v763 = vsel %vm736, %v761, %v762
        %v764 = vrot.slane %v579, 1
        %v765 = vrot.slane %v580, 1
        %v766 = vsel %vm736, %v764, %v765
        %v777 = vld [vmem:[%s1] sm:$0xf]
        %v778 = vld [vmem:[%s1 + $0x4] sm:$0xf]
        %v779 = vld [vmem:[%s1 + $0x8] sm:$0xf]
        %v780 = vld [vmem:[%s1 + $0xc] sm:$0xf]
        %v781 = vld [vmem:[%s1 + $0x10] sm:$0xf]
        %v782 = vld [vmem:[%s1 + $0x14] sm:$0xf]
        %v783 = vld [vmem:[%s1 + $0x18] sm:$0xf]
        %v784 = vld [vmem:[%s1 + $0x1c] sm:$0xf]
        %v785 = vld [vmem:[%s1 + $0x20] sm:$0xf]
        %v786 = vld [vmem:[%s1 + $0x24] sm:$0xf]
        %v787 = vld [vmem:[%s1 + $0x28] sm:$0xf]
        %v788 = vld [vmem:[%s1 + $0x2c] sm:$0xf]
        %v789 = vld [vmem:[%s1 + $0x30] sm:$0xf]
        %v790 = vld [vmem:[%s1 + $0x34] sm:$0xf]
        %v791 = vld [vmem:[%s1 + $0x38] sm:$0xf]
        %v792 = vld [vmem:[%s1 + $0x3c] sm:$0xf]
        %v793 = vld [vmem:[%s1 + $0x40] sm:$0xf]
        %v794 = vld [vmem:[%s1 + $0x44] sm:$0xf]
        %v795 = vld [vmem:[%s1 + $0x48] sm:$0xf]
        %v796 = vld [vmem:[%s1 + $0x4c] sm:$0xf]
        %v797 = vld [vmem:[%s1 + $0x50] sm:$0xf]
        %v798 = vld [vmem:[%s1 + $0x54] sm:$0xf]
        %v799 = vld [vmem:[%s1 + $0x58] sm:$0xf]
        %v800 = vld [vmem:[%s1 + $0x5c] sm:$0xf]
        %v801 = vld [vmem:[%s1 + $0x60] sm:$0xf]
        %v802 = vld [vmem:[%s1 + $0x64] sm:$0xf]
        %v803 = vld [vmem:[%s1 + $0x68] sm:$0xf]
        %v804 = vld [vmem:[%s1 + $0x6c] sm:$0xf]
        %v805 = vld [vmem:[%s1 + $0x70] sm:$0xf]
        %v806 = vld [vmem:[%s1 + $0x74] sm:$0xf]
        %v807 = vld [vmem:[%s1 + $0x78] sm:$0xf]
        %v808 = vld [vmem:[%s1 + $0x7c] sm:$0xf]
        %v809 = vld [vmem:[%s1 + $0x80] sm:$0xf]
        %v810 = vld [vmem:[%s1 + $0x84] sm:$0xf]
        %v811 = vld [vmem:[%s1 + $0x88] sm:$0xf]
        %v812 = vld [vmem:[%s1 + $0x8c] sm:$0xf]
        %v813 = vld [vmem:[%s1 + $0x90] sm:$0xf]
        %v814 = vld [vmem:[%s1 + $0x94] sm:$0xf]
        %v815 = vld [vmem:[%s1 + $0x98] sm:$0xf]
        %v816 = vld [vmem:[%s1 + $0x9c] sm:$0xf]
        %v817 = vld [vmem:[%s1 + $0xa0] sm:$0xf]
        %v818 = vld [vmem:[%s1 + $0xa4] sm:$0xf]
        %v819 = vld [vmem:[%s1 + $0xa8] sm:$0xf]
        %v820 = vld [vmem:[%s1 + $0xac] sm:$0xf]
        %v821 = vld [vmem:[%s1 + $0xb0] sm:$0xf]
        %v822 = vld [vmem:[%s1 + $0xb4] sm:$0xf]
        %v823 = vld [vmem:[%s1 + $0xb8] sm:$0xf]
        %v824 = vld [vmem:[%s1 + $0xbc] sm:$0xf]
        %v826 = vshrl.u32 %v581, 16
        %v828 = vshll.u32 %v581, 16
        %v830 = vrot.slane %v828, 1
        %v831 = vor.u32 %v826, %v830
        %v833 = vshll.u32 %v582, 16
        %v835 = vrot.slane %v833, 1
        %v836 = vsel %vm585, %v831, %v835
        %v840 = vrot.slane %v581, 1
        %v841 = vrot.slane %v582, 1
        %v842 = vsel %vm736, %v840, %v841
        %s844 = scalar_lea.vmem %s1, 192
        %v845 = vld [vmem:[%s844] sm:$0xf]
        %v846 = vld [vmem:[%s844 + $0x4] sm:$0xf]
        %v847 = vld [vmem:[%s844 + $0x8] sm:$0xf]
        %v848 = vld [vmem:[%s844 + $0xc] sm:$0xf]
        %v849 = vld [vmem:[%s844 + $0x10] sm:$0xf]
        %v850 = vld [vmem:[%s844 + $0x14] sm:$0xf]
        %v851 = vld [vmem:[%s844 + $0x18] sm:$0xf]
        %v852 = vld [vmem:[%s844 + $0x1c] sm:$0xf]
        %v853 = vld [vmem:[%s844 + $0x20] sm:$0xf]
        %v854 = vld [vmem:[%s844 + $0x24] sm:$0xf]
        %v855 = vld [vmem:[%s844 + $0x28] sm:$0xf]
        %v856 = vld [vmem:[%s844 + $0x2c] sm:$0xf]
        %v857 = vld [vmem:[%s844 + $0x30] sm:$0xf]
        %v858 = vld [vmem:[%s844 + $0x34] sm:$0xf]
        %v859 = vld [vmem:[%s844 + $0x38] sm:$0xf]
        %v860 = vld [vmem:[%s844 + $0x3c] sm:$0xf]
        %v861 = vld [vmem:[%s844 + $0x40] sm:$0xf]
        %v862 = vld [vmem:[%s844 + $0x44] sm:$0xf]
        %v863 = vld [vmem:[%s844 + $0x48] sm:$0xf]
        %v864 = vld [vmem:[%s844 + $0x4c] sm:$0xf]
        %v865 = vld [vmem:[%s844 + $0x50] sm:$0xf]
        %v866 = vld [vmem:[%s844 + $0x54] sm:$0xf]
        %v867 = vld [vmem:[%s844 + $0x58] sm:$0xf]
        %v868 = vld [vmem:[%s844 + $0x5c] sm:$0xf]
        %v869 = vld [vmem:[%s844 + $0x60] sm:$0xf]
        %v870 = vld [vmem:[%s844 + $0x64] sm:$0xf]
        %v871 = vld [vmem:[%s844 + $0x68] sm:$0xf]
        %v872 = vld [vmem:[%s844 + $0x6c] sm:$0xf]
        %v873 = vld [vmem:[%s844 + $0x70] sm:$0xf]
        %v874 = vld [vmem:[%s844 + $0x74] sm:$0xf]
        %v875 = vld [vmem:[%s844 + $0x78] sm:$0xf]
        %v876 = vld [vmem:[%s844 + $0x7c] sm:$0xf]
        %v877 = vld [vmem:[%s844 + $0x80] sm:$0xf]
        %v878 = vld [vmem:[%s844 + $0x84] sm:$0xf]
        %v879 = vld [vmem:[%s844 + $0x88] sm:$0xf]
        %v880 = vld [vmem:[%s844 + $0x8c] sm:$0xf]
        %v881 = vld [vmem:[%s844 + $0x90] sm:$0xf]
        %v882 = vld [vmem:[%s844 + $0x94] sm:$0xf]
        %v883 = vld [vmem:[%s844 + $0x98] sm:$0xf]
        %v884 = vld [vmem:[%s844 + $0x9c] sm:$0xf]
        %v885 = vld [vmem:[%s844 + $0xa0] sm:$0xf]
        %v886 = vld [vmem:[%s844 + $0xa4] sm:$0xf]
        %v887 = vld [vmem:[%s844 + $0xa8] sm:$0xf]
        %v888 = vld [vmem:[%s844 + $0xac] sm:$0xf]
        %v889 = vld [vmem:[%s844 + $0xb0] sm:$0xf]
        %v890 = vld [vmem:[%s844 + $0xb4] sm:$0xf]
        %v891 = vld [vmem:[%s844 + $0xb8] sm:$0xf]
        %v892 = vld [vmem:[%s844 + $0xbc] sm:$0xf]
        %v941 = vunpack.c.l.b16 %v845
        %v942 = vunpack.c.l.b16 %v846
        %v943 = vunpack.c.l.b16 %v847
        %v944 = vunpack.c.l.b16 %v848
        %v945 = vunpack.c.l.b16 %v849
        %v946 = vunpack.c.l.b16 %v850
        %v947 = vunpack.c.l.b16 %v851
        %v948 = vunpack.c.l.b16 %v852
        %v949 = vunpack.c.l.b16 %v853
        %v950 = vunpack.c.l.b16 %v854
        %v951 = vunpack.c.l.b16 %v855
        %v952 = vunpack.c.l.b16 %v856
        %v953 = vunpack.c.l.b16 %v857
        %v954 = vunpack.c.l.b16 %v858
        %v955 = vunpack.c.l.b16 %v859
        %v956 = vunpack.c.l.b16 %v860
        %v957 = vunpack.c.l.b16 %v861
        %v958 = vunpack.c.l.b16 %v862
        %v959 = vunpack.c.l.b16 %v863
        %v960 = vunpack.c.l.b16 %v864
        %v961 = vunpack.c.l.b16 %v865
        %v962 = vunpack.c.l.b16 %v866
        %v963 = vunpack.c.l.b16 %v867
        %v964 = vunpack.c.l.b16 %v868
        %v965 = vunpack.c.l.b16 %v869
        %v966 = vunpack.c.l.b16 %v870
        %v967 = vunpack.c.l.b16 %v871
        %v968 = vunpack.c.l.b16 %v872
        %v969 = vunpack.c.l.b16 %v873
        %v970 = vunpack.c.l.b16 %v874
        %v971 = vunpack.c.l.b16 %v875
        %v972 = vunpack.c.l.b16 %v876
        %v973 = vunpack.c.l.b16 %v877
        %v974 = vunpack.c.l.b16 %v878
        %v975 = vunpack.c.l.b16 %v879
        %v976 = vunpack.c.l.b16 %v880
        %v977 = vunpack.c.l.b16 %v881
        %v978 = vunpack.c.l.b16 %v882
        %v979 = vunpack.c.l.b16 %v883
        %v980 = vunpack.c.l.b16 %v884
        %v981 = vunpack.c.l.b16 %v885
        %v982 = vunpack.c.l.b16 %v886
        %v983 = vunpack.c.l.b16 %v887
        %v984 = vunpack.c.l.b16 %v888
        %v985 = vunpack.c.l.b16 %v889
        %v986 = vunpack.c.l.b16 %v890
        %v987 = vunpack.c.l.b16 %v891
        %v988 = vunpack.c.l.b16 %v892
        %v989 = vpack.c.b16 %v942, %v941
        %v990 = vpack.c.b16 %v944, %v943
        %v991 = vpack.c.b16 %v946, %v945
        %v992 = vpack.c.b16 %v948, %v947
        %v993 = vpack.c.b16 %v950, %v949
        %v994 = vpack.c.b16 %v952, %v951
        %v995 = vpack.c.b16 %v954, %v953
        %v996 = vpack.c.b16 %v956, %v955
        %v997 = vpack.c.b16 %v958, %v957
        %v998 = vpack.c.b16 %v960, %v959
        %v999 = vpack.c.b16 %v962, %v961
        %v1000 = vpack.c.b16 %v964, %v963
        %v1001 = vpack.c.b16 %v966, %v965
        %v1002 = vpack.c.b16 %v968, %v967
        %v1003 = vpack.c.b16 %v970, %v969
        %v1004 = vpack.c.b16 %v972, %v971
        %v1005 = vpack.c.b16 %v974, %v973
        %v1006 = vpack.c.b16 %v976, %v975
        %v1007 = vpack.c.b16 %v978, %v977
        %v1008 = vpack.c.b16 %v980, %v979
        %v1009 = vpack.c.b16 %v982, %v981
        %v1010 = vpack.c.b16 %v984, %v983
        %v1011 = vpack.c.b16 %v986, %v985
        %v1012 = vpack.c.b16 %v988, %v987
        %1037 = vmatprep.subr.bf16.mxu0 0
        %1038 = vmatpush1.bf16.msra.mxu0 %v989
        %1039 = vmatprep.subr.bf16.mxu0 0
        %1040 = vmatpush1.bf16.msra.mxu0 %v990
        %1041 = vmatprep.subr.bf16.mxu0 0
        %1042 = vmatpush1.bf16.msra.mxu0 %v991
        %1043 = vmatprep.subr.bf16.mxu0 0
        %1044 = vmatpush1.bf16.msra.mxu0 %v992
        %1045 = vmatprep.subr.bf16.mxu0 0
        %1046 = vmatpush1.bf16.msra.mxu0 %v993
        %1047 = vmatprep.subr.bf16.mxu0 0
        %1048 = vmatpush1.bf16.msra.mxu0 %v994
        %1049 = vmatprep.subr.bf16.mxu0 0
        %1050 = vmatpush1.bf16.msra.mxu0 %v995
        %1051 = vmatprep.subr.bf16.mxu0 0
        %1052 = vmatpush1.bf16.msra.mxu0 %v996
        %1053 = vmatprep.subr.bf16.mxu0 0
        %1054 = vmatpush1.bf16.msra.mxu0 %v997
        %1055 = vmatprep.subr.bf16.mxu0 0
        %1056 = vmatpush1.bf16.msra.mxu0 %v998
        %1057 = vmatprep.subr.bf16.mxu0 0
        %1058 = vmatpush1.bf16.msra.mxu0 %v999
        %1059 = vmatprep.subr.bf16.mxu0 0
        %1060 = vmatpush1.bf16.msra.mxu0 %v1000
        %1061 = vmatprep.subr.bf16.mxu0 0
        %1062 = vmatpush1.bf16.msra.mxu0 %v1001
        %1063 = vmatprep.subr.bf16.mxu0 0
        %1064 = vmatpush1.bf16.msra.mxu0 %v1002
        %1065 = vmatprep.subr.bf16.mxu0 0
        %1066 = vmatpush1.bf16.msra.mxu0 %v1003
        %1067 = vmatprep.subr.bf16.mxu0 0
        %1068 = vmatpush1.bf16.msra.mxu0 %v1004
        %1069 = vmatprep.mubr.bf16.mxu0 %v609
        %1070 = vmatmul.mubr.bf16.gmra.mrb[0].mxu0 %v563
        %v1071 = vpop.f32.mrb[0].mxu0
        %v1072 = vadd.f32 0.0, %v1071
        %v1073 = vpop.f32.mrb[0].mxu0
        %v1074 = vpop.f32.mrb[0].mxu0
        %v1075 = vadd.f32 0.0, %v1074
        %v1076 = vpop.f32.mrb[0].mxu0
        %1077 = vmatprep.mubr.bf16.mxu0 %v621
        %1078 = vmatmul.mubr.bf16.gmra.mrb[0].mxu0 %v565
        %v1079 = vpop.f32.mrb[0].mxu0
        %v1080 = vadd.f32 0.0, %v1079
        %v1081 = vpop.f32.mrb[0].mxu0
        %v1082 = vpop.f32.mrb[0].mxu0
        %v1083 = vadd.f32 0.0, %v1082
        %v1084 = vpop.f32.mrb[0].mxu0
        %1085 = vmatprep.mubr.bf16.mxu0 %v633
        %1086 = vmatmul.mubr.bf16.gmra.mrb[0].mxu0 %v567
        %v1087 = vpop.f32.mrb[0].mxu0
        %v1088 = vadd.f32 0.0, %v1087
        %v1089 = vpop.f32.mrb[0].mxu0
        %v1090 = vpop.f32.mrb[0].mxu0
        %v1091 = vadd.f32 0.0, %v1090
        %v1092 = vpop.f32.mrb[0].mxu0
        %1093 = vmatprep.mubr.bf16.mxu0 %v645
        %1094 = vmatmul.mubr.bf16.gmra.mrb[0].mxu0 %v569
        %v1095 = vpop.f32.mrb[0].mxu0
        %v1096 = vadd.f32 0.0, %v1095
        %v1097 = vpop.f32.mrb[0].mxu0
        %v1098 = vpop.f32.mrb[0].mxu0
        %v1099 = vadd.f32 0.0, %v1098
        %v1100 = vpop.f32.mrb[0].mxu0
        %1101 = vmatprep.mubr.bf16.mxu0 %v657
        %1102 = vmatmul.mubr.bf16.gmra.mrb[0].mxu0 %v571
        %v1103 = vpop.f32.mrb[0].mxu0
        %v1104 = vadd.f32 0.0, %v1103
        %v1105 = vpop.f32.mrb[0].mxu0
        %v1106 = vpop.f32.mrb[0].mxu0
        %v1107 = vadd.f32 0.0, %v1106
        %v1108 = vpop.f32.mrb[0].mxu0
        %1109 = vmatprep.mubr.bf16.mxu0 %v669
        %1110 = vmatmul.mubr.bf16.gmra.mrb[0].mxu0 %v573
        %v1111 = vpop.f32.mrb[0].mxu0
        %v1112 = vadd.f32 0.0, %v1111
        %v1113 = vpop.f32.mrb[0].mxu0
        %v1114 = vpop.f32.mrb[0].mxu0
        %v1115 = vadd.f32 0.0, %v1114
        %v1116 = vpop.f32.mrb[0].mxu0
        %1117 = vmatprep.mubr.bf16.mxu0 %v681
        %1118 = vmatmul.mubr.bf16.gmra.mrb[0].mxu0 %v575
        %v1119 = vpop.f32.mrb[0].mxu0
        %v1120 = vadd.f32 0.0, %v1119
        %v1121 = vpop.f32.mrb[0].mxu0
        %v1122 = vpop.f32.mrb[0].mxu0
        %v1123 = vadd.f32 0.0, %v1122
        %v1124 = vpop.f32.mrb[0].mxu0
        %1125 = vmatprep.mubr.bf16.mxu0 %v693
        %1126 = vmatmul.mubr.bf16.gmra.mrb[0].mxu0 %v577
        %v1127 = vpop.f32.mrb[0].mxu0
        %v1128 = vadd.f32 0.0, %v1127
        %v1129 = vpop.f32.mrb[0].mxu0
        %v1130 = vpop.f32.mrb[0].mxu0
        %v1131 = vadd.f32 0.0, %v1130
        %v1132 = vpop.f32.mrb[0].mxu0
        %1133 = vmatprep.mubr.bf16.mxu0 %v705
        %1134 = vmatmul.mubr.bf16.gmra.mrb[0].mxu0 %v579
        %v1135 = vpop.f32.mrb[0].mxu0
        %v1136 = vadd.f32 0.0, %v1135
        %v1137 = vpop.f32.mrb[0].mxu0
        %v1138 = vpop.f32.mrb[0].mxu0
        %v1139 = vadd.f32 0.0, %v1138
        %v1140 = vpop.f32.mrb[0].mxu0
        %1141 = vmatprep.mubr.bf16.mxu0 %v836
        %1142 = vmatmul.mubr.bf16.gmra.mrb[0].mxu0 %v581
        %v1143 = vpop.f32.mrb[0].mxu0
        %v1144 = vadd.f32 0.0, %v1143
        %v1145 = vpop.f32.mrb[0].mxu0
        %v1146 = vpop.f32.mrb[0].mxu0
        %v1147 = vadd.f32 0.0, %v1146
        %v1148 = vpop.f32.mrb[0].mxu0
        %1149 = vdwg.mxu0
        %1150 = vmatprep.subr.bf16.mxu0 0
        %1151 = vmatpush1.bf16.msra.mxu0 %v1005
        %1152 = vmatprep.subr.bf16.mxu0 0
        %1153 = vmatpush1.bf16.msra.mxu0 %v1006
        %1154 = vmatprep.subr.bf16.mxu0 0
        %1155 = vmatpush1.bf16.msra.mxu0 %v1007
        %1156 = vmatprep.subr.bf16.mxu0 0
        %1157 = vmatpush1.bf16.msra.mxu0 %v1008
        %1158 = vmatprep.subr.bf16.mxu0 0
        %1159 = vmatpush1.bf16.msra.mxu0 %v1009
        %1160 = vmatprep.subr.bf16.mxu0 0
        %1161 = vmatpush1.bf16.msra.mxu0 %v1010
        %1162 = vmatprep.subr.bf16.mxu0 0
        %1163 = vmatpush1.bf16.msra.mxu0 %v1011
        %1164 = vmatprep.subr.bf16.mxu0 0
        %1165 = vmatpush1.bf16.msra.mxu0 %v1012
        %1166 = vmatprep.subr.bf16.mxu0 0
        %1167 = vmatpush1.bf16.msra.mxu0 0
        %1168 = vmatprep.subr.bf16.mxu0 0
        %1169 = vmatpush1.bf16.msra.mxu0 0
        %1170 = vmatprep.subr.bf16.mxu0 0
        %1171 = vmatpush1.bf16.msra.mxu0 0
        %1172 = vmatprep.subr.bf16.mxu0 0
        %1173 = vmatpush1.bf16.msra.mxu0 0
        %1174 = vmatprep.subr.bf16.mxu0 0
        %1175 = vmatpush1.bf16.msra.mxu0 0
        %1176 = vmatprep.subr.bf16.mxu0 0
        %1177 = vmatpush1.bf16.msra.mxu0 0
        %1178 = vmatprep.subr.bf16.mxu0 0
        %1179 = vmatpush1.bf16.msra.mxu0 0
        %1180 = vmatprep.subr.bf16.mxu0 0
        %1181 = vmatpush1.bf16.msra.mxu0 0
        %1182 = vmatprep.mubr.bf16.mxu0 0
        %1183 = vmatmul.mubr.bf16.gmra.mrb[0].mxu0 %v742
        %v1184 = vpop.f32.mrb[0].mxu0
        %v1185 = vadd.f32 %v1072, %v1184
        %v1186 = vpop.f32.mrb[0].mxu0
        %v1187 = vpop.f32.mrb[0].mxu0
        %v1188 = vadd.f32 %v1075, %v1187
        %v1189 = vpop.f32.mrb[0].mxu0
        %1190 = vmatprep.mubr.bf16.mxu0 0
        %1191 = vmatmul.mubr.bf16.gmra.mrb[0].mxu0 %v745
        %v1192 = vpop.f32.mrb[0].mxu0
        %v1193 = vadd.f32 %v1080, %v1192
        %v1194 = vpop.f32.mrb[0].mxu0
        %v1195 = vpop.f32.mrb[0].mxu0
        %v1196 = vadd.f32 %v1083, %v1195
        %v1197 = vpop.f32.mrb[0].mxu0
        %1198 = vmatprep.mubr.bf16.mxu0 0
        %1199 = vmatmul.mubr.bf16.gmra.mrb[0].mxu0 %v748
        %v1200 = vpop.f32.mrb[0].mxu0
        %v1201 = vadd.f32 %v1088, %v1200
        %v1202 = vpop.f32.mrb[0].mxu0
        %v1203 = vpop.f32.mrb[0].mxu0
        %v1204 = vadd.f32 %v1091, %v1203
        %v1205 = vpop.f32.mrb[0].mxu0
        %1206 = vmatprep.mubr.bf16.mxu0 0
        %1207 = vmatmul.mubr.bf16.gmra.mrb[0].mxu0 %v751
        %v1208 = vpop.f32.mrb[0].mxu0
        %v1209 = vadd.f32 %v1096, %v1208
        %v1210 = vpop.f32.mrb[0].mxu0
        %v1211 = vpop.f32.mrb[0].mxu0
        %v1212 = vadd.f32 %v1099, %v1211
        %v1213 = vpop.f32.mrb[0].mxu0
        %1214 = vmatprep.mubr.bf16.mxu0 0
        %1215 = vmatmul.mubr.bf16.gmra.mrb[0].mxu0 %v754
        %v1216 = vpop.f32.mrb[0].mxu0
        %v1217 = vadd.f32 %v1104, %v1216
        %v1218 = vpop.f32.mrb[0].mxu0
        %v1219 = vpop.f32.mrb[0].mxu0
        %v1220 = vadd.f32 %v1107, %v1219
        %v1221 = vpop.f32.mrb[0].mxu0
        %1222 = vmatprep.mubr.bf16.mxu0 0
        %1223 = vmatmul.mubr.bf16.gmra.mrb[0].mxu0 %v757
        %v1224 = vpop.f32.mrb[0].mxu0
        %v1225 = vadd.f32 %v1112, %v1224
        %v1226 = vpop.f32.mrb[0].mxu0
        %v1227 = vpop.f32.mrb[0].mxu0
        %v1228 = vadd.f32 %v1115, %v1227
        %v1229 = vpop.f32.mrb[0].mxu0
        %1230 = vmatprep.mubr.bf16.mxu0 0
        %1231 = vmatmul.mubr.bf16.gmra.mrb[0].mxu0 %v760
        %v1232 = vpop.f32.mrb[0].mxu0
        %v1233 = vadd.f32 %v1120, %v1232
        %v1234 = vpop.f32.mrb[0].mxu0
        %v1235 = vpop.f32.mrb[0].mxu0
        %v1236 = vadd.f32 %v1123, %v1235
        %v1237 = vpop.f32.mrb[0].mxu0
        %1238 = vmatprep.mubr.bf16.mxu0 0
        %1239 = vmatmul.mubr.bf16.gmra.mrb[0].mxu0 %v763
        %v1240 = vpop.f32.mrb[0].mxu0
        %v1241 = vadd.f32 %v1128, %v1240
        %v1242 = vpop.f32.mrb[0].mxu0
        %v1243 = vpop.f32.mrb[0].mxu0
        %v1244 = vadd.f32 %v1131, %v1243
        %v1245 = vpop.f32.mrb[0].mxu0
        %1246 = vmatprep.mubr.bf16.mxu0 0
        %1247 = vmatmul.mubr.bf16.gmra.mrb[0].mxu0 %v766
        %v1248 = vpop.f32.mrb[0].mxu0
        %v1249 = vadd.f32 %v1136, %v1248
        %v1250 = vpop.f32.mrb[0].mxu0
        %v1251 = vpop.f32.mrb[0].mxu0
        %v1252 = vadd.f32 %v1139, %v1251
        %v1253 = vpop.f32.mrb[0].mxu0
        %1254 = vmatprep.mubr.bf16.mxu0 0
        %1255 = vmatmul.mubr.bf16.gmra.mrb[0].mxu0 %v842
        %v1256 = vpop.f32.mrb[0].mxu0
        %v1257 = vadd.f32 %v1144, %v1256
        %v1258 = vpop.f32.mrb[0].mxu0
        %v1259 = vpop.f32.mrb[0].mxu0
        %v1260 = vadd.f32 %v1147, %v1259
        %v1261 = vpop.f32.mrb[0].mxu0
        %1262 = vdwg.mxu0
        %v1311 = vunpack.c.l.b16 %v777
        %v1312 = vunpack.c.l.b16 %v778
        %v1313 = vunpack.c.l.b16 %v779
        %v1314 = vunpack.c.l.b16 %v780
        %v1315 = vunpack.c.l.b16 %v781
        %v1316 = vunpack.c.l.b16 %v782
        %v1317 = vunpack.c.l.b16 %v783
        %v1318 = vunpack.c.l.b16 %v784
        %v1319 = vunpack.c.l.b16 %v785
        %v1320 = vunpack.c.l.b16 %v786
        %v1321 = vunpack.c.l.b16 %v787
        %v1322 = vunpack.c.l.b16 %v788
        %v1323 = vunpack.c.l.b16 %v789
        %v1324 = vunpack.c.l.b16 %v790
        %v1325 = vunpack.c.l.b16 %v791
        %v1326 = vunpack.c.l.b16 %v792
        %v1327 = vunpack.c.l.b16 %v793
        %v1328 = vunpack.c.l.b16 %v794
        %v1329 = vunpack.c.l.b16 %v795
        %v1330 = vunpack.c.l.b16 %v796
        %v1331 = vunpack.c.l.b16 %v797
        %v1332 = vunpack.c.l.b16 %v798
        %v1333 = vunpack.c.l.b16 %v799
        %v1334 = vunpack.c.l.b16 %v800
        %v1335 = vunpack.c.l.b16 %v801
        %v1336 = vunpack.c.l.b16 %v802
        %v1337 = vunpack.c.l.b16 %v803
        %v1338 = vunpack.c.l.b16 %v804
        %v1339 = vunpack.c.l.b16 %v805
        %v1340 = vunpack.c.l.b16 %v806
        %v1341 = vunpack.c.l.b16 %v807
        %v1342 = vunpack.c.l.b16 %v808
        %v1343 = vunpack.c.l.b16 %v809
        %v1344 = vunpack.c.l.b16 %v810
        %v1345 = vunpack.c.l.b16 %v811
        %v1346 = vunpack.c.l.b16 %v812
        %v1347 = vunpack.c.l.b16 %v813
        %v1348 = vunpack.c.l.b16 %v814
        %v1349 = vunpack.c.l.b16 %v815
        %v1350 = vunpack.c.l.b16 %v816
        %v1351 = vunpack.c.l.b16 %v817
        %v1352 = vunpack.c.l.b16 %v818
        %v1353 = vunpack.c.l.b16 %v819
        %v1354 = vunpack.c.l.b16 %v820
        %v1355 = vunpack.c.l.b16 %v821
        %v1356 = vunpack.c.l.b16 %v822
        %v1357 = vunpack.c.l.b16 %v823
        %v1358 = vunpack.c.l.b16 %v824
        %v1359 = vpack.c.b16 %v1312, %v1311
        %v1360 = vpack.c.b16 %v1314, %v1313
        %v1361 = vpack.c.b16 %v1316, %v1315
        %v1362 = vpack.c.b16 %v1318, %v1317
        %v1363 = vpack.c.b16 %v1320, %v1319
        %v1364 = vpack.c.b16 %v1322, %v1321
        %v1365 = vpack.c.b16 %v1324, %v1323
        %v1366 = vpack.c.b16 %v1326, %v1325
        %v1367 = vpack.c.b16 %v1328, %v1327
        %v1368 = vpack.c.b16 %v1330, %v1329
        %v1369 = vpack.c.b16 %v1332, %v1331
        %v1370 = vpack.c.b16 %v1334, %v1333
        %v1371 = vpack.c.b16 %v1336, %v1335
        %v1372 = vpack.c.b16 %v1338, %v1337
        %v1373 = vpack.c.b16 %v1340, %v1339
        %v1374 = vpack.c.b16 %v1342, %v1341
        %v1375 = vpack.c.b16 %v1344, %v1343
        %v1376 = vpack.c.b16 %v1346, %v1345
        %v1377 = vpack.c.b16 %v1348, %v1347
        %v1378 = vpack.c.b16 %v1350, %v1349
        %v1379 = vpack.c.b16 %v1352, %v1351
        %v1380 = vpack.c.b16 %v1354, %v1353
        %v1381 = vpack.c.b16 %v1356, %v1355
        %v1382 = vpack.c.b16 %v1358, %v1357
        %1407 = vmatprep.subr.bf16.mxu0 0
        %1408 = vmatpush1.bf16.msra.mxu0 %v1359
        %1409 = vmatprep.subr.bf16.mxu0 0
        %1410 = vmatpush1.bf16.msra.mxu0 %v1360
        %1411 = vmatprep.subr.bf16.mxu0 0
        %1412 = vmatpush1.bf16.msra.mxu0 %v1361
        %1413 = vmatprep.subr.bf16.mxu0 0
        %1414 = vmatpush1.bf16.msra.mxu0 %v1362
        %1415 = vmatprep.subr.bf16.mxu0 0
        %1416 = vmatpush1.bf16.msra.mxu0 %v1363
        %1417 = vmatprep.subr.bf16.mxu0 0
        %1418 = vmatpush1.bf16.msra.mxu0 %v1364
        %1419 = vmatprep.subr.bf16.mxu0 0
        %1420 = vmatpush1.bf16.msra.mxu0 %v1365
        %1421 = vmatprep.subr.bf16.mxu0 0
        %1422 = vmatpush1.bf16.msra.mxu0 %v1366
        %1423 = vmatprep.subr.bf16.mxu0 0
        %1424 = vmatpush1.bf16.msra.mxu0 %v1367
        %1425 = vmatprep.subr.bf16.mxu0 0
        %1426 = vmatpush1.bf16.msra.mxu0 %v1368
        %1427 = vmatprep.subr.bf16.mxu0 0
        %1428 = vmatpush1.bf16.msra.mxu0 %v1369
        %1429 = vmatprep.subr.bf16.mxu0 0
        %1430 = vmatpush1.bf16.msra.mxu0 %v1370
        %1431 = vmatprep.subr.bf16.mxu0 0
        %1432 = vmatpush1.bf16.msra.mxu0 %v1371
        %1433 = vmatprep.subr.bf16.mxu0 0
        %1434 = vmatpush1.bf16.msra.mxu0 %v1372
        %1435 = vmatprep.subr.bf16.mxu0 0
        %1436 = vmatpush1.bf16.msra.mxu0 %v1373
        %1437 = vmatprep.subr.bf16.mxu0 0
        %1438 = vmatpush1.bf16.msra.mxu0 %v1374
        %1439 = vmatprep.mubr.bf16.mxu0 %v597
        %1440 = vmatmul.mubr.bf16.gmra.mrb[0].mxu0 %v561
        %v1441 = vpop.f32.mrb[0].mxu0
        %v1442 = vadd.f32 %v1185, %v1441
        %v1443 = vpop.f32.mrb[0].mxu0
        %v1444 = vpop.f32.mrb[0].mxu0
        %v1445 = vadd.f32 %v1188, %v1444
        %v1446 = vpop.f32.mrb[0].mxu0
        %1447 = vmatprep.mubr.bf16.mxu0 %v609
        %1448 = vmatmul.mubr.bf16.gmra.mrb[0].mxu0 %v563
        %v1449 = vpop.f32.mrb[0].mxu0
        %v1450 = vadd.f32 %v1193, %v1449
        %v1451 = vpop.f32.mrb[0].mxu0
        %v1452 = vpop.f32.mrb[0].mxu0
        %v1453 = vadd.f32 %v1196, %v1452
        %v1454 = vpop.f32.mrb[0].mxu0
        %1455 = vmatprep.mubr.bf16.mxu0 %v621
        %1456 = vmatmul.mubr.bf16.gmra.mrb[0].mxu0 %v565
        %v1457 = vpop.f32.mrb[0].mxu0
        %v1458 = vadd.f32 %v1201, %v1457
        %v1459 = vpop.f32.mrb[0].mxu0
        %v1460 = vpop.f32.mrb[0].mxu0
        %v1461 = vadd.f32 %v1204, %v1460
        %v1462 = vpop.f32.mrb[0].mxu0
        %1463 = vmatprep.mubr.bf16.mxu0 %v633
        %1464 = vmatmul.mubr.bf16.gmra.mrb[0].mxu0 %v567
        %v1465 = vpop.f32.mrb[0].mxu0
        %v1466 = vadd.f32 %v1209, %v1465
        %v1467 = vpop.f32.mrb[0].mxu0
        %v1468 = vpop.f32.mrb[0].mxu0
        %v1469 = vadd.f32 %v1212, %v1468
        %v1470 = vpop.f32.mrb[0].mxu0
        %1471 = vmatprep.mubr.bf16.mxu0 %v645
        %1472 = vmatmul.mubr.bf16.gmra.mrb[0].mxu0 %v569
        %v1473 = vpop.f32.mrb[0].mxu0
        %v1474 = vadd.f32 %v1217, %v1473
        %v1475 = vpop.f32.mrb[0].mxu0
        %v1476 = vpop.f32.mrb[0].mxu0
        %v1477 = vadd.f32 %v1220, %v1476
        %v1478 = vpop.f32.mrb[0].mxu0
        %1479 = vmatprep.mubr.bf16.mxu0 %v657
        %1480 = vmatmul.mubr.bf16.gmra.mrb[0].mxu0 %v571
        %v1481 = vpop.f32.mrb[0].mxu0
        %v1482 = vadd.f32 %v1225, %v1481
        %v1483 = vpop.f32.mrb[0].mxu0
        %v1484 = vpop.f32.mrb[0].mxu0
        %v1485 = vadd.f32 %v1228, %v1484
        %v1486 = vpop.f32.mrb[0].mxu0
        %1487 = vmatprep.mubr.bf16.mxu0 %v669
        %1488 = vmatmul.mubr.bf16.gmra.mrb[0].mxu0 %v573
        %v1489 = vpop.f32.mrb[0].mxu0
        %v1490 = vadd.f32 %v1233, %v1489
        %v1491 = vpop.f32.mrb[0].mxu0
        %v1492 = vpop.f32.mrb[0].mxu0
        %v1493 = vadd.f32 %v1236, %v1492
        %v1494 = vpop.f32.mrb[0].mxu0
        %1495 = vmatprep.mubr.bf16.mxu0 %v681
        %1496 = vmatmul.mubr.bf16.gmra.mrb[0].mxu0 %v575
        %v1497 = vpop.f32.mrb[0].mxu0
        %v1498 = vadd.f32 %v1241, %v1497
        %v1499 = vpop.f32.mrb[0].mxu0
        %v1500 = vpop.f32.mrb[0].mxu0
        %v1501 = vadd.f32 %v1244, %v1500
        %v1502 = vpop.f32.mrb[0].mxu0
        %1503 = vmatprep.mubr.bf16.mxu0 %v693
        %1504 = vmatmul.mubr.bf16.gmra.mrb[0].mxu0 %v577
        %v1505 = vpop.f32.mrb[0].mxu0
        %v1506 = vadd.f32 %v1249, %v1505
        %v1507 = vpop.f32.mrb[0].mxu0
        %v1508 = vpop.f32.mrb[0].mxu0
        %v1509 = vadd.f32 %v1252, %v1508
        %v1510 = vpop.f32.mrb[0].mxu0
        %1511 = vmatprep.mubr.bf16.mxu0 %v705
        %1512 = vmatmul.mubr.bf16.gmra.mrb[0].mxu0 %v579
        %v1513 = vpop.f32.mrb[0].mxu0
        %v1514 = vadd.f32 %v1257, %v1513
        %v1515 = vpop.f32.mrb[0].mxu0
        %v1516 = vpop.f32.mrb[0].mxu0
        %v1517 = vadd.f32 %v1260, %v1516
        %v1518 = vpop.f32.mrb[0].mxu0
        %1519 = vdwg.mxu0
        %1520 = vmatprep.subr.bf16.mxu0 0
        %1521 = vmatpush1.bf16.msra.mxu0 %v1375
        %1522 = vmatprep.subr.bf16.mxu0 0
        %1523 = vmatpush1.bf16.msra.mxu0 %v1376
        %1524 = vmatprep.subr.bf16.mxu0 0
        %1525 = vmatpush1.bf16.msra.mxu0 %v1377
        %1526 = vmatprep.subr.bf16.mxu0 0
        %1527 = vmatpush1.bf16.msra.mxu0 %v1378
        %1528 = vmatprep.subr.bf16.mxu0 0
        %1529 = vmatpush1.bf16.msra.mxu0 %v1379
        %1530 = vmatprep.subr.bf16.mxu0 0
        %1531 = vmatpush1.bf16.msra.mxu0 %v1380
        %1532 = vmatprep.subr.bf16.mxu0 0
        %1533 = vmatpush1.bf16.msra.mxu0 %v1381
        %1534 = vmatprep.subr.bf16.mxu0 0
        %1535 = vmatpush1.bf16.msra.mxu0 %v1382
        %1536 = vmatprep.subr.bf16.mxu0 0
        %1537 = vmatpush1.bf16.msra.mxu0 0
        %1538 = vmatprep.subr.bf16.mxu0 0
        %1539 = vmatpush1.bf16.msra.mxu0 0
        %1540 = vmatprep.subr.bf16.mxu0 0
        %1541 = vmatpush1.bf16.msra.mxu0 0
        %1542 = vmatprep.subr.bf16.mxu0 0
        %1543 = vmatpush1.bf16.msra.mxu0 0
        %1544 = vmatprep.subr.bf16.mxu0 0
        %1545 = vmatpush1.bf16.msra.mxu0 0
        %1546 = vmatprep.subr.bf16.mxu0 0
        %1547 = vmatpush1.bf16.msra.mxu0 0
        %1548 = vmatprep.subr.bf16.mxu0 0
        %1549 = vmatpush1.bf16.msra.mxu0 0
        %1550 = vmatprep.subr.bf16.mxu0 0
        %1551 = vmatpush1.bf16.msra.mxu0 0
        %1552 = vmatprep.mubr.bf16.mxu0 0
        %1553 = vmatmul.mubr.bf16.gmra.mrb[0].mxu0 %v739
        %v1554 = vpop.f32.mrb[0].mxu0
        %v1555 = vadd.f32 %v1442, %v1554
        %v1556 = vpop.f32.mrb[0].mxu0
        %v1557 = vpop.f32.mrb[0].mxu0
        %v1558 = vadd.f32 %v1445, %v1557
        %v1559 = vpop.f32.mrb[0].mxu0
        %1560 = vmatprep.mubr.bf16.mxu0 0
        %1561 = vmatmul.mubr.bf16.gmra.mrb[0].mxu0 %v742
        %v1562 = vpop.f32.mrb[0].mxu0
        %v1563 = vadd.f32 %v1450, %v1562
        %v1564 = vpop.f32.mrb[0].mxu0
        %v1565 = vpop.f32.mrb[0].mxu0
        %v1566 = vadd.f32 %v1453, %v1565
        %v1567 = vpop.f32.mrb[0].mxu0
        %1568 = vmatprep.mubr.bf16.mxu0 0
        %1569 = vmatmul.mubr.bf16.gmra.mrb[0].mxu0 %v745
        %v1570 = vpop.f32.mrb[0].mxu0
        %v1571 = vadd.f32 %v1458, %v1570
        %v1572 = vpop.f32.mrb[0].mxu0
        %v1573 = vpop.f32.mrb[0].mxu0
        %v1574 = vadd.f32 %v1461, %v1573
        %v1575 = vpop.f32.mrb[0].mxu0
        %1576 = vmatprep.mubr.bf16.mxu0 0
        %1577 = vmatmul.mubr.bf16.gmra.mrb[0].mxu0 %v748
        %v1578 = vpop.f32.mrb[0].mxu0
        %v1579 = vadd.f32 %v1466, %v1578
        %v1580 = vpop.f32.mrb[0].mxu0
        %v1581 = vpop.f32.mrb[0].mxu0
        %v1582 = vadd.f32 %v1469, %v1581
        %v1583 = vpop.f32.mrb[0].mxu0
        %1584 = vmatprep.mubr.bf16.mxu0 0
        %1585 = vmatmul.mubr.bf16.gmra.mrb[0].mxu0 %v751
        %v1586 = vpop.f32.mrb[0].mxu0
        %v1587 = vadd.f32 %v1474, %v1586
        %v1588 = vpop.f32.mrb[0].mxu0
        %v1589 = vpop.f32.mrb[0].mxu0
        %v1590 = vadd.f32 %v1477, %v1589
        %v1591 = vpop.f32.mrb[0].mxu0
        %1592 = vmatprep.mubr.bf16.mxu0 0
        %1593 = vmatmul.mubr.bf16.gmra.mrb[0].mxu0 %v754
        %v1594 = vpop.f32.mrb[0].mxu0
        %v1595 = vadd.f32 %v1482, %v1594
        %v1596 = vpop.f32.mrb[0].mxu0
        %v1597 = vpop.f32.mrb[0].mxu0
        %v1598 = vadd.f32 %v1485, %v1597
        %v1599 = vpop.f32.mrb[0].mxu0
        %1600 = vmatprep.mubr.bf16.mxu0 0
        %1601 = vmatmul.mubr.bf16.gmra.mrb[0].mxu0 %v757
        %v1602 = vpop.f32.mrb[0].mxu0
        %v1603 = vadd.f32 %v1490, %v1602
        %v1604 = vpop.f32.mrb[0].mxu0
        %v1605 = vpop.f32.mrb[0].mxu0
        %v1606 = vadd.f32 %v1493, %v1605
        %v1607 = vpop.f32.mrb[0].mxu0
        %1608 = vmatprep.mubr.bf16.mxu0 0
        %1609 = vmatmul.mubr.bf16.gmra.mrb[0].mxu0 %v760
        %v1610 = vpop.f32.mrb[0].mxu0
        %v1611 = vadd.f32 %v1498, %v1610
        %v1612 = vpop.f32.mrb[0].mxu0
        %v1613 = vpop.f32.mrb[0].mxu0
        %v1614 = vadd.f32 %v1501, %v1613
        %v1615 = vpop.f32.mrb[0].mxu0
        %1616 = vmatprep.mubr.bf16.mxu0 0
        %1617 = vmatmul.mubr.bf16.gmra.mrb[0].mxu0 %v763
        %v1618 = vpop.f32.mrb[0].mxu0
        %v1619 = vadd.f32 %v1506, %v1618
        %v1620 = vpop.f32.mrb[0].mxu0
        %v1621 = vpop.f32.mrb[0].mxu0
        %v1622 = vadd.f32 %v1509, %v1621
        %v1623 = vpop.f32.mrb[0].mxu0
        %1624 = vmatprep.mubr.bf16.mxu0 0
        %1625 = vmatmul.mubr.bf16.gmra.mrb[0].mxu0 %v766
        %v1626 = vpop.f32.mrb[0].mxu0
        %v1627 = vadd.f32 %v1514, %v1626
        %v1628 = vpop.f32.mrb[0].mxu0
        %v1629 = vpop.f32.mrb[0].mxu0
        %v1630 = vadd.f32 %v1517, %v1629
        %v1631 = vpop.f32.mrb[0].mxu0
        %1632 = vdwg.mxu0
        %v1634 = vshrl.u32 %v583, 16
        %v1636 = vshll.u32 %v583, 16
        %v1638 = vrot.slane %v1636, 1
        %v1639 = vor.u32 %v1634, %v1638
        %v1641 = vshll.u32 %v584, 16
        %v1643 = vrot.slane %v1641, 1
        %v1644 = vsel %vm585, %v1639, %v1643
        %v1648 = vrot.slane %v583, 1
        %v1649 = vrot.slane %v584, 1
        %v1650 = vsel %vm736, %v1648, %v1649
        %s1652 = scalar_lea.vmem %s1, 384
        %v1653 = vld [vmem:[%s1652] sm:$0xf]
        %v1654 = vld [vmem:[%s1652 + $0x4] sm:$0xf]
        %v1655 = vld [vmem:[%s1652 + $0x8] sm:$0xf]
        %v1656 = vld [vmem:[%s1652 + $0xc] sm:$0xf]
        %v1657 = vld [vmem:[%s1652 + $0x10] sm:$0xf]
        %v1658 = vld [vmem:[%s1652 + $0x14] sm:$0xf]
        %v1659 = vld [vmem:[%s1652 + $0x18] sm:$0xf]
        %v1660 = vld [vmem:[%s1652 + $0x1c] sm:$0xf]
        %v1661 = vld [vmem:[%s1652 + $0x20] sm:$0xf]
        %v1662 = vld [vmem:[%s1652 + $0x24] sm:$0xf]
        %v1663 = vld [vmem:[%s1652 + $0x28] sm:$0xf]
        %v1664 = vld [vmem:[%s1652 + $0x2c] sm:$0xf]
        %v1665 = vld [vmem:[%s1652 + $0x30] sm:$0xf]
        %v1666 = vld [vmem:[%s1652 + $0x34] sm:$0xf]
        %v1667 = vld [vmem:[%s1652 + $0x38] sm:$0xf]
        %v1668 = vld [vmem:[%s1652 + $0x3c] sm:$0xf]
        %v1669 = vld [vmem:[%s1652 + $0x40] sm:$0xf]
        %v1670 = vld [vmem:[%s1652 + $0x44] sm:$0xf]
        %v1671 = vld [vmem:[%s1652 + $0x48] sm:$0xf]
        %v1672 = vld [vmem:[%s1652 + $0x4c] sm:$0xf]
        %v1673 = vld [vmem:[%s1652 + $0x50] sm:$0xf]
        %v1674 = vld [vmem:[%s1652 + $0x54] sm:$0xf]
        %v1675 = vld [vmem:[%s1652 + $0x58] sm:$0xf]
        %v1676 = vld [vmem:[%s1652 + $0x5c] sm:$0xf]
        %v1677 = vld [vmem:[%s1652 + $0x60] sm:$0xf]
        %v1678 = vld [vmem:[%s1652 + $0x64] sm:$0xf]
        %v1679 = vld [vmem:[%s1652 + $0x68] sm:$0xf]
        %v1680 = vld [vmem:[%s1652 + $0x6c] sm:$0xf]
        %v1681 = vld [vmem:[%s1652 + $0x70] sm:$0xf]
        %v1682 = vld [vmem:[%s1652 + $0x74] sm:$0xf]
        %v1683 = vld [vmem:[%s1652 + $0x78] sm:$0xf]
        %v1684 = vld [vmem:[%s1652 + $0x7c] sm:$0xf]
        %v1685 = vld [vmem:[%s1652 + $0x80] sm:$0xf]
        %v1686 = vld [vmem:[%s1652 + $0x84] sm:$0xf]
        %v1687 = vld [vmem:[%s1652 + $0x88] sm:$0xf]
        %v1688 = vld [vmem:[%s1652 + $0x8c] sm:$0xf]
        %v1689 = vld [vmem:[%s1652 + $0x90] sm:$0xf]
        %v1690 = vld [vmem:[%s1652 + $0x94] sm:$0xf]
        %v1691 = vld [vmem:[%s1652 + $0x98] sm:$0xf]
        %v1692 = vld [vmem:[%s1652 + $0x9c] sm:$0xf]
        %v1693 = vld [vmem:[%s1652 + $0xa0] sm:$0xf]
        %v1694 = vld [vmem:[%s1652 + $0xa4] sm:$0xf]
        %v1695 = vld [vmem:[%s1652 + $0xa8] sm:$0xf]
        %v1696 = vld [vmem:[%s1652 + $0xac] sm:$0xf]
        %v1697 = vld [vmem:[%s1652 + $0xb0] sm:$0xf]
        %v1698 = vld [vmem:[%s1652 + $0xb4] sm:$0xf]
        %v1699 = vld [vmem:[%s1652 + $0xb8] sm:$0xf]
        %v1700 = vld [vmem:[%s1652 + $0xbc] sm:$0xf]
        %v1749 = vunpack.c.l.b16 %v1653
        %v1750 = vunpack.c.l.b16 %v1654
        %v1751 = vunpack.c.l.b16 %v1655
        %v1752 = vunpack.c.l.b16 %v1656
        %v1753 = vunpack.c.l.b16 %v1657
        %v1754 = vunpack.c.l.b16 %v1658
        %v1755 = vunpack.c.l.b16 %v1659
        %v1756 = vunpack.c.l.b16 %v1660
        %v1757 = vunpack.c.l.b16 %v1661
        %v1758 = vunpack.c.l.b16 %v1662
        %v1759 = vunpack.c.l.b16 %v1663
        %v1760 = vunpack.c.l.b16 %v1664
        %v1761 = vunpack.c.l.b16 %v1665
        %v1762 = vunpack.c.l.b16 %v1666
        %v1763 = vunpack.c.l.b16 %v1667
        %v1764 = vunpack.c.l.b16 %v1668
        %v1765 = vunpack.c.l.b16 %v1669
        %v1766 = vunpack.c.l.b16 %v1670
        %v1767 = vunpack.c.l.b16 %v1671
        %v1768 = vunpack.c.l.b16 %v1672
        %v1769 = vunpack.c.l.b16 %v1673
        %v1770 = vunpack.c.l.b16 %v1674
        %v1771 = vunpack.c.l.b16 %v1675
        %v1772 = vunpack.c.l.b16 %v1676
        %v1773 = vunpack.c.l.b16 %v1677
        %v1774 = vunpack.c.l.b16 %v1678
        %v1775 = vunpack.c.l.b16 %v1679
        %v1776 = vunpack.c.l.b16 %v1680
        %v1777 = vunpack.c.l.b16 %v1681
        %v1778 = vunpack.c.l.b16 %v1682
        %v1779 = vunpack.c.l.b16 %v1683
        %v1780 = vunpack.c.l.b16 %v1684
        %v1781 = vunpack.c.l.b16 %v1685
        %v1782 = vunpack.c.l.b16 %v1686
        %v1783 = vunpack.c.l.b16 %v1687
        %v1784 = vunpack.c.l.b16 %v1688
        %v1785 = vunpack.c.l.b16 %v1689
        %v1786 = vunpack.c.l.b16 %v1690
        %v1787 = vunpack.c.l.b16 %v1691
        %v1788 = vunpack.c.l.b16 %v1692
        %v1789 = vunpack.c.l.b16 %v1693
        %v1790 = vunpack.c.l.b16 %v1694
        %v1791 = vunpack.c.l.b16 %v1695
        %v1792 = vunpack.c.l.b16 %v1696
        %v1793 = vunpack.c.l.b16 %v1697
        %v1794 = vunpack.c.l.b16 %v1698
        %v1795 = vunpack.c.l.b16 %v1699
        %v1796 = vunpack.c.l.b16 %v1700
        %v1797 = vpack.c.b16 %v1750, %v1749
        %v1798 = vpack.c.b16 %v1752, %v1751
        %v1799 = vpack.c.b16 %v1754, %v1753
        %v1800 = vpack.c.b16 %v1756, %v1755
        %v1801 = vpack.c.b16 %v1758, %v1757
        %v1802 = vpack.c.b16 %v1760, %v1759
        %v1803 = vpack.c.b16 %v1762, %v1761
        %v1804 = vpack.c.b16 %v1764, %v1763
        %v1805 = vpack.c.b16 %v1766, %v1765
        %v1806 = vpack.c.b16 %v1768, %v1767
        %v1807 = vpack.c.b16 %v1770, %v1769
        %v1808 = vpack.c.b16 %v1772, %v1771
        %v1809 = vpack.c.b16 %v1774, %v1773
        %v1810 = vpack.c.b16 %v1776, %v1775
        %v1811 = vpack.c.b16 %v1778, %v1777
        %v1812 = vpack.c.b16 %v1780, %v1779
        %v1813 = vpack.c.b16 %v1782, %v1781
        %v1814 = vpack.c.b16 %v1784, %v1783
        %v1815 = vpack.c.b16 %v1786, %v1785
        %v1816 = vpack.c.b16 %v1788, %v1787
        %v1817 = vpack.c.b16 %v1790, %v1789
        %v1818 = vpack.c.b16 %v1792, %v1791
        %v1819 = vpack.c.b16 %v1794, %v1793
        %v1820 = vpack.c.b16 %v1796, %v1795
        %1845 = vmatprep.subr.bf16.mxu0 0
        %1846 = vmatpush1.bf16.msra.mxu0 %v1797
        %1847 = vmatprep.subr.bf16.mxu0 0
        %1848 = vmatpush1.bf16.msra.mxu0 %v1798
        %1849 = vmatprep.subr.bf16.mxu0 0
        %1850 = vmatpush1.bf16.msra.mxu0 %v1799
        %1851 = vmatprep.subr.bf16.mxu0 0
        %1852 = vmatpush1.bf16.msra.mxu0 %v1800
        %1853 = vmatprep.subr.bf16.mxu0 0
        %1854 = vmatpush1.bf16.msra.mxu0 %v1801
        %1855 = vmatprep.subr.bf16.mxu0 0
        %1856 = vmatpush1.bf16.msra.mxu0 %v1802
        %1857 = vmatprep.subr.bf16.mxu0 0
        %1858 = vmatpush1.bf16.msra.mxu0 %v1803
        %1859 = vmatprep.subr.bf16.mxu0 0
        %1860 = vmatpush1.bf16.msra.mxu0 %v1804
        %1861 = vmatprep.subr.bf16.mxu0 0
        %1862 = vmatpush1.bf16.msra.mxu0 %v1805
        %1863 = vmatprep.subr.bf16.mxu0 0
        %1864 = vmatpush1.bf16.msra.mxu0 %v1806
        %1865 = vmatprep.subr.bf16.mxu0 0
        %1866 = vmatpush1.bf16.msra.mxu0 %v1807
        %1867 = vmatprep.subr.bf16.mxu0 0
        %1868 = vmatpush1.bf16.msra.mxu0 %v1808
        %1869 = vmatprep.subr.bf16.mxu0 0
        %1870 = vmatpush1.bf16.msra.mxu0 %v1809
        %1871 = vmatprep.subr.bf16.mxu0 0
        %1872 = vmatpush1.bf16.msra.mxu0 %v1810
        %1873 = vmatprep.subr.bf16.mxu0 0
        %1874 = vmatpush1.bf16.msra.mxu0 %v1811
        %1875 = vmatprep.subr.bf16.mxu0 0
        %1876 = vmatpush1.bf16.msra.mxu0 %v1812
        %1877 = vmatprep.mubr.bf16.mxu0 %v621
        %1878 = vmatmul.mubr.bf16.gmra.mrb[0].mxu0 %v565
        %v1879 = vpop.f32.mrb[0].mxu0
        %v1880 = vadd.f32 0.0, %v1879
        %v1881 = vpop.f32.mrb[0].mxu0
        %v1882 = vpop.f32.mrb[0].mxu0
        %v1883 = vadd.f32 0.0, %v1882
        %v1884 = vpop.f32.mrb[0].mxu0
        %1885 = vmatprep.mubr.bf16.mxu0 %v633
        %1886 = vmatmul.mubr.bf16.gmra.mrb[0].mxu0 %v567
        %v1887 = vpop.f32.mrb[0].mxu0
        %v1888 = vadd.f32 0.0, %v1887
        %v1889 = vpop.f32.mrb[0].mxu0
        %v1890 = vpop.f32.mrb[0].mxu0
        %v1891 = vadd.f32 0.0, %v1890
        %v1892 = vpop.f32.mrb[0].mxu0
        %1893 = vmatprep.mubr.bf16.mxu0 %v645
        %1894 = vmatmul.mubr.bf16.gmra.mrb[0].mxu0 %v569
        %v1895 = vpop.f32.mrb[0].mxu0
        %v1896 = vadd.f32 0.0, %v1895
        %v1897 = vpop.f32.mrb[0].mxu0
        %v1898 = vpop.f32.mrb[0].mxu0
        %v1899 = vadd.f32 0.0, %v1898
        %v1900 = vpop.f32.mrb[0].mxu0
        %1901 = vmatprep.mubr.bf16.mxu0 %v657
        %1902 = vmatmul.mubr.bf16.gmra.mrb[0].mxu0 %v571
        %v1903 = vpop.f32.mrb[0].mxu0
        %v1904 = vadd.f32 0.0, %v1903
        %v1905 = vpop.f32.mrb[0].mxu0
        %v1906 = vpop.f32.mrb[0].mxu0
        %v1907 = vadd.f32 0.0, %v1906
        %v1908 = vpop.f32.mrb[0].mxu0
        %1909 = vmatprep.mubr.bf16.mxu0 %v669
        %1910 = vmatmul.mubr.bf16.gmra.mrb[0].mxu0 %v573
        %v1911 = vpop.f32.mrb[0].mxu0
        %v1912 = vadd.f32 0.0, %v1911
        %v1913 = vpop.f32.mrb[0].mxu0
        %v1914 = vpop.f32.mrb[0].mxu0
        %v1915 = vadd.f32 0.0, %v1914
        %v1916 = vpop.f32.mrb[0].mxu0
        %1917 = vmatprep.mubr.bf16.mxu0 %v681
        %1918 = vmatmul.mubr.bf16.gmra.mrb[0].mxu0 %v575
        %v1919 = vpop.f32.mrb[0].mxu0
        %v1920 = vadd.f32 0.0, %v1919
        %v1921 = vpop.f32.mrb[0].mxu0
        %v1922 = vpop.f32.mrb[0].mxu0
        %v1923 = vadd.f32 0.0, %v1922
        %v1924 = vpop.f32.mrb[0].mxu0
        %1925 = vmatprep.mubr.bf16.mxu0 %v693
        %1926 = vmatmul.mubr.bf16.gmra.mrb[0].mxu0 %v577
        %v1927 = vpop.f32.mrb[0].mxu0
        %v1928 = vadd.f32 0.0, %v1927
        %v1929 = vpop.f32.mrb[0].mxu0
        %v1930 = vpop.f32.mrb[0].mxu0
        %v1931 = vadd.f32 0.0, %v1930
        %v1932 = vpop.f32.mrb[0].mxu0
        %1933 = vmatprep.mubr.bf16.mxu0 %v705
        %1934 = vmatmul.mubr.bf16.gmra.mrb[0].mxu0 %v579
        %v1935 = vpop.f32.mrb[0].mxu0
        %v1936 = vadd.f32 0.0, %v1935
        %v1937 = vpop.f32.mrb[0].mxu0
        %v1938 = vpop.f32.mrb[0].mxu0
        %v1939 = vadd.f32 0.0, %v1938
        %v1940 = vpop.f32.mrb[0].mxu0
        %1941 = vmatprep.mubr.bf16.mxu0 %v836
        %1942 = vmatmul.mubr.bf16.gmra.mrb[0].mxu0 %v581
        %v1943 = vpop.f32.mrb[0].mxu0
        %v1944 = vadd.f32 0.0, %v1943
        %v1945 = vpop.f32.mrb[0].mxu0
        %v1946 = vpop.f32.mrb[0].mxu0
        %v1947 = vadd.f32 0.0, %v1946
        %v1948 = vpop.f32.mrb[0].mxu0
        %1949 = vmatprep.mubr.bf16.mxu0 %v1644
        %1950 = vmatmul.mubr.bf16.gmra.mrb[0].mxu0 %v583
        %v1951 = vpop.f32.mrb[0].mxu0
        %v1952 = vadd.f32 0.0, %v1951
        %v1953 = vpop.f32.mrb[0].mxu0
        %v1954 = vpop.f32.mrb[0].mxu0
        %v1955 = vadd.f32 0.0, %v1954
        %v1956 = vpop.f32.mrb[0].mxu0
        %1957 = vdwg.mxu0
        %1958 = vmatprep.subr.bf16.mxu0 0
        %1959 = vmatpush1.bf16.msra.mxu0 %v1813
        %1960 = vmatprep.subr.bf16.mxu0 0
        %1961 = vmatpush1.bf16.msra.mxu0 %v1814
        %1962 = vmatprep.subr.bf16.mxu0 0
        %1963 = vmatpush1.bf16.msra.mxu0 %v1815
        %1964 = vmatprep.subr.bf16.mxu0 0
        %1965 = vmatpush1.bf16.msra.mxu0 %v1816
        %1966 = vmatprep.subr.bf16.mxu0 0
        %1967 = vmatpush1.bf16.msra.mxu0 %v1817
        %1968 = vmatprep.subr.bf16.mxu0 0
        %1969 = vmatpush1.bf16.msra.mxu0 %v1818
        %1970 = vmatprep.subr.bf16.mxu0 0
        %1971 = vmatpush1.bf16.msra.mxu0 %v1819
        %1972 = vmatprep.subr.bf16.mxu0 0
        %1973 = vmatpush1.bf16.msra.mxu0 %v1820
        %1974 = vmatprep.subr.bf16.mxu0 0
        %1975 = vmatpush1.bf16.msra.mxu0 0
        %1976 = vmatprep.subr.bf16.mxu0 0
        %1977 = vmatpush1.bf16.msra.mxu0 0
        %1978 = vmatprep.subr.bf16.mxu0 0
        %1979 = vmatpush1.bf16.msra.mxu0 0
        %1980 = vmatprep.subr.bf16.mxu0 0
        %1981 = vmatpush1.bf16.msra.mxu0 0
        %1982 = vmatprep.subr.bf16.mxu0 0
        %1983 = vmatpush1.bf16.msra.mxu0 0
        %1984 = vmatprep.subr.bf16.mxu0 0
        %1985 = vmatpush1.bf16.msra.mxu0 0
        %1986 = vmatprep.subr.bf16.mxu0 0
        %1987 = vmatpush1.bf16.msra.mxu0 0
        %1988 = vmatprep.subr.bf16.mxu0 0
        %1989 = vmatpush1.bf16.msra.mxu0 0
        %1990 = vmatprep.mubr.bf16.mxu0 0
        %1991 = vmatmul.mubr.bf16.gmra.mrb[0].mxu0 %v745
        %v1992 = vpop.f32.mrb[0].mxu0
        %v1993 = vadd.f32 %v1880, %v1992
        %v1994 = vpop.f32.mrb[0].mxu0
        %v1995 = vpop.f32.mrb[0].mxu0
        %v1996 = vadd.f32 %v1883, %v1995
        %v1997 = vpop.f32.mrb[0].mxu0
        %1998 = vmatprep.mubr.bf16.mxu0 0
        %1999 = vmatmul.mubr.bf16.gmra.mrb[0].mxu0 %v748
        %v2000 = vpop.f32.mrb[0].mxu0
        %v2001 = vadd.f32 %v1888, %v2000
        %v2002 = vpop.f32.mrb[0].mxu0
        %v2003 = vpop.f32.mrb[0].mxu0
        %v2004 = vadd.f32 %v1891, %v2003
        %v2005 = vpop.f32.mrb[0].mxu0
        %2006 = vmatprep.mubr.bf16.mxu0 0
        %2007 = vmatmul.mubr.bf16.gmra.mrb[0].mxu0 %v751
        %v2008 = vpop.f32.mrb[0].mxu0
        %v2009 = vadd.f32 %v1896, %v2008
        %v2010 = vpop.f32.mrb[0].mxu0
        %v2011 = vpop.f32.mrb[0].mxu0
        %v2012 = vadd.f32 %v1899, %v2011
        %v2013 = vpop.f32.mrb[0].mxu0
        %2014 = vmatprep.mubr.bf16.mxu0 0
        %2015 = vmatmul.mubr.bf16.gmra.mrb[0].mxu0 %v754
        %v2016 = vpop.f32.mrb[0].mxu0
        %v2017 = vadd.f32 %v1904, %v2016
        %v2018 = vpop.f32.mrb[0].mxu0
        %v2019 = vpop.f32.mrb[0].mxu0
        %v2020 = vadd.f32 %v1907, %v2019
        %v2021 = vpop.f32.mrb[0].mxu0
        %2022 = vmatprep.mubr.bf16.mxu0 0
        %2023 = vmatmul.mubr.bf16.gmra.mrb[0].mxu0 %v757
        %v2024 = vpop.f32.mrb[0].mxu0
        %v2025 = vadd.f32 %v1912, %v2024
        %v2026 = vpop.f32.mrb[0].mxu0
        %v2027 = vpop.f32.mrb[0].mxu0
        %v2028 = vadd.f32 %v1915, %v2027
        %v2029 = vpop.f32.mrb[0].mxu0
        %2030 = vmatprep.mubr.bf16.mxu0 0
        %2031 = vmatmul.mubr.bf16.gmra.mrb[0].mxu0 %v760
        %v2032 = vpop.f32.mrb[0].mxu0
        %v2033 = vadd.f32 %v1920, %v2032
        %v2034 = vpop.f32.mrb[0].mxu0
        %v2035 = vpop.f32.mrb[0].mxu0
        %v2036 = vadd.f32 %v1923, %v2035
        %v2037 = vpop.f32.mrb[0].mxu0
        %2038 = vmatprep.mubr.bf16.mxu0 0
        %2039 = vmatmul.mubr.bf16.gmra.mrb[0].mxu0 %v763
        %v2040 = vpop.f32.mrb[0].mxu0
        %v2041 = vadd.f32 %v1928, %v2040
        %v2042 = vpop.f32.mrb[0].mxu0
        %v2043 = vpop.f32.mrb[0].mxu0
        %v2044 = vadd.f32 %v1931, %v2043
        %v2045 = vpop.f32.mrb[0].mxu0
        %2046 = vmatprep.mubr.bf16.mxu0 0
        %2047 = vmatmul.mubr.bf16.gmra.mrb[0].mxu0 %v766
        %v2048 = vpop.f32.mrb[0].mxu0
        %v2049 = vadd.f32 %v1936, %v2048
        %v2050 = vpop.f32.mrb[0].mxu0
        %v2051 = vpop.f32.mrb[0].mxu0
        %v2052 = vadd.f32 %v1939, %v2051
        %v2053 = vpop.f32.mrb[0].mxu0
        %2054 = vmatprep.mubr.bf16.mxu0 0
        %2055 = vmatmul.mubr.bf16.gmra.mrb[0].mxu0 %v842
        %v2056 = vpop.f32.mrb[0].mxu0
        %v2057 = vadd.f32 %v1944, %v2056
        %v2058 = vpop.f32.mrb[0].mxu0
        %v2059 = vpop.f32.mrb[0].mxu0
        %v2060 = vadd.f32 %v1947, %v2059
        %v2061 = vpop.f32.mrb[0].mxu0
        %2062 = vmatprep.mubr.bf16.mxu0 0
        %2063 = vmatmul.mubr.bf16.gmra.mrb[0].mxu0 %v1650
        %v2064 = vpop.f32.mrb[0].mxu0
        %v2065 = vadd.f32 %v1952, %v2064
        %v2066 = vpop.f32.mrb[0].mxu0
        %v2067 = vpop.f32.mrb[0].mxu0
        %v2068 = vadd.f32 %v1955, %v2067
        %v2069 = vpop.f32.mrb[0].mxu0
        %2070 = vdwg.mxu0
        %v2071 = vadd.f32 %v1555, %v1993
        %v2072 = vadd.f32 %v1558, %v1996
        %v2073 = vadd.f32 %v1563, %v2001
        %v2074 = vadd.f32 %v1566, %v2004
        %v2075 = vadd.f32 %v1571, %v2009
        %v2076 = vadd.f32 %v1574, %v2012
        %v2077 = vadd.f32 %v1579, %v2017
        %v2078 = vadd.f32 %v1582, %v2020
        %v2079 = vadd.f32 %v1587, %v2025
        %v2080 = vadd.f32 %v1590, %v2028
        %v2081 = vadd.f32 %v1595, %v2033
        %v2082 = vadd.f32 %v1598, %v2036
        %v2083 = vadd.f32 %v1603, %v2041
        %v2084 = vadd.f32 %v1606, %v2044
        %v2085 = vadd.f32 %v1611, %v2049
        %v2086 = vadd.f32 %v1614, %v2052
        %v2087 = vadd.f32 %v1619, %v2057
        %v2088 = vadd.f32 %v1622, %v2060
        %v2089 = vadd.f32 %v1627, %v2065
        %v2090 = vadd.f32 %v1630, %v2068
        %v2091 = vld [vmem:[%s3] sm:$0x1]
        %v2093 = vlaneseq
        %v2094 = vshrl.u32 %v2093, 7
        %v2095 = vsub.s32 0, %v2094
        %v2096 = vrot.slane %v2091, %v2095
        %v2098 = vadd.f32 %v2071, %v2096
        %v2099 = vadd.f32 %v2072, %v2096
        %v2100 = vadd.f32 %v2073, %v2096
        %v2101 = vadd.f32 %v2074, %v2096
        %v2102 = vadd.f32 %v2075, %v2096
        %v2103 = vadd.f32 %v2076, %v2096
        %v2104 = vadd.f32 %v2077, %v2096
        %v2105 = vadd.f32 %v2078, %v2096
        %v2106 = vadd.f32 %v2079, %v2096
        %v2107 = vadd.f32 %v2080, %v2096
        %v2108 = vadd.f32 %v2081, %v2096
        %v2109 = vadd.f32 %v2082, %v2096
        %v2110 = vadd.f32 %v2083, %v2096
        %v2111 = vadd.f32 %v2084, %v2096
        %v2112 = vadd.f32 %v2085, %v2096
        %v2113 = vadd.f32 %v2086, %v2096
        %v2114 = vadd.f32 %v2087, %v2096
        %v2115 = vadd.f32 %v2088, %v2096
        %v2116 = vadd.f32 %v2089, %v2096
        %v2117 = vadd.f32 %v2090, %v2096
        %v2118 = vmax.f32 %v2098, 0.0
        %v2119 = vmax.f32 %v2099, 0.0
        %v2120 = vmax.f32 %v2100, 0.0
        %v2121 = vmax.f32 %v2101, 0.0
        %v2122 = vmax.f32 %v2102, 0.0
        %v2123 = vmax.f32 %v2103, 0.0
        %v2124 = vmax.f32 %v2104, 0.0
        %v2125 = vmax.f32 %v2105, 0.0
        %v2126 = vmax.f32 %v2106, 0.0
        %v2127 = vmax.f32 %v2107, 0.0
        %v2128 = vmax.f32 %v2108, 0.0
        %v2129 = vmax.f32 %v2109, 0.0
        %v2130 = vmax.f32 %v2110, 0.0
        %v2131 = vmax.f32 %v2111, 0.0
        %v2132 = vmax.f32 %v2112, 0.0
        %v2133 = vmax.f32 %v2113, 0.0
        %v2134 = vmax.f32 %v2114, 0.0
        %v2135 = vmax.f32 %v2115, 0.0
        %v2136 = vmax.f32 %v2116, 0.0
        %v2137 = vmax.f32 %v2117, 0.0
        %v2138 = vlaneseq
        %v2139 = vshrl.u32 %v2138, 7
        %v2140 = vadd.s32 %v2139, 8
        %p2141 = scmp.gt.s32.totalorder %s24, 0
        %s2142 = scalar_select %p2141, 1, 0
        %v2143 = vstv %s2142
        %vm2144 = vcmp.eq.s32.totalorder %v2143, 1
        %p2145 = scmp.lt.s32.totalorder %s24, 1
        %s2146 = scalar_select %p2145, 1, 0
        %v2147 = vstv %s2146
        %vm2148 = vcmp.eq.s32.totalorder %v2147, 1
        %vm2149 = vcmp.lt.s32.totalorder %v2139, 16
        %vm2150 = vcmp.lt.s32.totalorder %v2140, 16
        %v2151 = vsel %vm2144, 1, 0
        %v2152 = vsel %vm2148, 1, 0
        %vm2153 = vcmp.eq.s32.totalorder %v2151, 1
        %vm2154 = vcmp.eq.s32.totalorder %v2152, 1
        %v2155 = vsel %vm2149, 1, 0
        %v2156 = vsel %vm2150, 1, 0
        %vm2157 = vcmp.eq.s32.totalorder %v2155, 1
        %vm2158 = vcmp.eq.s32.totalorder %v2156, 1
        %vm2159 = vmand %vm2153, %vm2157
        %vm2160 = vmand %vm2153, %vm2158
        %vm2161 = vmand 1, %vm2157
        %vm2162 = vmand 1, %vm2158
        %vm2163 = vmand %vm2154, %vm2157
        %vm2164 = vmand %vm2154, %vm2158
        %v2165 = vsel %vm2159, 1, 0
        %v2166 = vsel %vm2160, 1, 0
        %v2167 = vsel %vm2161, 1, 0
        %v2168 = vsel %vm2162, 1, 0
        %v2169 = vsel %vm2163, 1, 0
        %v2170 = vsel %vm2164, 1, 0
        %vm2171 = vcmp.eq.s32.totalorder %v2165, 1
        %vm2172 = vcmp.eq.s32.totalorder %v2166, 1
        %vm2173 = vcmp.eq.s32.totalorder %v2167, 1
        %vm2174 = vcmp.eq.s32.totalorder %v2168, 1
        %vm2175 = vcmp.eq.s32.totalorder %v2169, 1
        %vm2176 = vcmp.eq.s32.totalorder %v2170, 1
        %v2177 = vsel %vm2171, %v2118, 0.0
        %v2178 = vsel %vm2172, %v2119, 0.0
        %v2179 = vsel %vm2173, %v2120, 0.0
        %v2180 = vsel %vm2174, %v2121, 0.0
        %v2181 = vsel %vm2173, %v2122, 0.0
        %v2182 = vsel %vm2174, %v2123, 0.0
        %v2183 = vsel %vm2173, %v2124, 0.0
        %v2184 = vsel %vm2174, %v2125, 0.0
        %v2185 = vsel %vm2173, %v2126, 0.0
        %v2186 = vsel %vm2174, %v2127, 0.0
        %v2187 = vsel %vm2173, %v2128, 0.0
        %v2188 = vsel %vm2174, %v2129, 0.0
        %v2189 = vsel %vm2173, %v2130, 0.0
        %v2190 = vsel %vm2174, %v2131, 0.0
        %v2191 = vsel %vm2173, %v2132, 0.0
        %v2192 = vsel %vm2174, %v2133, 0.0
        %v2193 = vsel %vm2173, %v2134, 0.0
        %v2194 = vsel %vm2174, %v2135, 0.0
        %v2195 = vsel %vm2175, %v2136, 0.0
        %v2196 = vsel %vm2176, %v2137, 0.0
        %v2197 = vpack.c.bf16 %v2178, %v2177
        %v2198 = vpack.c.bf16 %v2180, %v2179
        %v2199 = vpack.c.bf16 %v2182, %v2181
        %v2200 = vpack.c.bf16 %v2184, %v2183
        %v2201 = vpack.c.bf16 %v2186, %v2185
        %v2202 = vpack.c.bf16 %v2188, %v2187
        %v2203 = vpack.c.bf16 %v2190, %v2189
        %v2204 = vpack.c.bf16 %v2192, %v2191
        %v2205 = vpack.c.bf16 %v2194, %v2193
        %v2206 = vpack.c.bf16 %v2196, %v2195
        %v2208 = vshrl.u32 %v2197, 16
        %v2210 = vrot.slane %v2208, 7
        %v2211 = vshll.u32 %v2197, 16
        %v2213 = vor.u32 %v2210, %v2211
        %v2215 = vshrl.u32 %v2198, 16
        %v2217 = vrot.slane %v2215, 7
        %v2218 = vshll.u32 %v2198, 16
        %v2220 = vor.u32 %v2217, %v2218
        %v2222 = vshrl.u32 %v2199, 16
        %v2224 = vrot.slane %v2222, 7
        %v2225 = vshll.u32 %v2199, 16
        %v2227 = vor.u32 %v2224, %v2225
        %v2229 = vshrl.u32 %v2200, 16
        %v2231 = vrot.slane %v2229, 7
        %v2232 = vshll.u32 %v2200, 16
        %v2234 = vor.u32 %v2231, %v2232
        %v2236 = vshrl.u32 %v2201, 16
        %v2238 = vrot.slane %v2236, 7
        %v2239 = vshll.u32 %v2201, 16
        %v2241 = vor.u32 %v2238, %v2239
        %v2243 = vshrl.u32 %v2202, 16
        %v2245 = vrot.slane %v2243, 7
        %v2246 = vshll.u32 %v2202, 16
        %v2248 = vor.u32 %v2245, %v2246
        %v2250 = vshrl.u32 %v2203, 16
        %v2252 = vrot.slane %v2250, 7
        %v2253 = vshll.u32 %v2203, 16
        %v2255 = vor.u32 %v2252, %v2253
        %v2257 = vshrl.u32 %v2204, 16
        %v2259 = vrot.slane %v2257, 7
        %v2260 = vshll.u32 %v2204, 16
        %v2262 = vor.u32 %v2259, %v2260
        %v2264 = vshrl.u32 %v2205, 16
        %v2266 = vrot.slane %v2264, 7
        %v2267 = vshll.u32 %v2205, 16
        %v2269 = vor.u32 %v2266, %v2267
        %v2271 = vshrl.u32 %v2206, 16
        %v2273 = vrot.slane %v2271, 7
        %v2274 = vshll.u32 %v2206, 16
        %v2276 = vor.u32 %v2273, %v2274
        %vm2297 = vcmask 1040384
        %vm2298 = vsmask.f32 256
        %vm2299 = vmand %vm2297, %vm2298
        %v2300 = vsel %vm2299, 0, %v2213
        %v2301 = vsel %vm2299, 0, %v2220
        %v2302 = vsel %vm2299, 0, %v2227
        %v2303 = vsel %vm2299, 0, %v2234
        %v2304 = vsel %vm2299, 0, %v2241
        %v2305 = vsel %vm2299, 0, %v2248
        %v2306 = vsel %vm2299, 0, %v2255
        %v2307 = vsel %vm2299, 0, %v2262
        %v2308 = vsel %vm2299, 0, %v2269
        %v2309 = vsel %vm2299, 0, %v2276
        %v2310 = vsel %vm2299, %v2210, 0
        %v2311 = vsel %vm2299, %v2217, 0
        %v2312 = vsel %vm2299, %v2224, 0
        %v2313 = vsel %vm2299, %v2231, 0
        %v2314 = vsel %vm2299, %v2238, 0
        %v2315 = vsel %vm2299, %v2245, 0
        %v2316 = vsel %vm2299, %v2252, 0
        %v2317 = vsel %vm2299, %v2259, 0
        %v2318 = vsel %vm2299, %v2266, 0
        %v2319 = vsel %vm2299, %v2273, 0
        %v2321 = vshrl.u32 %v2300, 16
        %v2323 = vshll.u32 %v2300, 16
        %v2325 = vrot.slane %v2323, 1
        %v2326 = vor.u32 %v2321, %v2325
        %v2328 = vshll.u32 %v2310, 16
        %v2330 = vrot.slane %v2328, 1
        %v2331 = vsel %vm585, %v2326, %v2330
        %v2333 = vshrl.u32 %v2301, 16
        %v2335 = vshll.u32 %v2301, 16
        %v2337 = vrot.slane %v2335, 1
        %v2338 = vor.u32 %v2333, %v2337
        %v2340 = vshll.u32 %v2311, 16
        %v2342 = vrot.slane %v2340, 1
        %v2343 = vsel %vm585, %v2338, %v2342
        %v2345 = vshrl.u32 %v2302, 16
        %v2347 = vshll.u32 %v2302, 16
        %v2349 = vrot.slane %v2347, 1
        %v2350 = vor.u32 %v2345, %v2349
        %v2352 = vshll.u32 %v2312, 16
        %v2354 = vrot.slane %v2352, 1
        %v2355 = vsel %vm585, %v2350, %v2354
        %v2357 = vshrl.u32 %v2303, 16
        %v2359 = vshll.u32 %v2303, 16
        %v2361 = vrot.slane %v2359, 1
        %v2362 = vor.u32 %v2357, %v2361
        %v2364 = vshll.u32 %v2313, 16
        %v2366 = vrot.slane %v2364, 1
        %v2367 = vsel %vm585, %v2362, %v2366
        %v2369 = vshrl.u32 %v2304, 16
        %v2371 = vshll.u32 %v2304, 16
        %v2373 = vrot.slane %v2371, 1
        %v2374 = vor.u32 %v2369, %v2373
        %v2376 = vshll.u32 %v2314, 16
        %v2378 = vrot.slane %v2376, 1
        %v2379 = vsel %vm585, %v2374, %v2378
        %v2381 = vshrl.u32 %v2305, 16
        %v2383 = vshll.u32 %v2305, 16
        %v2385 = vrot.slane %v2383, 1
        %v2386 = vor.u32 %v2381, %v2385
        %v2388 = vshll.u32 %v2315, 16
        %v2390 = vrot.slane %v2388, 1
        %v2391 = vsel %vm585, %v2386, %v2390
        %v2393 = vshrl.u32 %v2306, 16
        %v2395 = vshll.u32 %v2306, 16
        %v2397 = vrot.slane %v2395, 1
        %v2398 = vor.u32 %v2393, %v2397
        %v2400 = vshll.u32 %v2316, 16
        %v2402 = vrot.slane %v2400, 1
        %v2403 = vsel %vm585, %v2398, %v2402
        %v2405 = vshrl.u32 %v2307, 16
        %v2407 = vshll.u32 %v2307, 16
        %v2409 = vrot.slane %v2407, 1
        %v2410 = vor.u32 %v2405, %v2409
        %v2412 = vshll.u32 %v2317, 16
        %v2414 = vrot.slane %v2412, 1
        %v2415 = vsel %vm585, %v2410, %v2414
        %v2440 = vrot.slane %v2300, 1
        %v2441 = vrot.slane %v2310, 1
        %v2442 = vsel %vm736, %v2440, %v2441
        %v2443 = vrot.slane %v2301, 1
        %v2444 = vrot.slane %v2311, 1
        %v2445 = vsel %vm736, %v2443, %v2444
        %v2446 = vrot.slane %v2302, 1
        %v2447 = vrot.slane %v2312, 1
        %v2448 = vsel %vm736, %v2446, %v2447
        %v2449 = vrot.slane %v2303, 1
        %v2450 = vrot.slane %v2313, 1
        %v2451 = vsel %vm736, %v2449, %v2450
        %v2452 = vrot.slane %v2304, 1
        %v2453 = vrot.slane %v2314, 1
        %v2454 = vsel %vm736, %v2452, %v2453
        %v2455 = vrot.slane %v2305, 1
        %v2456 = vrot.slane %v2315, 1
        %v2457 = vsel %vm736, %v2455, %v2456
        %v2458 = vrot.slane %v2306, 1
        %v2459 = vrot.slane %v2316, 1
        %v2460 = vsel %vm736, %v2458, %v2459
        %v2461 = vrot.slane %v2307, 1
        %v2462 = vrot.slane %v2317, 1
        %v2463 = vsel %vm736, %v2461, %v2462
        %v2472 = vld [vmem:[%s2] sm:$0xf]
        %v2473 = vld [vmem:[%s2 + $0x4] sm:$0xf]
        %v2474 = vld [vmem:[%s2 + $0x8] sm:$0xf]
        %v2475 = vld [vmem:[%s2 + $0xc] sm:$0xf]
        %v2476 = vld [vmem:[%s2 + $0x10] sm:$0xf]
        %v2477 = vld [vmem:[%s2 + $0x14] sm:$0xf]
        %v2478 = vld [vmem:[%s2 + $0x18] sm:$0xf]
        %v2479 = vld [vmem:[%s2 + $0x1c] sm:$0xf]
        %v2480 = vld [vmem:[%s2 + $0x20] sm:$0xf]
        %v2481 = vld [vmem:[%s2 + $0x24] sm:$0xf]
        %v2482 = vld [vmem:[%s2 + $0x28] sm:$0xf]
        %v2483 = vld [vmem:[%s2 + $0x2c] sm:$0xf]
        %v2484 = vld [vmem:[%s2 + $0x30] sm:$0xf]
        %v2485 = vld [vmem:[%s2 + $0x34] sm:$0xf]
        %v2486 = vld [vmem:[%s2 + $0x38] sm:$0xf]
        %v2487 = vld [vmem:[%s2 + $0x3c] sm:$0xf]
        %v2488 = vld [vmem:[%s2 + $0x40] sm:$0xf]
        %v2489 = vld [vmem:[%s2 + $0x44] sm:$0xf]
        %v2490 = vld [vmem:[%s2 + $0x48] sm:$0xf]
        %v2491 = vld [vmem:[%s2 + $0x4c] sm:$0xf]
        %v2492 = vld [vmem:[%s2 + $0x50] sm:$0xf]
        %v2493 = vld [vmem:[%s2 + $0x54] sm:$0xf]
        %v2494 = vld [vmem:[%s2 + $0x58] sm:$0xf]
        %v2495 = vld [vmem:[%s2 + $0x5c] sm:$0xf]
        %v2496 = vld [vmem:[%s2 + $0x60] sm:$0xf]
        %v2497 = vld [vmem:[%s2 + $0x64] sm:$0xf]
        %v2498 = vld [vmem:[%s2 + $0x68] sm:$0xf]
        %v2499 = vld [vmem:[%s2 + $0x6c] sm:$0xf]
        %v2500 = vld [vmem:[%s2 + $0x70] sm:$0xf]
        %v2501 = vld [vmem:[%s2 + $0x74] sm:$0xf]
        %v2502 = vld [vmem:[%s2 + $0x78] sm:$0xf]
        %v2503 = vld [vmem:[%s2 + $0x7c] sm:$0xf]
        %v2504 = vld [vmem:[%s2 + $0x80] sm:$0xf]
        %v2505 = vld [vmem:[%s2 + $0x84] sm:$0xf]
        %v2506 = vld [vmem:[%s2 + $0x88] sm:$0xf]
        %v2507 = vld [vmem:[%s2 + $0x8c] sm:$0xf]
        %v2508 = vld [vmem:[%s2 + $0x90] sm:$0xf]
        %v2509 = vld [vmem:[%s2 + $0x94] sm:$0xf]
        %v2510 = vld [vmem:[%s2 + $0x98] sm:$0xf]
        %v2511 = vld [vmem:[%s2 + $0x9c] sm:$0xf]
        %v2512 = vld [vmem:[%s2 + $0xa0] sm:$0xf]
        %v2513 = vld [vmem:[%s2 + $0xa4] sm:$0xf]
        %v2514 = vld [vmem:[%s2 + $0xa8] sm:$0xf]
        %v2515 = vld [vmem:[%s2 + $0xac] sm:$0xf]
        %v2516 = vld [vmem:[%s2 + $0xb0] sm:$0xf]
        %v2517 = vld [vmem:[%s2 + $0xb4] sm:$0xf]
        %v2518 = vld [vmem:[%s2 + $0xb8] sm:$0xf]
        %v2519 = vld [vmem:[%s2 + $0xbc] sm:$0xf]
        %v2521 = vshrl.u32 %v2308, 16
        %v2523 = vshll.u32 %v2308, 16
        %v2525 = vrot.slane %v2523, 1
        %v2526 = vor.u32 %v2521, %v2525
        %v2528 = vshll.u32 %v2318, 16
        %v2530 = vrot.slane %v2528, 1
        %v2531 = vsel %vm585, %v2526, %v2530
        %v2535 = vrot.slane %v2308, 1
        %v2536 = vrot.slane %v2318, 1
        %v2537 = vsel %vm736, %v2535, %v2536
        %s2539 = scalar_lea.vmem %s2, 192
        %v2540 = vld [vmem:[%s2539] sm:$0xf]
        %v2541 = vld [vmem:[%s2539 + $0x4] sm:$0xf]
        %v2542 = vld [vmem:[%s2539 + $0x8] sm:$0xf]
        %v2543 = vld [vmem:[%s2539 + $0xc] sm:$0xf]
        %v2544 = vld [vmem:[%s2539 + $0x10] sm:$0xf]
        %v2545 = vld [vmem:[%s2539 + $0x14] sm:$0xf]
        %v2546 = vld [vmem:[%s2539 + $0x18] sm:$0xf]
        %v2547 = vld [vmem:[%s2539 + $0x1c] sm:$0xf]
        %v2548 = vld [vmem:[%s2539 + $0x20] sm:$0xf]
        %v2549 = vld [vmem:[%s2539 + $0x24] sm:$0xf]
        %v2550 = vld [vmem:[%s2539 + $0x28] sm:$0xf]
        %v2551 = vld [vmem:[%s2539 + $0x2c] sm:$0xf]
        %v2552 = vld [vmem:[%s2539 + $0x30] sm:$0xf]
        %v2553 = vld [vmem:[%s2539 + $0x34] sm:$0xf]
        %v2554 = vld [vmem:[%s2539 + $0x38] sm:$0xf]
        %v2555 = vld [vmem:[%s2539 + $0x3c] sm:$0xf]
        %v2556 = vld [vmem:[%s2539 + $0x40] sm:$0xf]
        %v2557 = vld [vmem:[%s2539 + $0x44] sm:$0xf]
        %v2558 = vld [vmem:[%s2539 + $0x48] sm:$0xf]
        %v2559 = vld [vmem:[%s2539 + $0x4c] sm:$0xf]
        %v2560 = vld [vmem:[%s2539 + $0x50] sm:$0xf]
        %v2561 = vld [vmem:[%s2539 + $0x54] sm:$0xf]
        %v2562 = vld [vmem:[%s2539 + $0x58] sm:$0xf]
        %v2563 = vld [vmem:[%s2539 + $0x5c] sm:$0xf]
        %v2564 = vld [vmem:[%s2539 + $0x60] sm:$0xf]
        %v2565 = vld [vmem:[%s2539 + $0x64] sm:$0xf]
        %v2566 = vld [vmem:[%s2539 + $0x68] sm:$0xf]
        %v2567 = vld [vmem:[%s2539 + $0x6c] sm:$0xf]
        %v2568 = vld [vmem:[%s2539 + $0x70] sm:$0xf]
        %v2569 = vld [vmem:[%s2539 + $0x74] sm:$0xf]
        %v2570 = vld [vmem:[%s2539 + $0x78] sm:$0xf]
        %v2571 = vld [vmem:[%s2539 + $0x7c] sm:$0xf]
        %v2572 = vld [vmem:[%s2539 + $0x80] sm:$0xf]
        %v2573 = vld [vmem:[%s2539 + $0x84] sm:$0xf]
        %v2574 = vld [vmem:[%s2539 + $0x88] sm:$0xf]
        %v2575 = vld [vmem:[%s2539 + $0x8c] sm:$0xf]
        %v2576 = vld [vmem:[%s2539 + $0x90] sm:$0xf]
        %v2577 = vld [vmem:[%s2539 + $0x94] sm:$0xf]
        %v2578 = vld [vmem:[%s2539 + $0x98] sm:$0xf]
        %v2579 = vld [vmem:[%s2539 + $0x9c] sm:$0xf]
        %v2580 = vld [vmem:[%s2539 + $0xa0] sm:$0xf]
        %v2581 = vld [vmem:[%s2539 + $0xa4] sm:$0xf]
        %v2582 = vld [vmem:[%s2539 + $0xa8] sm:$0xf]
        %v2583 = vld [vmem:[%s2539 + $0xac] sm:$0xf]
        %v2584 = vld [vmem:[%s2539 + $0xb0] sm:$0xf]
        %v2585 = vld [vmem:[%s2539 + $0xb4] sm:$0xf]
        %v2586 = vld [vmem:[%s2539 + $0xb8] sm:$0xf]
        %v2587 = vld [vmem:[%s2539 + $0xbc] sm:$0xf]
        %v2636 = vunpack.c.l.b16 %v2540
        %v2637 = vunpack.c.l.b16 %v2541
        %v2638 = vunpack.c.l.b16 %v2542
        %v2639 = vunpack.c.l.b16 %v2543
        %v2640 = vunpack.c.l.b16 %v2544
        %v2641 = vunpack.c.l.b16 %v2545
        %v2642 = vunpack.c.l.b16 %v2546
        %v2643 = vunpack.c.l.b16 %v2547
        %v2644 = vunpack.c.l.b16 %v2548
        %v2645 = vunpack.c.l.b16 %v2549
        %v2646 = vunpack.c.l.b16 %v2550
        %v2647 = vunpack.c.l.b16 %v2551
        %v2648 = vunpack.c.l.b16 %v2552
        %v2649 = vunpack.c.l.b16 %v2553
        %v2650 = vunpack.c.l.b16 %v2554
        %v2651 = vunpack.c.l.b16 %v2555
        %v2652 = vunpack.c.l.b16 %v2556
        %v2653 = vunpack.c.l.b16 %v2557
        %v2654 = vunpack.c.l.b16 %v2558
        %v2655 = vunpack.c.l.b16 %v2559
        %v2656 = vunpack.c.l.b16 %v2560
        %v2657 = vunpack.c.l.b16 %v2561
        %v2658 = vunpack.c.l.b16 %v2562
        %v2659 = vunpack.c.l.b16 %v2563
        %v2660 = vunpack.c.l.b16 %v2564
        %v2661 = vunpack.c.l.b16 %v2565
        %v2662 = vunpack.c.l.b16 %v2566
        %v2663 = vunpack.c.l.b16 %v2567
        %v2664 = vunpack.c.l.b16 %v2568
        %v2665 = vunpack.c.l.b16 %v2569
        %v2666 = vunpack.c.l.b16 %v2570
        %v2667 = vunpack.c.l.b16 %v2571
        %v2668 = vunpack.c.l.b16 %v2572
        %v2669 = vunpack.c.l.b16 %v2573
        %v2670 = vunpack.c.l.b16 %v2574
        %v2671 = vunpack.c.l.b16 %v2575
        %v2672 = vunpack.c.l.b16 %v2576
        %v2673 = vunpack.c.l.b16 %v2577
        %v2674 = vunpack.c.l.b16 %v2578
        %v2675 = vunpack.c.l.b16 %v2579
        %v2676 = vunpack.c.l.b16 %v2580
        %v2677 = vunpack.c.l.b16 %v2581
        %v2678 = vunpack.c.l.b16 %v2582
        %v2679 = vunpack.c.l.b16 %v2583
        %v2680 = vunpack.c.l.b16 %v2584
        %v2681 = vunpack.c.l.b16 %v2585
        %v2682 = vunpack.c.l.b16 %v2586
        %v2683 = vunpack.c.l.b16 %v2587
        %v2684 = vpack.c.b16 %v2637, %v2636
        %v2685 = vpack.c.b16 %v2639, %v2638
        %v2686 = vpack.c.b16 %v2641, %v2640
        %v2687 = vpack.c.b16 %v2643, %v2642
        %v2688 = vpack.c.b16 %v2645, %v2644
        %v2689 = vpack.c.b16 %v2647, %v2646
        %v2690 = vpack.c.b16 %v2649, %v2648
        %v2691 = vpack.c.b16 %v2651, %v2650
        %v2692 = vpack.c.b16 %v2653, %v2652
        %v2693 = vpack.c.b16 %v2655, %v2654
        %v2694 = vpack.c.b16 %v2657, %v2656
        %v2695 = vpack.c.b16 %v2659, %v2658
        %v2696 = vpack.c.b16 %v2661, %v2660
        %v2697 = vpack.c.b16 %v2663, %v2662
        %v2698 = vpack.c.b16 %v2665, %v2664
        %v2699 = vpack.c.b16 %v2667, %v2666
        %v2700 = vpack.c.b16 %v2669, %v2668
        %v2701 = vpack.c.b16 %v2671, %v2670
        %v2702 = vpack.c.b16 %v2673, %v2672
        %v2703 = vpack.c.b16 %v2675, %v2674
        %v2704 = vpack.c.b16 %v2677, %v2676
        %v2705 = vpack.c.b16 %v2679, %v2678
        %v2706 = vpack.c.b16 %v2681, %v2680
        %v2707 = vpack.c.b16 %v2683, %v2682
        %2732 = vmatprep.subr.bf16.mxu0 0
        %2733 = vmatpush1.bf16.msra.mxu0 %v2684
        %2734 = vmatprep.subr.bf16.mxu0 0
        %2735 = vmatpush1.bf16.msra.mxu0 %v2685
        %2736 = vmatprep.subr.bf16.mxu0 0
        %2737 = vmatpush1.bf16.msra.mxu0 %v2686
        %2738 = vmatprep.subr.bf16.mxu0 0
        %2739 = vmatpush1.bf16.msra.mxu0 %v2687
        %2740 = vmatprep.subr.bf16.mxu0 0
        %2741 = vmatpush1.bf16.msra.mxu0 %v2688
        %2742 = vmatprep.subr.bf16.mxu0 0
        %2743 = vmatpush1.bf16.msra.mxu0 %v2689
        %2744 = vmatprep.subr.bf16.mxu0 0
        %2745 = vmatpush1.bf16.msra.mxu0 %v2690
        %2746 = vmatprep.subr.bf16.mxu0 0
        %2747 = vmatpush1.bf16.msra.mxu0 %v2691
        %2748 = vmatprep.subr.bf16.mxu0 0
        %2749 = vmatpush1.bf16.msra.mxu0 %v2692
        %2750 = vmatprep.subr.bf16.mxu0 0
        %2751 = vmatpush1.bf16.msra.mxu0 %v2693
        %2752 = vmatprep.subr.bf16.mxu0 0
        %2753 = vmatpush1.bf16.msra.mxu0 %v2694
        %2754 = vmatprep.subr.bf16.mxu0 0
        %2755 = vmatpush1.bf16.msra.mxu0 %v2695
        %2756 = vmatprep.subr.bf16.mxu0 0
        %2757 = vmatpush1.bf16.msra.mxu0 %v2696
        %2758 = vmatprep.subr.bf16.mxu0 0
        %2759 = vmatpush1.bf16.msra.mxu0 %v2697
        %2760 = vmatprep.subr.bf16.mxu0 0
        %2761 = vmatpush1.bf16.msra.mxu0 %v2698
        %2762 = vmatprep.subr.bf16.mxu0 0
        %2763 = vmatpush1.bf16.msra.mxu0 %v2699
        %2764 = vmatprep.mubr.bf16.mxu0 %v2343
        %2765 = vmatmul.mubr.bf16.gmra.mrb[0].mxu0 %v2301
        %v2766 = vpop.f32.mrb[0].mxu0
        %v2767 = vadd.f32 0.0, %v2766
        %v2768 = vpop.f32.mrb[0].mxu0
        %v2769 = vpop.f32.mrb[0].mxu0
        %v2770 = vadd.f32 0.0, %v2769
        %v2771 = vpop.f32.mrb[0].mxu0
        %2772 = vmatprep.mubr.bf16.mxu0 %v2355
        %2773 = vmatmul.mubr.bf16.gmra.mrb[0].mxu0 %v2302
        %v2774 = vpop.f32.mrb[0].mxu0
        %v2775 = vadd.f32 0.0, %v2774
        %v2776 = vpop.f32.mrb[0].mxu0
        %v2777 = vpop.f32.mrb[0].mxu0
        %v2778 = vadd.f32 0.0, %v2777
        %v2779 = vpop.f32.mrb[0].mxu0
        %2780 = vmatprep.mubr.bf16.mxu0 %v2367
        %2781 = vmatmul.mubr.bf16.gmra.mrb[0].mxu0 %v2303
        %v2782 = vpop.f32.mrb[0].mxu0
        %v2783 = vadd.f32 0.0, %v2782
        %v2784 = vpop.f32.mrb[0].mxu0
        %v2785 = vpop.f32.mrb[0].mxu0
        %v2786 = vadd.f32 0.0, %v2785
        %v2787 = vpop.f32.mrb[0].mxu0
        %2788 = vmatprep.mubr.bf16.mxu0 %v2379
        %2789 = vmatmul.mubr.bf16.gmra.mrb[0].mxu0 %v2304
        %v2790 = vpop.f32.mrb[0].mxu0
        %v2791 = vadd.f32 0.0, %v2790
        %v2792 = vpop.f32.mrb[0].mxu0
        %v2793 = vpop.f32.mrb[0].mxu0
        %v2794 = vadd.f32 0.0, %v2793
        %v2795 = vpop.f32.mrb[0].mxu0
        %2796 = vmatprep.mubr.bf16.mxu0 %v2391
        %2797 = vmatmul.mubr.bf16.gmra.mrb[0].mxu0 %v2305
        %v2798 = vpop.f32.mrb[0].mxu0
        %v2799 = vadd.f32 0.0, %v2798
        %v2800 = vpop.f32.mrb[0].mxu0
        %v2801 = vpop.f32.mrb[0].mxu0
        %v2802 = vadd.f32 0.0, %v2801
        %v2803 = vpop.f32.mrb[0].mxu0
        %2804 = vmatprep.mubr.bf16.mxu0 %v2403
        %2805 = vmatmul.mubr.bf16.gmra.mrb[0].mxu0 %v2306
        %v2806 = vpop.f32.mrb[0].mxu0
        %v2807 = vadd.f32 0.0, %v2806
        %v2808 = vpop.f32.mrb[0].mxu0
        %v2809 = vpop.f32.mrb[0].mxu0
        %v2810 = vadd.f32 0.0, %v2809
        %v2811 = vpop.f32.mrb[0].mxu0
        %2812 = vmatprep.mubr.bf16.mxu0 %v2415
        %2813 = vmatmul.mubr.bf16.gmra.mrb[0].mxu0 %v2307
        %v2814 = vpop.f32.mrb[0].mxu0
        %v2815 = vadd.f32 0.0, %v2814
        %v2816 = vpop.f32.mrb[0].mxu0
        %v2817 = vpop.f32.mrb[0].mxu0
        %v2818 = vadd.f32 0.0, %v2817
        %v2819 = vpop.f32.mrb[0].mxu0
        %2820 = vmatprep.mubr.bf16.mxu0 %v2531
        %2821 = vmatmul.mubr.bf16.gmra.mrb[0].mxu0 %v2308
        %v2822 = vpop.f32.mrb[0].mxu0
        %v2823 = vadd.f32 0.0, %v2822
        %v2824 = vpop.f32.mrb[0].mxu0
        %v2825 = vpop.f32.mrb[0].mxu0
        %v2826 = vadd.f32 0.0, %v2825
        %v2827 = vpop.f32.mrb[0].mxu0
        %2828 = vdwg.mxu0
        %2829 = vmatprep.subr.bf16.mxu0 0
        %2830 = vmatpush1.bf16.msra.mxu0 %v2700
        %2831 = vmatprep.subr.bf16.mxu0 0
        %2832 = vmatpush1.bf16.msra.mxu0 %v2701
        %2833 = vmatprep.subr.bf16.mxu0 0
        %2834 = vmatpush1.bf16.msra.mxu0 %v2702
        %2835 = vmatprep.subr.bf16.mxu0 0
        %2836 = vmatpush1.bf16.msra.mxu0 %v2703
        %2837 = vmatprep.subr.bf16.mxu0 0
        %2838 = vmatpush1.bf16.msra.mxu0 %v2704
        %2839 = vmatprep.subr.bf16.mxu0 0
        %2840 = vmatpush1.bf16.msra.mxu0 %v2705
        %2841 = vmatprep.subr.bf16.mxu0 0
        %2842 = vmatpush1.bf16.msra.mxu0 %v2706
        %2843 = vmatprep.subr.bf16.mxu0 0
        %2844 = vmatpush1.bf16.msra.mxu0 %v2707
        %2845 = vmatprep.subr.bf16.mxu0 0
        %2846 = vmatpush1.bf16.msra.mxu0 0
        %2847 = vmatprep.subr.bf16.mxu0 0
        %2848 = vmatpush1.bf16.msra.mxu0 0
        %2849 = vmatprep.subr.bf16.mxu0 0
        %2850 = vmatpush1.bf16.msra.mxu0 0
        %2851 = vmatprep.subr.bf16.mxu0 0
        %2852 = vmatpush1.bf16.msra.mxu0 0
        %2853 = vmatprep.subr.bf16.mxu0 0
        %2854 = vmatpush1.bf16.msra.mxu0 0
        %2855 = vmatprep.subr.bf16.mxu0 0
        %2856 = vmatpush1.bf16.msra.mxu0 0
        %2857 = vmatprep.subr.bf16.mxu0 0
        %2858 = vmatpush1.bf16.msra.mxu0 0
        %2859 = vmatprep.subr.bf16.mxu0 0
        %2860 = vmatpush1.bf16.msra.mxu0 0
        %2861 = vmatprep.mubr.bf16.mxu0 0
        %2862 = vmatmul.mubr.bf16.gmra.mrb[0].mxu0 %v2445
        %v2863 = vpop.f32.mrb[0].mxu0
        %v2864 = vadd.f32 %v2767, %v2863
        %v2865 = vpop.f32.mrb[0].mxu0
        %v2866 = vpop.f32.mrb[0].mxu0
        %v2867 = vadd.f32 %v2770, %v2866
        %v2868 = vpop.f32.mrb[0].mxu0
        %2869 = vmatprep.mubr.bf16.mxu0 0
        %2870 = vmatmul.mubr.bf16.gmra.mrb[0].mxu0 %v2448
        %v2871 = vpop.f32.mrb[0].mxu0
        %v2872 = vadd.f32 %v2775, %v2871
        %v2873 = vpop.f32.mrb[0].mxu0
        %v2874 = vpop.f32.mrb[0].mxu0
        %v2875 = vadd.f32 %v2778, %v2874
        %v2876 = vpop.f32.mrb[0].mxu0
        %2877 = vmatprep.mubr.bf16.mxu0 0
        %2878 = vmatmul.mubr.bf16.gmra.mrb[0].mxu0 %v2451
        %v2879 = vpop.f32.mrb[0].mxu0
        %v2880 = vadd.f32 %v2783, %v2879
        %v2881 = vpop.f32.mrb[0].mxu0
        %v2882 = vpop.f32.mrb[0].mxu0
        %v2883 = vadd.f32 %v2786, %v2882
        %v2884 = vpop.f32.mrb[0].mxu0
        %2885 = vmatprep.mubr.bf16.mxu0 0
        %2886 = vmatmul.mubr.bf16.gmra.mrb[0].mxu0 %v2454
        %v2887 = vpop.f32.mrb[0].mxu0
        %v2888 = vadd.f32 %v2791, %v2887
        %v2889 = vpop.f32.mrb[0].mxu0
        %v2890 = vpop.f32.mrb[0].mxu0
        %v2891 = vadd.f32 %v2794, %v2890
        %v2892 = vpop.f32.mrb[0].mxu0
        %2893 = vmatprep.mubr.bf16.mxu0 0
        %2894 = vmatmul.mubr.bf16.gmra.mrb[0].mxu0 %v2457
        %v2895 = vpop.f32.mrb[0].mxu0
        %v2896 = vadd.f32 %v2799, %v2895
        %v2897 = vpop.f32.mrb[0].mxu0
        %v2898 = vpop.f32.mrb[0].mxu0
        %v2899 = vadd.f32 %v2802, %v2898
        %v2900 = vpop.f32.mrb[0].mxu0
        %2901 = vmatprep.mubr.bf16.mxu0 0
        %2902 = vmatmul.mubr.bf16.gmra.mrb[0].mxu0 %v2460
        %v2903 = vpop.f32.mrb[0].mxu0
        %v2904 = vadd.f32 %v2807, %v2903
        %v2905 = vpop.f32.mrb[0].mxu0
        %v2906 = vpop.f32.mrb[0].mxu0
        %v2907 = vadd.f32 %v2810, %v2906
        %v2908 = vpop.f32.mrb[0].mxu0
        %2909 = vmatprep.mubr.bf16.mxu0 0
        %2910 = vmatmul.mubr.bf16.gmra.mrb[0].mxu0 %v2463
        %v2911 = vpop.f32.mrb[0].mxu0
        %v2912 = vadd.f32 %v2815, %v2911
        %v2913 = vpop.f32.mrb[0].mxu0
        %v2914 = vpop.f32.mrb[0].mxu0
        %v2915 = vadd.f32 %v2818, %v2914
        %v2916 = vpop.f32.mrb[0].mxu0
        %2917 = vmatprep.mubr.bf16.mxu0 0
        %2918 = vmatmul.mubr.bf16.gmra.mrb[0].mxu0 %v2537
        %v2919 = vpop.f32.mrb[0].mxu0
        %v2920 = vadd.f32 %v2823, %v2919
        %v2921 = vpop.f32.mrb[0].mxu0
        %v2922 = vpop.f32.mrb[0].mxu0
        %v2923 = vadd.f32 %v2826, %v2922
        %v2924 = vpop.f32.mrb[0].mxu0
        %2925 = vdwg.mxu0
        %v2974 = vunpack.c.l.b16 %v2472
        %v2975 = vunpack.c.l.b16 %v2473
        %v2976 = vunpack.c.l.b16 %v2474
        %v2977 = vunpack.c.l.b16 %v2475
        %v2978 = vunpack.c.l.b16 %v2476
        %v2979 = vunpack.c.l.b16 %v2477
        %v2980 = vunpack.c.l.b16 %v2478
        %v2981 = vunpack.c.l.b16 %v2479
        %v2982 = vunpack.c.l.b16 %v2480
        %v2983 = vunpack.c.l.b16 %v2481
        %v2984 = vunpack.c.l.b16 %v2482
        %v2985 = vunpack.c.l.b16 %v2483
        %v2986 = vunpack.c.l.b16 %v2484
        %v2987 = vunpack.c.l.b16 %v2485
        %v2988 = vunpack.c.l.b16 %v2486
        %v2989 = vunpack.c.l.b16 %v2487
        %v2990 = vunpack.c.l.b16 %v2488
        %v2991 = vunpack.c.l.b16 %v2489
        %v2992 = vunpack.c.l.b16 %v2490
        %v2993 = vunpack.c.l.b16 %v2491
        %v2994 = vunpack.c.l.b16 %v2492
        %v2995 = vunpack.c.l.b16 %v2493
        %v2996 = vunpack.c.l.b16 %v2494
        %v2997 = vunpack.c.l.b16 %v2495
        %v2998 = vunpack.c.l.b16 %v2496
        %v2999 = vunpack.c.l.b16 %v2497
        %v3000 = vunpack.c.l.b16 %v2498
        %v3001 = vunpack.c.l.b16 %v2499
        %v3002 = vunpack.c.l.b16 %v2500
        %v3003 = vunpack.c.l.b16 %v2501
        %v3004 = vunpack.c.l.b16 %v2502
        %v3005 = vunpack.c.l.b16 %v2503
        %v3006 = vunpack.c.l.b16 %v2504
        %v3007 = vunpack.c.l.b16 %v2505
        %v3008 = vunpack.c.l.b16 %v2506
        %v3009 = vunpack.c.l.b16 %v2507
        %v3010 = vunpack.c.l.b16 %v2508
        %v3011 = vunpack.c.l.b16 %v2509
        %v3012 = vunpack.c.l.b16 %v2510
        %v3013 = vunpack.c.l.b16 %v2511
        %v3014 = vunpack.c.l.b16 %v2512
        %v3015 = vunpack.c.l.b16 %v2513
        %v3016 = vunpack.c.l.b16 %v2514
        %v3017 = vunpack.c.l.b16 %v2515
        %v3018 = vunpack.c.l.b16 %v2516
        %v3019 = vunpack.c.l.b16 %v2517
        %v3020 = vunpack.c.l.b16 %v2518
        %v3021 = vunpack.c.l.b16 %v2519
        %v3022 = vpack.c.b16 %v2975, %v2974
        %v3023 = vpack.c.b16 %v2977, %v2976
        %v3024 = vpack.c.b16 %v2979, %v2978
        %v3025 = vpack.c.b16 %v2981, %v2980
        %v3026 = vpack.c.b16 %v2983, %v2982
        %v3027 = vpack.c.b16 %v2985, %v2984
        %v3028 = vpack.c.b16 %v2987, %v2986
        %v3029 = vpack.c.b16 %v2989, %v2988
        %v3030 = vpack.c.b16 %v2991, %v2990
        %v3031 = vpack.c.b16 %v2993, %v2992
        %v3032 = vpack.c.b16 %v2995, %v2994
        %v3033 = vpack.c.b16 %v2997, %v2996
        %v3034 = vpack.c.b16 %v2999, %v2998
        %v3035 = vpack.c.b16 %v3001, %v3000
        %v3036 = vpack.c.b16 %v3003, %v3002
        %v3037 = vpack.c.b16 %v3005, %v3004
        %v3038 = vpack.c.b16 %v3007, %v3006
        %v3039 = vpack.c.b16 %v3009, %v3008
        %v3040 = vpack.c.b16 %v3011, %v3010
        %v3041 = vpack.c.b16 %v3013, %v3012
        %v3042 = vpack.c.b16 %v3015, %v3014
        %v3043 = vpack.c.b16 %v3017, %v3016
        %v3044 = vpack.c.b16 %v3019, %v3018
        %v3045 = vpack.c.b16 %v3021, %v3020
        %3070 = vmatprep.subr.bf16.mxu0 0
        %3071 = vmatpush1.bf16.msra.mxu0 %v3022
        %3072 = vmatprep.subr.bf16.mxu0 0
        %3073 = vmatpush1.bf16.msra.mxu0 %v3023
        %3074 = vmatprep.subr.bf16.mxu0 0
        %3075 = vmatpush1.bf16.msra.mxu0 %v3024
        %3076 = vmatprep.subr.bf16.mxu0 0
        %3077 = vmatpush1.bf16.msra.mxu0 %v3025
        %3078 = vmatprep.subr.bf16.mxu0 0
        %3079 = vmatpush1.bf16.msra.mxu0 %v3026
        %3080 = vmatprep.subr.bf16.mxu0 0
        %3081 = vmatpush1.bf16.msra.mxu0 %v3027
        %3082 = vmatprep.subr.bf16.mxu0 0
        %3083 = vmatpush1.bf16.msra.mxu0 %v3028
        %3084 = vmatprep.subr.bf16.mxu0 0
        %3085 = vmatpush1.bf16.msra.mxu0 %v3029
        %3086 = vmatprep.subr.bf16.mxu0 0
        %3087 = vmatpush1.bf16.msra.mxu0 %v3030
        %3088 = vmatprep.subr.bf16.mxu0 0
        %3089 = vmatpush1.bf16.msra.mxu0 %v3031
        %3090 = vmatprep.subr.bf16.mxu0 0
        %3091 = vmatpush1.bf16.msra.mxu0 %v3032
        %3092 = vmatprep.subr.bf16.mxu0 0
        %3093 = vmatpush1.bf16.msra.mxu0 %v3033
        %3094 = vmatprep.subr.bf16.mxu0 0
        %3095 = vmatpush1.bf16.msra.mxu0 %v3034
        %3096 = vmatprep.subr.bf16.mxu0 0
        %3097 = vmatpush1.bf16.msra.mxu0 %v3035
        %3098 = vmatprep.subr.bf16.mxu0 0
        %3099 = vmatpush1.bf16.msra.mxu0 %v3036
        %3100 = vmatprep.subr.bf16.mxu0 0
        %3101 = vmatpush1.bf16.msra.mxu0 %v3037
        %3102 = vmatprep.mubr.bf16.mxu0 %v2331
        %3103 = vmatmul.mubr.bf16.gmra.mrb[0].mxu0 %v2300
        %v3104 = vpop.f32.mrb[0].mxu0
        %v3105 = vadd.f32 %v2864, %v3104
        %v3106 = vpop.f32.mrb[0].mxu0
        %v3107 = vpop.f32.mrb[0].mxu0
        %v3108 = vadd.f32 %v2867, %v3107
        %v3109 = vpop.f32.mrb[0].mxu0
        %3110 = vmatprep.mubr.bf16.mxu0 %v2343
        %3111 = vmatmul.mubr.bf16.gmra.mrb[0].mxu0 %v2301
        %v3112 = vpop.f32.mrb[0].mxu0
        %v3113 = vadd.f32 %v2872, %v3112
        %v3114 = vpop.f32.mrb[0].mxu0
        %v3115 = vpop.f32.mrb[0].mxu0
        %v3116 = vadd.f32 %v2875, %v3115
        %v3117 = vpop.f32.mrb[0].mxu0
        %3118 = vmatprep.mubr.bf16.mxu0 %v2355
        %3119 = vmatmul.mubr.bf16.gmra.mrb[0].mxu0 %v2302
        %v3120 = vpop.f32.mrb[0].mxu0
        %v3121 = vadd.f32 %v2880, %v3120
        %v3122 = vpop.f32.mrb[0].mxu0
        %v3123 = vpop.f32.mrb[0].mxu0
        %v3124 = vadd.f32 %v2883, %v3123
        %v3125 = vpop.f32.mrb[0].mxu0
        %3126 = vmatprep.mubr.bf16.mxu0 %v2367
        %3127 = vmatmul.mubr.bf16.gmra.mrb[0].mxu0 %v2303
        %v3128 = vpop.f32.mrb[0].mxu0
        %v3129 = vadd.f32 %v2888, %v3128
        %v3130 = vpop.f32.mrb[0].mxu0
        %v3131 = vpop.f32.mrb[0].mxu0
        %v3132 = vadd.f32 %v2891, %v3131
        %v3133 = vpop.f32.mrb[0].mxu0
        %3134 = vmatprep.mubr.bf16.mxu0 %v2379
        %3135 = vmatmul.mubr.bf16.gmra.mrb[0].mxu0 %v2304
        %v3136 = vpop.f32.mrb[0].mxu0
        %v3137 = vadd.f32 %v2896, %v3136
        %v3138 = vpop.f32.mrb[0].mxu0
        %v3139 = vpop.f32.mrb[0].mxu0
        %v3140 = vadd.f32 %v2899, %v3139
        %v3141 = vpop.f32.mrb[0].mxu0
        %3142 = vmatprep.mubr.bf16.mxu0 %v2391
        %3143 = vmatmul.mubr.bf16.gmra.mrb[0].mxu0 %v2305
        %v3144 = vpop.f32.mrb[0].mxu0
        %v3145 = vadd.f32 %v2904, %v3144
        %v3146 = vpop.f32.mrb[0].mxu0
        %v3147 = vpop.f32.mrb[0].mxu0
        %v3148 = vadd.f32 %v2907, %v3147
        %v3149 = vpop.f32.mrb[0].mxu0
        %3150 = vmatprep.mubr.bf16.mxu0 %v2403
        %3151 = vmatmul.mubr.bf16.gmra.mrb[0].mxu0 %v2306
        %v3152 = vpop.f32.mrb[0].mxu0
        %v3153 = vadd.f32 %v2912, %v3152
        %v3154 = vpop.f32.mrb[0].mxu0
        %v3155 = vpop.f32.mrb[0].mxu0
        %v3156 = vadd.f32 %v2915, %v3155
        %v3157 = vpop.f32.mrb[0].mxu0
        %3158 = vmatprep.mubr.bf16.mxu0 %v2415
        %3159 = vmatmul.mubr.bf16.gmra.mrb[0].mxu0 %v2307
        %v3160 = vpop.f32.mrb[0].mxu0
        %v3161 = vadd.f32 %v2920, %v3160
        %v3162 = vpop.f32.mrb[0].mxu0
        %v3163 = vpop.f32.mrb[0].mxu0
        %v3164 = vadd.f32 %v2923, %v3163
        %v3165 = vpop.f32.mrb[0].mxu0
        %3166 = vdwg.mxu0
        %3167 = vmatprep.subr.bf16.mxu0 0
        %3168 = vmatpush1.bf16.msra.mxu0 %v3038
        %3169 = vmatprep.subr.bf16.mxu0 0
        %3170 = vmatpush1.bf16.msra.mxu0 %v3039
        %3171 = vmatprep.subr.bf16.mxu0 0
        %3172 = vmatpush1.bf16.msra.mxu0 %v3040
        %3173 = vmatprep.subr.bf16.mxu0 0
        %3174 = vmatpush1.bf16.msra.mxu0 %v3041
        %3175 = vmatprep.subr.bf16.mxu0 0
        %3176 = vmatpush1.bf16.msra.mxu0 %v3042
        %3177 = vmatprep.subr.bf16.mxu0 0
        %3178 = vmatpush1.bf16.msra.mxu0 %v3043
        %3179 = vmatprep.subr.bf16.mxu0 0
        %3180 = vmatpush1.bf16.msra.mxu0 %v3044
        %3181 = vmatprep.subr.bf16.mxu0 0
        %3182 = vmatpush1.bf16.msra.mxu0 %v3045
        %3183 = vmatprep.subr.bf16.mxu0 0
        %3184 = vmatpush1.bf16.msra.mxu0 0
        %3185 = vmatprep.subr.bf16.mxu0 0
        %3186 = vmatpush1.bf16.msra.mxu0 0
        %3187 = vmatprep.subr.bf16.mxu0 0
        %3188 = vmatpush1.bf16.msra.mxu0 0
        %3189 = vmatprep.subr.bf16.mxu0 0
        %3190 = vmatpush1.bf16.msra.mxu0 0
        %3191 = vmatprep.subr.bf16.mxu0 0
        %3192 = vmatpush1.bf16.msra.mxu0 0
        %3193 = vmatprep.subr.bf16.mxu0 0
        %3194 = vmatpush1.bf16.msra.mxu0 0
        %3195 = vmatprep.subr.bf16.mxu0 0
        %3196 = vmatpush1.bf16.msra.mxu0 0
        %3197 = vmatprep.subr.bf16.mxu0 0
        %3198 = vmatpush1.bf16.msra.mxu0 0
        %3199 = vmatprep.mubr.bf16.mxu0 0
        %3200 = vmatmul.mubr.bf16.gmra.mrb[0].mxu0 %v2442
        %v3201 = vpop.f32.mrb[0].mxu0
        %v3202 = vadd.f32 %v3105, %v3201
        %v3203 = vpop.f32.mrb[0].mxu0
        %v3204 = vpop.f32.mrb[0].mxu0
        %v3205 = vadd.f32 %v3108, %v3204
        %v3206 = vpop.f32.mrb[0].mxu0
        %3207 = vmatprep.mubr.bf16.mxu0 0
        %3208 = vmatmul.mubr.bf16.gmra.mrb[0].mxu0 %v2445
        %v3209 = vpop.f32.mrb[0].mxu0
        %v3210 = vadd.f32 %v3113, %v3209
        %v3211 = vpop.f32.mrb[0].mxu0
        %v3212 = vpop.f32.mrb[0].mxu0
        %v3213 = vadd.f32 %v3116, %v3212
        %v3214 = vpop.f32.mrb[0].mxu0
        %3215 = vmatprep.mubr.bf16.mxu0 0
        %3216 = vmatmul.mubr.bf16.gmra.mrb[0].mxu0 %v2448
        %v3217 = vpop.f32.mrb[0].mxu0
        %v3218 = vadd.f32 %v3121, %v3217
        %v3219 = vpop.f32.mrb[0].mxu0
        %v3220 = vpop.f32.mrb[0].mxu0
        %v3221 = vadd.f32 %v3124, %v3220
        %v3222 = vpop.f32.mrb[0].mxu0
        %3223 = vmatprep.mubr.bf16.mxu0 0
        %3224 = vmatmul.mubr.bf16.gmra.mrb[0].mxu0 %v2451
        %v3225 = vpop.f32.mrb[0].mxu0
        %v3226 = vadd.f32 %v3129, %v3225
        %v3227 = vpop.f32.mrb[0].mxu0
        %v3228 = vpop.f32.mrb[0].mxu0
        %v3229 = vadd.f32 %v3132, %v3228
        %v3230 = vpop.f32.mrb[0].mxu0
        %3231 = vmatprep.mubr.bf16.mxu0 0
        %3232 = vmatmul.mubr.bf16.gmra.mrb[0].mxu0 %v2454
        %v3233 = vpop.f32.mrb[0].mxu0
        %v3234 = vadd.f32 %v3137, %v3233
        %v3235 = vpop.f32.mrb[0].mxu0
        %v3236 = vpop.f32.mrb[0].mxu0
        %v3237 = vadd.f32 %v3140, %v3236
        %v3238 = vpop.f32.mrb[0].mxu0
        %3239 = vmatprep.mubr.bf16.mxu0 0
        %3240 = vmatmul.mubr.bf16.gmra.mrb[0].mxu0 %v2457
        %v3241 = vpop.f32.mrb[0].mxu0
        %v3242 = vadd.f32 %v3145, %v3241
        %v3243 = vpop.f32.mrb[0].mxu0
        %v3244 = vpop.f32.mrb[0].mxu0
        %v3245 = vadd.f32 %v3148, %v3244
        %v3246 = vpop.f32.mrb[0].mxu0
        %3247 = vmatprep.mubr.bf16.mxu0 0
        %3248 = vmatmul.mubr.bf16.gmra.mrb[0].mxu0 %v2460
        %v3249 = vpop.f32.mrb[0].mxu0
        %v3250 = vadd.f32 %v3153, %v3249
        %v3251 = vpop.f32.mrb[0].mxu0
        %v3252 = vpop.f32.mrb[0].mxu0
        %v3253 = vadd.f32 %v3156, %v3252
        %v3254 = vpop.f32.mrb[0].mxu0
        %3255 = vmatprep.mubr.bf16.mxu0 0
        %3256 = vmatmul.mubr.bf16.gmra.mrb[0].mxu0 %v2463
        %v3257 = vpop.f32.mrb[0].mxu0
        %v3258 = vadd.f32 %v3161, %v3257
        %v3259 = vpop.f32.mrb[0].mxu0
        %v3260 = vpop.f32.mrb[0].mxu0
        %v3261 = vadd.f32 %v3164, %v3260
        %v3262 = vpop.f32.mrb[0].mxu0
        %3263 = vdwg.mxu0
        %v3265 = vshrl.u32 %v2309, 16
        %v3267 = vshll.u32 %v2309, 16
        %v3269 = vrot.slane %v3267, 1
        %v3270 = vor.u32 %v3265, %v3269
        %v3272 = vshll.u32 %v2319, 16
        %v3274 = vrot.slane %v3272, 1
        %v3275 = vsel %vm585, %v3270, %v3274
        %v3279 = vrot.slane %v2309, 1
        %v3280 = vrot.slane %v2319, 1
        %v3281 = vsel %vm736, %v3279, %v3280
        %s3283 = scalar_lea.vmem %s2, 384
        %v3284 = vld [vmem:[%s3283] sm:$0xf]
        %v3285 = vld [vmem:[%s3283 + $0x4] sm:$0xf]
        %v3286 = vld [vmem:[%s3283 + $0x8] sm:$0xf]
        %v3287 = vld [vmem:[%s3283 + $0xc] sm:$0xf]
        %v3288 = vld [vmem:[%s3283 + $0x10] sm:$0xf]
        %v3289 = vld [vmem:[%s3283 + $0x14] sm:$0xf]
        %v3290 = vld [vmem:[%s3283 + $0x18] sm:$0xf]
        %v3291 = vld [vmem:[%s3283 + $0x1c] sm:$0xf]
        %v3292 = vld [vmem:[%s3283 + $0x20] sm:$0xf]
        %v3293 = vld [vmem:[%s3283 + $0x24] sm:$0xf]
        %v3294 = vld [vmem:[%s3283 + $0x28] sm:$0xf]
        %v3295 = vld [vmem:[%s3283 + $0x2c] sm:$0xf]
        %v3296 = vld [vmem:[%s3283 + $0x30] sm:$0xf]
        %v3297 = vld [vmem:[%s3283 + $0x34] sm:$0xf]
        %v3298 = vld [vmem:[%s3283 + $0x38] sm:$0xf]
        %v3299 = vld [vmem:[%s3283 + $0x3c] sm:$0xf]
        %v3300 = vld [vmem:[%s3283 + $0x40] sm:$0xf]
        %v3301 = vld [vmem:[%s3283 + $0x44] sm:$0xf]
        %v3302 = vld [vmem:[%s3283 + $0x48] sm:$0xf]
        %v3303 = vld [vmem:[%s3283 + $0x4c] sm:$0xf]
        %v3304 = vld [vmem:[%s3283 + $0x50] sm:$0xf]
        %v3305 = vld [vmem:[%s3283 + $0x54] sm:$0xf]
        %v3306 = vld [vmem:[%s3283 + $0x58] sm:$0xf]
        %v3307 = vld [vmem:[%s3283 + $0x5c] sm:$0xf]
        %v3308 = vld [vmem:[%s3283 + $0x60] sm:$0xf]
        %v3309 = vld [vmem:[%s3283 + $0x64] sm:$0xf]
        %v3310 = vld [vmem:[%s3283 + $0x68] sm:$0xf]
        %v3311 = vld [vmem:[%s3283 + $0x6c] sm:$0xf]
        %v3312 = vld [vmem:[%s3283 + $0x70] sm:$0xf]
        %v3313 = vld [vmem:[%s3283 + $0x74] sm:$0xf]
        %v3314 = vld [vmem:[%s3283 + $0x78] sm:$0xf]
        %v3315 = vld [vmem:[%s3283 + $0x7c] sm:$0xf]
        %v3316 = vld [vmem:[%s3283 + $0x80] sm:$0xf]
        %v3317 = vld [vmem:[%s3283 + $0x84] sm:$0xf]
        %v3318 = vld [vmem:[%s3283 + $0x88] sm:$0xf]
        %v3319 = vld [vmem:[%s3283 + $0x8c] sm:$0xf]
        %v3320 = vld [vmem:[%s3283 + $0x90] sm:$0xf]
        %v3321 = vld [vmem:[%s3283 + $0x94] sm:$0xf]
        %v3322 = vld [vmem:[%s3283 + $0x98] sm:$0xf]
        %v3323 = vld [vmem:[%s3283 + $0x9c] sm:$0xf]
        %v3324 = vld [vmem:[%s3283 + $0xa0] sm:$0xf]
        %v3325 = vld [vmem:[%s3283 + $0xa4] sm:$0xf]
        %v3326 = vld [vmem:[%s3283 + $0xa8] sm:$0xf]
        %v3327 = vld [vmem:[%s3283 + $0xac] sm:$0xf]
        %v3328 = vld [vmem:[%s3283 + $0xb0] sm:$0xf]
        %v3329 = vld [vmem:[%s3283 + $0xb4] sm:$0xf]
        %v3330 = vld [vmem:[%s3283 + $0xb8] sm:$0xf]
        %v3331 = vld [vmem:[%s3283 + $0xbc] sm:$0xf]
        %v3380 = vunpack.c.l.b16 %v3284
        %v3381 = vunpack.c.l.b16 %v3285
        %v3382 = vunpack.c.l.b16 %v3286
        %v3383 = vunpack.c.l.b16 %v3287
        %v3384 = vunpack.c.l.b16 %v3288
        %v3385 = vunpack.c.l.b16 %v3289
        %v3386 = vunpack.c.l.b16 %v3290
        %v3387 = vunpack.c.l.b16 %v3291
        %v3388 = vunpack.c.l.b16 %v3292
        %v3389 = vunpack.c.l.b16 %v3293
        %v3390 = vunpack.c.l.b16 %v3294
        %v3391 = vunpack.c.l.b16 %v3295
        %v3392 = vunpack.c.l.b16 %v3296
        %v3393 = vunpack.c.l.b16 %v3297
        %v3394 = vunpack.c.l.b16 %v3298
        %v3395 = vunpack.c.l.b16 %v3299
        %v3396 = vunpack.c.l.b16 %v3300
        %v3397 = vunpack.c.l.b16 %v3301
        %v3398 = vunpack.c.l.b16 %v3302
        %v3399 = vunpack.c.l.b16 %v3303
        %v3400 = vunpack.c.l.b16 %v3304
        %v3401 = vunpack.c.l.b16 %v3305
        %v3402 = vunpack.c.l.b16 %v3306
        %v3403 = vunpack.c.l.b16 %v3307
        %v3404 = vunpack.c.l.b16 %v3308
        %v3405 = vunpack.c.l.b16 %v3309
        %v3406 = vunpack.c.l.b16 %v3310
        %v3407 = vunpack.c.l.b16 %v3311
        %v3408 = vunpack.c.l.b16 %v3312
        %v3409 = vunpack.c.l.b16 %v3313
        %v3410 = vunpack.c.l.b16 %v3314
        %v3411 = vunpack.c.l.b16 %v3315
        %v3412 = vunpack.c.l.b16 %v3316
        %v3413 = vunpack.c.l.b16 %v3317
        %v3414 = vunpack.c.l.b16 %v3318
        %v3415 = vunpack.c.l.b16 %v3319
        %v3416 = vunpack.c.l.b16 %v3320
        %v3417 = vunpack.c.l.b16 %v3321
        %v3418 = vunpack.c.l.b16 %v3322
        %v3419 = vunpack.c.l.b16 %v3323
        %v3420 = vunpack.c.l.b16 %v3324
        %v3421 = vunpack.c.l.b16 %v3325
        %v3422 = vunpack.c.l.b16 %v3326
        %v3423 = vunpack.c.l.b16 %v3327
        %v3424 = vunpack.c.l.b16 %v3328
        %v3425 = vunpack.c.l.b16 %v3329
        %v3426 = vunpack.c.l.b16 %v3330
        %v3427 = vunpack.c.l.b16 %v3331
        %v3428 = vpack.c.b16 %v3381, %v3380
        %v3429 = vpack.c.b16 %v3383, %v3382
        %v3430 = vpack.c.b16 %v3385, %v3384
        %v3431 = vpack.c.b16 %v3387, %v3386
        %v3432 = vpack.c.b16 %v3389, %v3388
        %v3433 = vpack.c.b16 %v3391, %v3390
        %v3434 = vpack.c.b16 %v3393, %v3392
        %v3435 = vpack.c.b16 %v3395, %v3394
        %v3436 = vpack.c.b16 %v3397, %v3396
        %v3437 = vpack.c.b16 %v3399, %v3398
        %v3438 = vpack.c.b16 %v3401, %v3400
        %v3439 = vpack.c.b16 %v3403, %v3402
        %v3440 = vpack.c.b16 %v3405, %v3404
        %v3441 = vpack.c.b16 %v3407, %v3406
        %v3442 = vpack.c.b16 %v3409, %v3408
        %v3443 = vpack.c.b16 %v3411, %v3410
        %v3444 = vpack.c.b16 %v3413, %v3412
        %v3445 = vpack.c.b16 %v3415, %v3414
        %v3446 = vpack.c.b16 %v3417, %v3416
        %v3447 = vpack.c.b16 %v3419, %v3418
        %v3448 = vpack.c.b16 %v3421, %v3420
        %v3449 = vpack.c.b16 %v3423, %v3422
        %v3450 = vpack.c.b16 %v3425, %v3424
        %v3451 = vpack.c.b16 %v3427, %v3426
        %3476 = vmatprep.subr.bf16.mxu0 0
        %3477 = vmatpush1.bf16.msra.mxu0 %v3428
        %3478 = vmatprep.subr.bf16.mxu0 0
        %3479 = vmatpush1.bf16.msra.mxu0 %v3429
        %3480 = vmatprep.subr.bf16.mxu0 0
        %3481 = vmatpush1.bf16.msra.mxu0 %v3430
        %3482 = vmatprep.subr.bf16.mxu0 0
        %3483 = vmatpush1.bf16.msra.mxu0 %v3431
        %3484 = vmatprep.subr.bf16.mxu0 0
        %3485 = vmatpush1.bf16.msra.mxu0 %v3432
        %3486 = vmatprep.subr.bf16.mxu0 0
        %3487 = vmatpush1.bf16.msra.mxu0 %v3433
        %3488 = vmatprep.subr.bf16.mxu0 0
        %3489 = vmatpush1.bf16.msra.mxu0 %v3434
        %3490 = vmatprep.subr.bf16.mxu0 0
        %3491 = vmatpush1.bf16.msra.mxu0 %v3435
        %3492 = vmatprep.subr.bf16.mxu0 0
        %3493 = vmatpush1.bf16.msra.mxu0 %v3436
        %3494 = vmatprep.subr.bf16.mxu0 0
        %3495 = vmatpush1.bf16.msra.mxu0 %v3437
        %3496 = vmatprep.subr.bf16.mxu0 0
        %3497 = vmatpush1.bf16.msra.mxu0 %v3438
        %3498 = vmatprep.subr.bf16.mxu0 0
        %3499 = vmatpush1.bf16.msra.mxu0 %v3439
        %3500 = vmatprep.subr.bf16.mxu0 0
        %3501 = vmatpush1.bf16.msra.mxu0 %v3440
        %3502 = vmatprep.subr.bf16.mxu0 0
        %3503 = vmatpush1.bf16.msra.mxu0 %v3441
        %3504 = vmatprep.subr.bf16.mxu0 0
        %3505 = vmatpush1.bf16.msra.mxu0 %v3442
        %3506 = vmatprep.subr.bf16.mxu0 0
        %3507 = vmatpush1.bf16.msra.mxu0 %v3443
        %3508 = vmatprep.mubr.bf16.mxu0 %v2355
        %3509 = vmatmul.mubr.bf16.gmra.mrb[0].mxu0 %v2302
        %v3510 = vpop.f32.mrb[0].mxu0
        %v3511 = vadd.f32 0.0, %v3510
        %v3512 = vpop.f32.mrb[0].mxu0
        %v3513 = vpop.f32.mrb[0].mxu0
        %v3514 = vadd.f32 0.0, %v3513
        %v3515 = vpop.f32.mrb[0].mxu0
        %3516 = vmatprep.mubr.bf16.mxu0 %v2367
        %3517 = vmatmul.mubr.bf16.gmra.mrb[0].mxu0 %v2303
        %v3518 = vpop.f32.mrb[0].mxu0
        %v3519 = vadd.f32 0.0, %v3518
        %v3520 = vpop.f32.mrb[0].mxu0
        %v3521 = vpop.f32.mrb[0].mxu0
        %v3522 = vadd.f32 0.0, %v3521
        %v3523 = vpop.f32.mrb[0].mxu0
        %3524 = vmatprep.mubr.bf16.mxu0 %v2379
        %3525 = vmatmul.mubr.bf16.gmra.mrb[0].mxu0 %v2304
        %v3526 = vpop.f32.mrb[0].mxu0
        %v3527 = vadd.f32 0.0, %v3526
        %v3528 = vpop.f32.mrb[0].mxu0
        %v3529 = vpop.f32.mrb[0].mxu0
        %v3530 = vadd.f32 0.0, %v3529
        %v3531 = vpop.f32.mrb[0].mxu0
        %3532 = vmatprep.mubr.bf16.mxu0 %v2391
        %3533 = vmatmul.mubr.bf16.gmra.mrb[0].mxu0 %v2305
        %v3534 = vpop.f32.mrb[0].mxu0
        %v3535 = vadd.f32 0.0, %v3534
        %v3536 = vpop.f32.mrb[0].mxu0
        %v3537 = vpop.f32.mrb[0].mxu0
        %v3538 = vadd.f32 0.0, %v3537
        %v3539 = vpop.f32.mrb[0].mxu0
        %3540 = vmatprep.mubr.bf16.mxu0 %v2403
        %3541 = vmatmul.mubr.bf16.gmra.mrb[0].mxu0 %v2306
        %v3542 = vpop.f32.mrb[0].mxu0
        %v3543 = vadd.f32 0.0, %v3542
        %v3544 = vpop.f32.mrb[0].mxu0
        %v3545 = vpop.f32.mrb[0].mxu0
        %v3546 = vadd.f32 0.0, %v3545
        %v3547 = vpop.f32.mrb[0].mxu0
        %3548 = vmatprep.mubr.bf16.mxu0 %v2415
        %3549 = vmatmul.mubr.bf16.gmra.mrb[0].mxu0 %v2307
        %v3550 = vpop.f32.mrb[0].mxu0
        %v3551 = vadd.f32 0.0, %v3550
        %v3552 = vpop.f32.mrb[0].mxu0
        %v3553 = vpop.f32.mrb[0].mxu0
        %v3554 = vadd.f32 0.0, %v3553
        %v3555 = vpop.f32.mrb[0].mxu0
        %3556 = vmatprep.mubr.bf16.mxu0 %v2531
        %3557 = vmatmul.mubr.bf16.gmra.mrb[0].mxu0 %v2308
        %v3558 = vpop.f32.mrb[0].mxu0
        %v3559 = vadd.f32 0.0, %v3558
        %v3560 = vpop.f32.mrb[0].mxu0
        %v3561 = vpop.f32.mrb[0].mxu0
        %v3562 = vadd.f32 0.0, %v3561
        %v3563 = vpop.f32.mrb[0].mxu0
        %3564 = vmatprep.mubr.bf16.mxu0 %v3275
        %3565 = vmatmul.mubr.bf16.gmra.mrb[0].mxu0 %v2309
        %v3566 = vpop.f32.mrb[0].mxu0
        %v3567 = vadd.f32 0.0, %v3566
        %v3568 = vpop.f32.mrb[0].mxu0
        %v3569 = vpop.f32.mrb[0].mxu0
        %v3570 = vadd.f32 0.0, %v3569
        %v3571 = vpop.f32.mrb[0].mxu0
        %3572 = vdwg.mxu0
        %3573 = vmatprep.subr.bf16.mxu0 0
        %3574 = vmatpush1.bf16.msra.mxu0 %v3444
        %3575 = vmatprep.subr.bf16.mxu0 0
        %3576 = vmatpush1.bf16.msra.mxu0 %v3445
        %3577 = vmatprep.subr.bf16.mxu0 0
        %3578 = vmatpush1.bf16.msra.mxu0 %v3446
        %3579 = vmatprep.subr.bf16.mxu0 0
        %3580 = vmatpush1.bf16.msra.mxu0 %v3447
        %3581 = vmatprep.subr.bf16.mxu0 0
        %3582 = vmatpush1.bf16.msra.mxu0 %v3448
        %3583 = vmatprep.subr.bf16.mxu0 0
        %3584 = vmatpush1.bf16.msra.mxu0 %v3449
        %3585 = vmatprep.subr.bf16.mxu0 0
        %3586 = vmatpush1.bf16.msra.mxu0 %v3450
        %3587 = vmatprep.subr.bf16.mxu0 0
        %3588 = vmatpush1.bf16.msra.mxu0 %v3451
        %3589 = vmatprep.subr.bf16.mxu0 0
        %3590 = vmatpush1.bf16.msra.mxu0 0
        %3591 = vmatprep.subr.bf16.mxu0 0
        %3592 = vmatpush1.bf16.msra.mxu0 0
        %3593 = vmatprep.subr.bf16.mxu0 0
        %3594 = vmatpush1.bf16.msra.mxu0 0
        %3595 = vmatprep.subr.bf16.mxu0 0
        %3596 = vmatpush1.bf16.msra.mxu0 0
        %3597 = vmatprep.subr.bf16.mxu0 0
        %3598 = vmatpush1.bf16.msra.mxu0 0
        %3599 = vmatprep.subr.bf16.mxu0 0
        %3600 = vmatpush1.bf16.msra.mxu0 0
        %3601 = vmatprep.subr.bf16.mxu0 0
        %3602 = vmatpush1.bf16.msra.mxu0 0
        %3603 = vmatprep.subr.bf16.mxu0 0
        %3604 = vmatpush1.bf16.msra.mxu0 0
        %3605 = vmatprep.mubr.bf16.mxu0 0
        %3606 = vmatmul.mubr.bf16.gmra.mrb[0].mxu0 %v2448
        %v3607 = vpop.f32.mrb[0].mxu0
        %v3608 = vadd.f32 %v3511, %v3607
        %v3609 = vpop.f32.mrb[0].mxu0
        %v3610 = vpop.f32.mrb[0].mxu0
        %v3611 = vadd.f32 %v3514, %v3610
        %v3612 = vpop.f32.mrb[0].mxu0
        %3613 = vmatprep.mubr.bf16.mxu0 0
        %3614 = vmatmul.mubr.bf16.gmra.mrb[0].mxu0 %v2451
        %v3615 = vpop.f32.mrb[0].mxu0
        %v3616 = vadd.f32 %v3519, %v3615
        %v3617 = vpop.f32.mrb[0].mxu0
        %v3618 = vpop.f32.mrb[0].mxu0
        %v3619 = vadd.f32 %v3522, %v3618
        %v3620 = vpop.f32.mrb[0].mxu0
        %3621 = vmatprep.mubr.bf16.mxu0 0
        %3622 = vmatmul.mubr.bf16.gmra.mrb[0].mxu0 %v2454
        %v3623 = vpop.f32.mrb[0].mxu0
        %v3624 = vadd.f32 %v3527, %v3623
        %v3625 = vpop.f32.mrb[0].mxu0
        %v3626 = vpop.f32.mrb[0].mxu0
        %v3627 = vadd.f32 %v3530, %v3626
        %v3628 = vpop.f32.mrb[0].mxu0
        %3629 = vmatprep.mubr.bf16.mxu0 0
        %3630 = vmatmul.mubr.bf16.gmra.mrb[0].mxu0 %v2457
        %v3631 = vpop.f32.mrb[0].mxu0
        %v3632 = vadd.f32 %v3535, %v3631
        %v3633 = vpop.f32.mrb[0].mxu0
        %v3634 = vpop.f32.mrb[0].mxu0
        %v3635 = vadd.f32 %v3538, %v3634
        %v3636 = vpop.f32.mrb[0].mxu0
        %3637 = vmatprep.mubr.bf16.mxu0 0
        %3638 = vmatmul.mubr.bf16.gmra.mrb[0].mxu0 %v2460
        %v3639 = vpop.f32.mrb[0].mxu0
        %v3640 = vadd.f32 %v3543, %v3639
        %v3641 = vpop.f32.mrb[0].mxu0
        %v3642 = vpop.f32.mrb[0].mxu0
        %v3643 = vadd.f32 %v3546, %v3642
        %v3644 = vpop.f32.mrb[0].mxu0
        %3645 = vmatprep.mubr.bf16.mxu0 0
        %3646 = vmatmul.mubr.bf16.gmra.mrb[0].mxu0 %v2463
        %v3647 = vpop.f32.mrb[0].mxu0
        %v3648 = vadd.f32 %v3551, %v3647
        %v3649 = vpop.f32.mrb[0].mxu0
        %v3650 = vpop.f32.mrb[0].mxu0
        %v3651 = vadd.f32 %v3554, %v3650
        %v3652 = vpop.f32.mrb[0].mxu0
        %3653 = vmatprep.mubr.bf16.mxu0 0
        %3654 = vmatmul.mubr.bf16.gmra.mrb[0].mxu0 %v2537
        %v3655 = vpop.f32.mrb[0].mxu0
        %v3656 = vadd.f32 %v3559, %v3655
        %v3657 = vpop.f32.mrb[0].mxu0
        %v3658 = vpop.f32.mrb[0].mxu0
        %v3659 = vadd.f32 %v3562, %v3658
        %v3660 = vpop.f32.mrb[0].mxu0
        %3661 = vmatprep.mubr.bf16.mxu0 0
        %3662 = vmatmul.mubr.bf16.gmra.mrb[0].mxu0 %v3281
        %v3663 = vpop.f32.mrb[0].mxu0
        %v3664 = vadd.f32 %v3567, %v3663
        %v3665 = vpop.f32.mrb[0].mxu0
        %v3666 = vpop.f32.mrb[0].mxu0
        %v3667 = vadd.f32 %v3570, %v3666
        %v3668 = vpop.f32.mrb[0].mxu0
        %3669 = vdwg.mxu0
        %v3670 = vadd.f32 %v3202, %v3608
        %v3671 = vadd.f32 %v3205, %v3611
        %v3672 = vadd.f32 %v3210, %v3616
        %v3673 = vadd.f32 %v3213, %v3619
        %v3674 = vadd.f32 %v3218, %v3624
        %v3675 = vadd.f32 %v3221, %v3627
        %v3676 = vadd.f32 %v3226, %v3632
        %v3677 = vadd.f32 %v3229, %v3635
        %v3678 = vadd.f32 %v3234, %v3640
        %v3679 = vadd.f32 %v3237, %v3643
        %v3680 = vadd.f32 %v3242, %v3648
        %v3681 = vadd.f32 %v3245, %v3651
        %v3682 = vadd.f32 %v3250, %v3656
        %v3683 = vadd.f32 %v3253, %v3659
        %v3684 = vadd.f32 %v3258, %v3664
        %v3685 = vadd.f32 %v3261, %v3667
        %v3686 = vld [vmem:[%s4] sm:$0x1]
        %v3688 = vlaneseq
        %v3689 = vshrl.u32 %v3688, 7
        %v3690 = vsub.s32 0, %v3689
        %v3691 = vrot.slane %v3686, %v3690
        %v3693 = vadd.f32 %v3670, %v3691
        %v3694 = vadd.f32 %v3671, %v3691
        %v3695 = vadd.f32 %v3672, %v3691
        %v3696 = vadd.f32 %v3673, %v3691
        %v3697 = vadd.f32 %v3674, %v3691
        %v3698 = vadd.f32 %v3675, %v3691
        %v3699 = vadd.f32 %v3676, %v3691
        %v3700 = vadd.f32 %v3677, %v3691
        %v3701 = vadd.f32 %v3678, %v3691
        %v3702 = vadd.f32 %v3679, %v3691
        %v3703 = vadd.f32 %v3680, %v3691
        %v3704 = vadd.f32 %v3681, %v3691
        %v3705 = vadd.f32 %v3682, %v3691
        %v3706 = vadd.f32 %v3683, %v3691
        %v3707 = vadd.f32 %v3684, %v3691
        %v3708 = vadd.f32 %v3685, %v3691
        %vm3733 = vcmask 1046528
        %v3734 = vrot.slane %v531, 1
        %v3735 = vrot.slane %v532, 1
        %v3736 = vsel %vm3733, %v3734, %v3735
        %v3737 = vrot.slane %v533, 1
        %v3738 = vsel %vm3733, %v3735, %v3737
        %v3739 = vrot.slane %v534, 1
        %v3740 = vrot.slane %v535, 1
        %v3741 = vsel %vm3733, %v3739, %v3740
        %v3742 = vrot.slane %v536, 1
        %v3743 = vsel %vm3733, %v3740, %v3742
        %v3744 = vrot.slane %v537, 1
        %v3745 = vrot.slane %v538, 1
        %v3746 = vsel %vm3733, %v3744, %v3745
        %v3747 = vrot.slane %v539, 1
        %v3748 = vsel %vm3733, %v3745, %v3747
        %v3749 = vrot.slane %v540, 1
        %v3750 = vrot.slane %v541, 1
        %v3751 = vsel %vm3733, %v3749, %v3750
        %v3752 = vrot.slane %v542, 1
        %v3753 = vsel %vm3733, %v3750, %v3752
        %v3754 = vrot.slane %v543, 1
        %v3755 = vrot.slane %v544, 1
        %v3756 = vsel %vm3733, %v3754, %v3755
        %v3757 = vrot.slane %v545, 1
        %v3758 = vsel %vm3733, %v3755, %v3757
        %v3759 = vrot.slane %v546, 1
        %v3760 = vrot.slane %v547, 1
        %v3761 = vsel %vm3733, %v3759, %v3760
        %v3762 = vrot.slane %v548, 1
        %v3763 = vsel %vm3733, %v3760, %v3762
        %v3764 = vrot.slane %v549, 1
        %v3765 = vrot.slane %v550, 1
        %v3766 = vsel %vm3733, %v3764, %v3765
        %v3767 = vrot.slane %v551, 1
        %v3768 = vsel %vm3733, %v3765, %v3767
        %v3769 = vrot.slane %v552, 1
        %v3770 = vrot.slane %v553, 1
        %v3771 = vsel %vm3733, %v3769, %v3770
        %v3772 = vrot.slane %v554, 1
        %v3773 = vsel %vm3733, %v3770, %v3772
        %v3790 = vadd.f32 %v3693, %v3736
        %v3791 = vadd.f32 %v3694, %v3738
        %v3792 = vadd.f32 %v3695, %v3741
        %v3793 = vadd.f32 %v3696, %v3743
        %v3794 = vadd.f32 %v3697, %v3746
        %v3795 = vadd.f32 %v3698, %v3748
        %v3796 = vadd.f32 %v3699, %v3751
        %v3797 = vadd.f32 %v3700, %v3753
        %v3798 = vadd.f32 %v3701, %v3756
        %v3799 = vadd.f32 %v3702, %v3758
        %v3800 = vadd.f32 %v3703, %v3761
        %v3801 = vadd.f32 %v3704, %v3763
        %v3802 = vadd.f32 %v3705, %v3766
        %v3803 = vadd.f32 %v3706, %v3768
        %v3804 = vadd.f32 %v3707, %v3771
        %v3805 = vadd.f32 %v3708, %v3773
        %v3806 = vmax.f32 %v3790, 0.0
        %v3807 = vmax.f32 %v3791, 0.0
        %v3808 = vmax.f32 %v3792, 0.0
        %v3809 = vmax.f32 %v3793, 0.0
        %v3810 = vmax.f32 %v3794, 0.0
        %v3811 = vmax.f32 %v3795, 0.0
        %v3812 = vmax.f32 %v3796, 0.0
        %v3813 = vmax.f32 %v3797, 0.0
        %v3814 = vmax.f32 %v3798, 0.0
        %v3815 = vmax.f32 %v3799, 0.0
        %v3816 = vmax.f32 %v3800, 0.0
        %v3817 = vmax.f32 %v3801, 0.0
        %v3818 = vmax.f32 %v3802, 0.0
        %v3819 = vmax.f32 %v3803, 0.0
        %v3820 = vmax.f32 %v3804, 0.0
        %v3821 = vmax.f32 %v3805, 0.0
        %3822 = vst [vmem:[%s190] sm:$0xff] %v3806
        %3823 = vst [vmem:[%s190 + $0x8] sm:$0xff] %v3807
        %3824 = vst [vmem:[%s190 + $0x10] sm:$0xff] %v3808
        %3825 = vst [vmem:[%s190 + $0x18] sm:$0xff] %v3809
        %3826 = vst [vmem:[%s190 + $0x20] sm:$0xff] %v3810
        %3827 = vst [vmem:[%s190 + $0x28] sm:$0xff] %v3811
        %3828 = vst [vmem:[%s190 + $0x30] sm:$0xff] %v3812
        %3829 = vst [vmem:[%s190 + $0x38] sm:$0xff] %v3813
        %3830 = vst [vmem:[%s190 + $0x40] sm:$0xff] %v3814
        %3831 = vst [vmem:[%s190 + $0x48] sm:$0xff] %v3815
        %3832 = vst [vmem:[%s190 + $0x50] sm:$0xff] %v3816
        %3833 = vst [vmem:[%s190 + $0x58] sm:$0xff] %v3817
        %3834 = vst [vmem:[%s190 + $0x60] sm:$0xff] %v3818
        %3835 = vst [vmem:[%s190 + $0x68] sm:$0xff] %v3819
        %3836 = vst [vmem:[%s190 + $0x70] sm:$0xff] %v3820
        %3837 = vst [vmem:[%s190 + $0x78] sm:$0xff] %v3821
        %s3838 = sand.u32 %s125, 1
        %s3839 = scalar_lea.sflag [#allocation5], %s3838
        %s3840 = sand.u32 %s125, 1
        %s3841 = smul.addr %s3840, 128
        %s3842 = scalar_lea.vmem [#allocation4], %s3841
        // Predicated region
        $region119: #{tpu_custom_call.1} parent=35 // pred_check
          %p3843 = pneg %p135
        $region120: #{tpu_custom_call.1} parent=35 // pred_check_branch
          %3845 = sbr.rel (%p3843) target = $region122
        $region121: #{tpu_custom_call.1} parent=35 // pred_region
          %s3847 = ssub.s32 2048, 2048
          %3848 = vsyncadd %s3839, %s3847
          %s3849 = smul.addr %s24, 16
          %s3850 = smul.addr %s23, 32
          %s3851 = sadd.s32 %s3849, %s3850
          %s3852 = smul.addr %s3851, 128
          %s3853 = scalar_lea.hbm %s5, %s3852
          %s3854 = sshll.u32 %s3842, 4
          %s3855 = int_to_ptr.vmem [resolvable:$true] %s3854
          %3860 = dma.vmem_to_hbm [thread:$0]  %s3855, 2048, %s3853, %s3839, 128, 128, 8
        $region122: #{tpu_custom_call.1} parent=35 // pred_fallthru
          _
      $region36: #{tpu_custom_call.1} parent=5 // pred_fallthru
        _
      %p3861 = scmp.le.s32.totalorder 2, %s14
      // Predicated region
      $region123: #{tpu_custom_call.1} parent=5 // pred_check
        %p3862 = pneg %p3861
      $region124: #{tpu_custom_call.1} parent=5 // pred_check_branch
        %3864 = sbr.rel (%p3862) target = $region126
      $region125: #{tpu_custom_call.1} parent=5 // pred_region
        %s3865 = ssub.s32 %s14, 2
        // Predicated region
        $region127: #{tpu_custom_call.1} parent=125 // pred_check
          %p3866 = pneg %p141
        $region128: #{tpu_custom_call.1} parent=125 // pred_check_branch
          %3868 = sbr.rel (%p3866) target = $region130
        $region129: #{tpu_custom_call.1} parent=125 // pred_region
          %s3869 = sand.u32 %s126, 1
          %s3870 = scalar_lea.sflag [#allocation5], %s3869
          %s3871 = sand.u32 %s126, 1
          %s3872 = smul.addr %s3871, 128
          %s3873 = scalar_lea.vmem [#allocation4], %s3872
          %3874 = dma.done %s3870, 2048
        $region130: #{tpu_custom_call.1} parent=125 // pred_fallthru
          _
      $region126: #{tpu_custom_call.1} parent=5 // pred_fallthru
        _
    $region6: #{tpu_custom_call.1} parent=1 // loop_footer
      %s18 = sadd.s32 1, %s14
    $region7: #{tpu_custom_call.1} parent=1 // loop_footer_branch
      %13 = sbr.rel target = $region3
    $region8: #{tpu_custom_call.1} parent=1 // loop_exit
      _
    %3875 = vsyncpa [#allocation5], 1
    %s3876 = scalar_lea.sflag [#allocation5], 1
    %3877 = vsyncpa %s3876, 1
  %3878 = vsyncmov [#allocation3]
  %s3879 = vpop.sfrf %3878
  %p3880 = scmp.eq.s32.totalorder %s3879, 0
  %p3881 = pneg %p3880
  %3883 = shalt.err (%p3881)
  %s3884 = scalar_lea.sflag [#allocation3], 1
  %3885 = vsyncmov %s3884
  %s3886 = vpop.sfrf %3885
  %p3887 = scmp.eq.s32.totalorder %s3886, 0
  %p3888 = pneg %p3887
  %3890 = shalt.err (%p3888)

</llo_original>
